<compile_context>
chip_gen: v7x
topology: tpu7x:2x2x1
jax: 0.10.0
libtpu: 0.0.40
codegen_flags: <defaults>
</compile_context>

<pallas_src>
import functools

import jax
import jax.numpy as jnp
from jax.experimental import pallas as pl
from jax.experimental.pallas import tpu as pltpu


# ---------------------------------------------------------------------------
# Fused forward kernel: one grid step == one batch element, full model depth.
# ---------------------------------------------------------------------------

def _fused_forward_kernel(
    src_ref,                    # (1, S, F)
    emb_wT_ref, emb_b_ref,      # (F, D), (1, D)
    in_wT_ref, in_b_ref,        # (L, D, 3D), (L, 1, 3D)
    out_wT_ref, out_b_ref,      # (L, D, D),  (L, 1, D)
    ln1_g_ref, ln1_b_ref,       # (L, 1, D) x2
    ffn_w1T_ref, ffn_b1_ref,    # (L, D, D), (L, 1, D)
    ffn_w2T_ref, ffn_b2_ref,    # (L, D, D), (L, 1, D)
    ln2_g_ref, ln2_b_ref,       # (L, 1, D) x2
    head_w_ref, head_b_ref,     # (1, D), (1, 1)
    o_ref,                      # (1, 1, 1)
    *, num_heads, eps=1e-5):
    f32 = jnp.float32
    D = emb_wT_ref.shape[1]
    L = in_wT_ref.shape[0]
    H = num_heads
    Dh = D // H
    scale = 1.0 / float(Dh) ** 0.5

    def layer_norm(y, g, b):
        mu = jnp.mean(y, axis=-1, keepdims=True)
        var = jnp.mean((y - mu) ** 2, axis=-1, keepdims=True)
        return (y - mu) * jax.lax.rsqrt(var + eps) * g + b

    # ---- embedding: (S, F) @ (F, D) ----
    x = src_ref[0].astype(f32)
    x = jnp.dot(x, emb_wT_ref[...], preferred_element_type=f32) + emb_b_ref[...]

    # ---- encoder layers (post-norm, ReLU FFN), statically unrolled ----
    for l in range(L):
        # self-attention: fused qkv projection
        qkv = jnp.dot(x, in_wT_ref[l], preferred_element_type=f32) + in_b_ref[l]
        q = qkv[:, :D] * scale          # fold 1/sqrt(Dh) into q (matches torch MHA)
        k = qkv[:, D:2 * D]
        v = qkv[:, 2 * D:]
        wo = out_wT_ref[l]              # (D, D), already transposed

        attn = jnp.zeros_like(x)        # out_proj folded into per-head accumulation
        for h in range(H):
            qh = q[:, h * Dh:(h + 1) * Dh]          # (S, Dh) static lane slices
            kh = k[:, h * Dh:(h + 1) * Dh]
            vh = v[:, h * Dh:(h + 1) * Dh]
            # scores = qh @ kh^T without an explicit transpose op
            s = jax.lax.dot_general(qh, kh, (((1,), (1,)), ((), ())),
                                    preferred_element_type=f32)   # (S, S)
            s = s - jnp.max(s, axis=-1, keepdims=True)
            p = jnp.exp(s)
            p = p * pl.reciprocal(jnp.sum(p, axis=-1, keepdims=True), approx=True)
            oh = jnp.dot(p, vh, preferred_element_type=f32)        # (S, Dh)
            attn = attn + jnp.dot(oh, wo[h * Dh:(h + 1) * Dh, :],
                                  preferred_element_type=f32)      # (S, D)
        attn = attn + out_b_ref[l]
        x = layer_norm(x + attn, ln1_g_ref[l], ln1_b_ref[l])

        # feed-forward (ReLU)
        ff = jnp.dot(x, ffn_w1T_ref[l], preferred_element_type=f32) + ffn_b1_ref[l]
        ff = jnp.maximum(ff, 0.0)
        ff = jnp.dot(ff, ffn_w2T_ref[l], preferred_element_type=f32) + ffn_b2_ref[l]
        x = layer_norm(x + ff, ln2_g_ref[l], ln2_b_ref[l])

    # ---- mean over sequence + (D -> 1) output head, fused ----
    xm = jnp.mean(x, axis=0, keepdims=True)                        # (1, D)
    y = jnp.sum(xm * head_w_ref[...], axis=-1, keepdims=True) + head_b_ref[...]
    o_ref[0] = y.astype(o_ref.dtype)                               # (1, 1)


def fused_forward(src_bsf, packed, num_heads):
    """src_bsf: (B, S, F) batch-major input.  Returns (B, 1, 1)."""
    B, S, F = src_bsf.shape
    D = packed["emb_wT"].shape[1]
    L = packed["in_wT"].shape[0]

    const2 = lambda b: (0, 0)
    const3 = lambda b: (0, 0, 0)
    in_specs = [
        pl.BlockSpec((1, S, F), lambda b: (b, 0, 0)),       # src
        pl.BlockSpec((F, D), const2),                       # emb_wT
        pl.BlockSpec((1, D), const2),                       # emb_b
        pl.BlockSpec((L, D, 3 * D), const3),                # in_wT
        pl.BlockSpec((L, 1, 3 * D), const3),                # in_b
        pl.BlockSpec((L, D, D), const3),                    # out_wT
        pl.BlockSpec((L, 1, D), const3),                    # out_b
        pl.BlockSpec((L, 1, D), const3),                    # ln1_g
        pl.BlockSpec((L, 1, D), const3),                    # ln1_b
        pl.BlockSpec((L, D, D), const3),                    # ffn_w1T
        pl.BlockSpec((L, 1, D), const3),                    # ffn_b1
        pl.BlockSpec((L, D, D), const3),                    # ffn_w2T
        pl.BlockSpec((L, 1, D), const3),                    # ffn_b2
        pl.BlockSpec((L, 1, D), const3),                    # ln2_g
        pl.BlockSpec((L, 1, D), const3),                    # ln2_b
        pl.BlockSpec((1, D), const2),                       # head_w
        pl.BlockSpec((1, 1), const2),                       # head_b
    ]
    return pl.pallas_call(
        functools.partial(_fused_forward_kernel, num_heads=num_heads),
        out_shape=jax.ShapeDtypeStruct((B, 1, 1), jnp.float32),
        grid=(B,),
        in_specs=in_specs,
        out_specs=pl.BlockSpec((1, 1, 1), lambda b: (b, 0, 0)),
        compiler_params=pltpu.CompilerParams(dimension_semantics=("parallel",)),
    )(
        src_bsf,
        packed["emb_wT"], packed["emb_b"],
        packed["in_wT"], packed["in_b"],
        packed["out_wT"], packed["out_b"],
        packed["ln1_g"], packed["ln1_b"],
        packed["ffn_w1T"], packed["ffn_b1"],
        packed["ffn_w2T"], packed["ffn_b2"],
        packed["ln2_g"], packed["ln2_b"],
        packed["head_w"], packed["head_b"],
    )


# ---------------------------------------------------------------------------
# Parameters: PyTorch-convention init + one-time packing (transpose + stack)
# ---------------------------------------------------------------------------

def init_params(key, input_size, dim_feedforward, num_layers):
    D = dim_feedforward

    def nrm(k, shape, scale=0.05):
        return (scale * jax.random.normal(k, shape)).astype(jnp.float32)

    keys = jax.random.split(key, 4 + num_layers)
    params = {
        "emb_w": nrm(keys[0], (D, input_size)),
        "emb_b": nrm(keys[1], (D,)),
        "out_w": nrm(keys[2], (1, D)),
        "out_b": nrm(keys[3], (1,)),
        "layers": [],
    }
    for l in range(num_layers):
        lk = jax.random.split(keys[4 + l], 8)
        params["layers"].append({
            "in_proj_w": nrm(lk[0], (3 * D, D)),
            "in_proj_b": nrm(lk[1], (3 * D,)),
            "out_proj_w": nrm(lk[2], (D, D)),
            "out_proj_b": nrm(lk[3], (D,)),
            "ln1_g": jnp.ones((D,), jnp.float32),
            "ln1_b": jnp.zeros((D,), jnp.float32),
            # note: in this module dim_feedforward == d_model, so FFN weights are (D, D)
            "ffn_w1": nrm(lk[4], (D, D)),
            "ffn_b1": nrm(lk[5], (D,)),
            "ffn_w2": nrm(lk[6], (D, D)),
            "ffn_b2": nrm(lk[7], (D,)),
            "ln2_g": jnp.ones((D,), jnp.float32),
            "ln2_b": jnp.zeros((D,), jnp.float32),
        })
    return params


def pack_params(params):
    """One-time transpose (store weights as (Fin, Fout)) + stack per-layer tensors."""
    D = params["emb_w"].shape[0]
    layers = params["layers"]
    stack_w_T = lambda name: jnp.stack([l[name].T for l in layers])            # (L, Fin, Fout)
    stack_row = lambda name: jnp.stack([l[name].reshape(1, -1) for l in layers])  # (L, 1, dim)
    return {
        "emb_wT": params["emb_w"].T,                       # (F, D)
        "emb_b": params["emb_b"].reshape(1, D),
        "in_wT": stack_w_T("in_proj_w"),                   # (L, D, 3D)
        "in_b": stack_row("in_proj_b"),                    # (L, 1, 3D)
        "out_wT": stack_w_T("out_proj_w"),                 # (L, D, D)
        "out_b": stack_row("out_proj_b"),                  # (L, 1, D)
        "ln1_g": stack_row("ln1_g"),
        "ln1_b": stack_row("ln1_b"),
        "ffn_w1T": stack_w_T("ffn_w1"),
        "ffn_b1": stack_row("ffn_b1"),
        "ffn_w2T": stack_w_T("ffn_w2"),
        "ffn_b2": stack_row("ffn_b2"),
        "ln2_g": stack_row("ln2_g"),
        "ln2_b": stack_row("ln2_b"),
        "head_w": params["out_w"].reshape(1, D),
        "head_b": params["out_b"].reshape(1, 1),
    }


def regression_transformer_forward(packed, src, num_heads):
    """src: (S, B, input_size)  ->  (B,)   (matches PyTorch batch_first=False + .squeeze())."""
    S, B, F = src.shape
    src_bsf = jnp.transpose(src, (1, 0, 2))               # (B, S, F): one tiny host-side relayout
    out = fused_forward(src_bsf, packed, num_heads)       # (B, 1, 1)
    return out.reshape(B)


if __name__ == "__main__":
    INPUT_SIZE = 8
    NUM_HEADS = 4
    DIM_FEEDFORWARD = 32
    NUM_LAYERS = 2
    SEQ, BATCH = 8, 2

    key = jax.random.PRNGKey(0)
    pkey, xkey = jax.random.split(key)
    params = init_params(pkey, INPUT_SIZE, DIM_FEEDFORWARD, NUM_LAYERS)
    packed = pack_params(params)
    src = jax.random.normal(xkey, (SEQ, BATCH, INPUT_SIZE), dtype=jnp.float32)

    out = regression_transformer_forward(packed, src, NUM_HEADS)
    out = jax.block_until_ready(out)
    assert out.shape == (BATCH,), out.shape
    assert bool(jnp.all(jnp.isfinite(out)))
    print("KERNEL_OK")
</pallas_src>

<mosaic_0001>
module attributes {stable_mosaic.version = 11 : i64} {
  func.func @_fused_forward_kernel(%arg0: i32, %arg1: memref<1x8x8xf32, #tpu.memory_space<vmem>>, %arg2: memref<8x32xf32, #tpu.memory_space<vmem>>, %arg3: memref<1x32xf32, #tpu.memory_space<vmem>>, %arg4: memref<2x32x96xf32, #tpu.memory_space<vmem>>, %arg5: memref<2x1x96xf32, #tpu.memory_space<vmem>>, %arg6: memref<2x32x32xf32, #tpu.memory_space<vmem>>, %arg7: memref<2x1x32xf32, #tpu.memory_space<vmem>>, %arg8: memref<2x1x32xf32, #tpu.memory_space<vmem>>, %arg9: memref<2x1x32xf32, #tpu.memory_space<vmem>>, %arg10: memref<2x32x32xf32, #tpu.memory_space<vmem>>, %arg11: memref<2x1x32xf32, #tpu.memory_space<vmem>>, %arg12: memref<2x32x32xf32, #tpu.memory_space<vmem>>, %arg13: memref<2x1x32xf32, #tpu.memory_space<vmem>>, %arg14: memref<2x1x32xf32, #tpu.memory_space<vmem>>, %arg15: memref<2x1x32xf32, #tpu.memory_space<vmem>>, %arg16: memref<1x32xf32, #tpu.memory_space<vmem>>, %arg17: memref<1x1xf32, #tpu.memory_space<vmem>>, %arg18: memref<1x1x1xf32, #tpu.memory_space<vmem>>) attributes {dimension_semantics = [#tpu.dimension_semantics<parallel>], iteration_bounds = array<i64: 2>, scalar_prefetch = 0 : i64, scratch_operands = 0 : i64, tpu.core_type = #tpu.core_type<tc>, window_params = [{transform_indices = @transform_0, window_bounds = array<i64: 1, 8, 8>}, {pipeline_mode = #tpu.pipeline_mode<synchronous>, transform_indices = @transform_1, window_bounds = array<i64: 8, 32>}, {pipeline_mode = #tpu.pipeline_mode<synchronous>, transform_indices = @transform_2, window_bounds = array<i64: 1, 32>}, {pipeline_mode = #tpu.pipeline_mode<synchronous>, transform_indices = @transform_3, window_bounds = array<i64: 2, 32, 96>}, {pipeline_mode = #tpu.pipeline_mode<synchronous>, transform_indices = @transform_4, window_bounds = array<i64: 2, 1, 96>}, {pipeline_mode = #tpu.pipeline_mode<synchronous>, transform_indices = @transform_5, window_bounds = array<i64: 2, 32, 32>}, {pipeline_mode = #tpu.pipeline_mode<synchronous>, transform_indices = @transform_6, window_bounds = array<i64: 2, 1, 32>}, {pipeline_mode = #tpu.pipeline_mode<synchronous>, transform_indices = @transform_7, window_bounds = array<i64: 2, 1, 32>}, {pipeline_mode = #tpu.pipeline_mode<synchronous>, transform_indices = @transform_8, window_bounds = array<i64: 2, 1, 32>}, {pipeline_mode = #tpu.pipeline_mode<synchronous>, transform_indices = @transform_9, window_bounds = array<i64: 2, 32, 32>}, {pipeline_mode = #tpu.pipeline_mode<synchronous>, transform_indices = @transform_10, window_bounds = array<i64: 2, 1, 32>}, {pipeline_mode = #tpu.pipeline_mode<synchronous>, transform_indices = @transform_11, window_bounds = array<i64: 2, 32, 32>}, {pipeline_mode = #tpu.pipeline_mode<synchronous>, transform_indices = @transform_12, window_bounds = array<i64: 2, 1, 32>}, {pipeline_mode = #tpu.pipeline_mode<synchronous>, transform_indices = @transform_13, window_bounds = array<i64: 2, 1, 32>}, {pipeline_mode = #tpu.pipeline_mode<synchronous>, transform_indices = @transform_14, window_bounds = array<i64: 2, 1, 32>}, {pipeline_mode = #tpu.pipeline_mode<synchronous>, transform_indices = @transform_15, window_bounds = array<i64: 1, 32>}, {pipeline_mode = #tpu.pipeline_mode<synchronous>, transform_indices = @transform_16, window_bounds = array<i64: 1, 1>}, {transform_indices = @transform_17, window_bounds = array<i64: 1, 1, 1>}]} {
    %c0 = arith.constant 0 : index
    %c0_0 = arith.constant 0 : index
    %c0_1 = arith.constant 0 : index
    %0 = vector.load %arg1[%c0, %c0_0, %c0_1] : memref<1x8x8xf32, #tpu.memory_space<vmem>>, vector<1x8x8xf32>
    %1 = vector.shape_cast %0 : vector<1x8x8xf32> to vector<8x8xf32>
    %c0_2 = arith.constant 0 : index
    %c0_3 = arith.constant 0 : index
    %2 = vector.load %arg2[%c0_2, %c0_3] : memref<8x32xf32, #tpu.memory_space<vmem>>, vector<8x32xf32>
    %cst = arith.constant dense<0.000000e+00> : vector<8x32xf32>
    %3 = tpu.matmul %1, %2, %cst {dimension_numbers = #tpu.dot_dimension_numbers<[1], [0], [0], [1], [0, 0, 1, 1], [], []>} : vector<8x8xf32>, vector<8x32xf32>, vector<8x32xf32> -> vector<8x32xf32>
    %c0_4 = arith.constant 0 : index
    %c0_5 = arith.constant 0 : index
    %4 = vector.load %arg3[%c0_4, %c0_5] : memref<1x32xf32, #tpu.memory_space<vmem>>, vector<1x32xf32>
    %5 = vector.broadcast %4 : vector<1x32xf32> to vector<8x32xf32>
    %6 = arith.addf %3, %5 : vector<8x32xf32>
    %c0_6 = arith.constant 0 : index
    %c0_7 = arith.constant 0 : index
    %c0_8 = arith.constant 0 : index
    %7 = vector.load %arg4[%c0_6, %c0_7, %c0_8] : memref<2x32x96xf32, #tpu.memory_space<vmem>>, vector<1x32x96xf32>
    %8 = vector.shape_cast %7 : vector<1x32x96xf32> to vector<32x96xf32>
    %cst_9 = arith.constant dense<0.000000e+00> : vector<8x96xf32>
    %9 = tpu.matmul %6, %8, %cst_9 {dimension_numbers = #tpu.dot_dimension_numbers<[1], [0], [0], [1], [0, 0, 1, 1], [], []>} : vector<8x32xf32>, vector<32x96xf32>, vector<8x96xf32> -> vector<8x96xf32>
    %c0_10 = arith.constant 0 : index
    %c0_11 = arith.constant 0 : index
    %c0_12 = arith.constant 0 : index
    %10 = vector.load %arg5[%c0_10, %c0_11, %c0_12] : memref<2x1x96xf32, #tpu.memory_space<vmem>>, vector<1x1x96xf32>
    %11 = vector.shape_cast %10 : vector<1x1x96xf32> to vector<1x96xf32>
    %12 = vector.broadcast %11 : vector<1x96xf32> to vector<8x96xf32>
    %13 = arith.addf %9, %12 : vector<8x96xf32>
    %14 = vector.extract_strided_slice %13 {offsets = [0, 0], sizes = [8, 32], strides = [1, 1]} : vector<8x96xf32> to vector<8x32xf32>
    %cst_13 = arith.constant 0.353553385 : f32
    %15 = vector.broadcast %cst_13 : f32 to vector<8x32xf32>
    %16 = arith.mulf %14, %15 : vector<8x32xf32>
    %17 = vector.extract_strided_slice %13 {offsets = [0, 32], sizes = [8, 32], strides = [1, 1]} : vector<8x96xf32> to vector<8x32xf32>
    %18 = vector.extract_strided_slice %13 {offsets = [0, 64], sizes = [8, 32], strides = [1, 1]} : vector<8x96xf32> to vector<8x32xf32>
    %c0_14 = arith.constant 0 : index
    %c0_15 = arith.constant 0 : index
    %c0_16 = arith.constant 0 : index
    %19 = vector.load %arg6[%c0_14, %c0_15, %c0_16] : memref<2x32x32xf32, #tpu.memory_space<vmem>>, vector<1x32x32xf32>
    %20 = vector.shape_cast %19 : vector<1x32x32xf32> to vector<32x32xf32>
    %cst_17 = arith.constant 0.000000e+00 : f32
    %21 = vector.broadcast %cst_17 : f32 to vector<8x32xf32>
    %22 = vector.extract_strided_slice %16 {offsets = [0, 0], sizes = [8, 8], strides = [1, 1]} : vector<8x32xf32> to vector<8x8xf32>
    %23 = vector.extract_strided_slice %17 {offsets = [0, 0], sizes = [8, 8], strides = [1, 1]} : vector<8x32xf32> to vector<8x8xf32>
    %24 = vector.extract_strided_slice %18 {offsets = [0, 0], sizes = [8, 8], strides = [1, 1]} : vector<8x32xf32> to vector<8x8xf32>
    %cst_18 = arith.constant dense<0.000000e+00> : vector<8x8xf32>
    %25 = tpu.matmul %22, %23, %cst_18 {dimension_numbers = #tpu.dot_dimension_numbers<[1], [1], [0], [0], [0, 0, 1, 0], [], []>} : vector<8x8xf32>, vector<8x8xf32>, vector<8x8xf32> -> vector<8x8xf32>
    %cst_19 = arith.constant dense<0xFF800000> : vector<8xf32>
    %26 = vector.multi_reduction <maximumf>, %25, %cst_19 [1] : vector<8x8xf32> to vector<8xf32>
    %27 = vector.shape_cast %26 : vector<8xf32> to vector<8x1xf32>
    %28 = vector.broadcast %27 : vector<8x1xf32> to vector<8x8xf32>
    %29 = arith.subf %25, %28 : vector<8x8xf32>
    %30 = math.exp %29 : vector<8x8xf32>
    %cst_20 = arith.constant dense<0.000000e+00> : vector<8xf32>
    %31 = vector.multi_reduction <add>, %30, %cst_20 [1] : vector<8x8xf32> to vector<8xf32>
    %32 = vector.shape_cast %31 : vector<8xf32> to vector<8x1xf32>
    %33 = tpu.reciprocal %32 {approx = true} : vector<8x1xf32> -> vector<8x1xf32>
    %34 = vector.broadcast %33 : vector<8x1xf32> to vector<8x8xf32>
    %35 = arith.mulf %30, %34 : vector<8x8xf32>
    %cst_21 = arith.constant dense<0.000000e+00> : vector<8x8xf32>
    %36 = tpu.matmul %35, %24, %cst_21 {dimension_numbers = #tpu.dot_dimension_numbers<[1], [0], [0], [1], [0, 0, 1, 1], [], []>} : vector<8x8xf32>, vector<8x8xf32>, vector<8x8xf32> -> vector<8x8xf32>
    %37 = vector.extract_strided_slice %20 {offsets = [0, 0], sizes = [8, 32], strides = [1, 1]} : vector<32x32xf32> to vector<8x32xf32>
    %cst_22 = arith.constant dense<0.000000e+00> : vector<8x32xf32>
    %38 = tpu.matmul %36, %37, %cst_22 {dimension_numbers = #tpu.dot_dimension_numbers<[1], [0], [0], [1], [0, 0, 1, 1], [], []>} : vector<8x8xf32>, vector<8x32xf32>, vector<8x32xf32> -> vector<8x32xf32>
    %39 = arith.addf %21, %38 : vector<8x32xf32>
    %40 = vector.extract_strided_slice %16 {offsets = [0, 8], sizes = [8, 8], strides = [1, 1]} : vector<8x32xf32> to vector<8x8xf32>
    %41 = vector.extract_strided_slice %17 {offsets = [0, 8], sizes = [8, 8], strides = [1, 1]} : vector<8x32xf32> to vector<8x8xf32>
    %42 = vector.extract_strided_slice %18 {offsets = [0, 8], sizes = [8, 8], strides = [1, 1]} : vector<8x32xf32> to vector<8x8xf32>
    %cst_23 = arith.constant dense<0.000000e+00> : vector<8x8xf32>
    %43 = tpu.matmul %40, %41, %cst_23 {dimension_numbers = #tpu.dot_dimension_numbers<[1], [1], [0], [0], [0, 0, 1, 0], [], []>} : vector<8x8xf32>, vector<8x8xf32>, vector<8x8xf32> -> vector<8x8xf32>
    %cst_24 = arith.constant dense<0xFF800000> : vector<8xf32>
    %44 = vector.multi_reduction <maximumf>, %43, %cst_24 [1] : vector<8x8xf32> to vector<8xf32>
    %45 = vector.shape_cast %44 : vector<8xf32> to vector<8x1xf32>
    %46 = vector.broadcast %45 : vector<8x1xf32> to vector<8x8xf32>
    %47 = arith.subf %43, %46 : vector<8x8xf32>
    %48 = math.exp %47 : vector<8x8xf32>
    %cst_25 = arith.constant dense<0.000000e+00> : vector<8xf32>
    %49 = vector.multi_reduction <add>, %48, %cst_25 [1] : vector<8x8xf32> to vector<8xf32>
    %50 = vector.shape_cast %49 : vector<8xf32> to vector<8x1xf32>
    %51 = tpu.reciprocal %50 {approx = true} : vector<8x1xf32> -> vector<8x1xf32>
    %52 = vector.broadcast %51 : vector<8x1xf32> to vector<8x8xf32>
    %53 = arith.mulf %48, %52 : vector<8x8xf32>
    %cst_26 = arith.constant dense<0.000000e+00> : vector<8x8xf32>
    %54 = tpu.matmul %53, %42, %cst_26 {dimension_numbers = #tpu.dot_dimension_numbers<[1], [0], [0], [1], [0, 0, 1, 1], [], []>} : vector<8x8xf32>, vector<8x8xf32>, vector<8x8xf32> -> vector<8x8xf32>
    %55 = vector.extract_strided_slice %20 {offsets = [8, 0], sizes = [8, 32], strides = [1, 1]} : vector<32x32xf32> to vector<8x32xf32>
    %cst_27 = arith.constant dense<0.000000e+00> : vector<8x32xf32>
    %56 = tpu.matmul %54, %55, %cst_27 {dimension_numbers = #tpu.dot_dimension_numbers<[1], [0], [0], [1], [0, 0, 1, 1], [], []>} : vector<8x8xf32>, vector<8x32xf32>, vector<8x32xf32> -> vector<8x32xf32>
    %57 = arith.addf %39, %56 : vector<8x32xf32>
    %58 = vector.extract_strided_slice %16 {offsets = [0, 16], sizes = [8, 8], strides = [1, 1]} : vector<8x32xf32> to vector<8x8xf32>
    %59 = vector.extract_strided_slice %17 {offsets = [0, 16], sizes = [8, 8], strides = [1, 1]} : vector<8x32xf32> to vector<8x8xf32>
    %60 = vector.extract_strided_slice %18 {offsets = [0, 16], sizes = [8, 8], strides = [1, 1]} : vector<8x32xf32> to vector<8x8xf32>
    %cst_28 = arith.constant dense<0.000000e+00> : vector<8x8xf32>
    %61 = tpu.matmul %58, %59, %cst_28 {dimension_numbers = #tpu.dot_dimension_numbers<[1], [1], [0], [0], [0, 0, 1, 0], [], []>} : vector<8x8xf32>, vector<8x8xf32>, vector<8x8xf32> -> vector<8x8xf32>
    %cst_29 = arith.constant dense<0xFF800000> : vector<8xf32>
    %62 = vector.multi_reduction <maximumf>, %61, %cst_29 [1] : vector<8x8xf32> to vector<8xf32>
    %63 = vector.shape_cast %62 : vector<8xf32> to vector<8x1xf32>
    %64 = vector.broadcast %63 : vector<8x1xf32> to vector<8x8xf32>
    %65 = arith.subf %61, %64 : vector<8x8xf32>
    %66 = math.exp %65 : vector<8x8xf32>
    %cst_30 = arith.constant dense<0.000000e+00> : vector<8xf32>
    %67 = vector.multi_reduction <add>, %66, %cst_30 [1] : vector<8x8xf32> to vector<8xf32>
    %68 = vector.shape_cast %67 : vector<8xf32> to vector<8x1xf32>
    %69 = tpu.reciprocal %68 {approx = true} : vector<8x1xf32> -> vector<8x1xf32>
    %70 = vector.broadcast %69 : vector<8x1xf32> to vector<8x8xf32>
    %71 = arith.mulf %66, %70 : vector<8x8xf32>
    %cst_31 = arith.constant dense<0.000000e+00> : vector<8x8xf32>
    %72 = tpu.matmul %71, %60, %cst_31 {dimension_numbers = #tpu.dot_dimension_numbers<[1], [0], [0], [1], [0, 0, 1, 1], [], []>} : vector<8x8xf32>, vector<8x8xf32>, vector<8x8xf32> -> vector<8x8xf32>
    %73 = vector.extract_strided_slice %20 {offsets = [16, 0], sizes = [8, 32], strides = [1, 1]} : vector<32x32xf32> to vector<8x32xf32>
    %cst_32 = arith.constant dense<0.000000e+00> : vector<8x32xf32>
    %74 = tpu.matmul %72, %73, %cst_32 {dimension_numbers = #tpu.dot_dimension_numbers<[1], [0], [0], [1], [0, 0, 1, 1], [], []>} : vector<8x8xf32>, vector<8x32xf32>, vector<8x32xf32> -> vector<8x32xf32>
    %75 = arith.addf %57, %74 : vector<8x32xf32>
    %76 = vector.extract_strided_slice %16 {offsets = [0, 24], sizes = [8, 8], strides = [1, 1]} : vector<8x32xf32> to vector<8x8xf32>
    %77 = vector.extract_strided_slice %17 {offsets = [0, 24], sizes = [8, 8], strides = [1, 1]} : vector<8x32xf32> to vector<8x8xf32>
    %78 = vector.extract_strided_slice %18 {offsets = [0, 24], sizes = [8, 8], strides = [1, 1]} : vector<8x32xf32> to vector<8x8xf32>
    %cst_33 = arith.constant dense<0.000000e+00> : vector<8x8xf32>
    %79 = tpu.matmul %76, %77, %cst_33 {dimension_numbers = #tpu.dot_dimension_numbers<[1], [1], [0], [0], [0, 0, 1, 0], [], []>} : vector<8x8xf32>, vector<8x8xf32>, vector<8x8xf32> -> vector<8x8xf32>
    %cst_34 = arith.constant dense<0xFF800000> : vector<8xf32>
    %80 = vector.multi_reduction <maximumf>, %79, %cst_34 [1] : vector<8x8xf32> to vector<8xf32>
    %81 = vector.shape_cast %80 : vector<8xf32> to vector<8x1xf32>
    %82 = vector.broadcast %81 : vector<8x1xf32> to vector<8x8xf32>
    %83 = arith.subf %79, %82 : vector<8x8xf32>
    %84 = math.exp %83 : vector<8x8xf32>
    %cst_35 = arith.constant dense<0.000000e+00> : vector<8xf32>
    %85 = vector.multi_reduction <add>, %84, %cst_35 [1] : vector<8x8xf32> to vector<8xf32>
    %86 = vector.shape_cast %85 : vector<8xf32> to vector<8x1xf32>
    %87 = tpu.reciprocal %86 {approx = true} : vector<8x1xf32> -> vector<8x1xf32>
    %88 = vector.broadcast %87 : vector<8x1xf32> to vector<8x8xf32>
    %89 = arith.mulf %84, %88 : vector<8x8xf32>
    %cst_36 = arith.constant dense<0.000000e+00> : vector<8x8xf32>
    %90 = tpu.matmul %89, %78, %cst_36 {dimension_numbers = #tpu.dot_dimension_numbers<[1], [0], [0], [1], [0, 0, 1, 1], [], []>} : vector<8x8xf32>, vector<8x8xf32>, vector<8x8xf32> -> vector<8x8xf32>
    %91 = vector.extract_strided_slice %20 {offsets = [24, 0], sizes = [8, 32], strides = [1, 1]} : vector<32x32xf32> to vector<8x32xf32>
    %cst_37 = arith.constant dense<0.000000e+00> : vector<8x32xf32>
    %92 = tpu.matmul %90, %91, %cst_37 {dimension_numbers = #tpu.dot_dimension_numbers<[1], [0], [0], [1], [0, 0, 1, 1], [], []>} : vector<8x8xf32>, vector<8x32xf32>, vector<8x32xf32> -> vector<8x32xf32>
    %93 = arith.addf %75, %92 : vector<8x32xf32>
    %c0_38 = arith.constant 0 : index
    %c0_39 = arith.constant 0 : index
    %c0_40 = arith.constant 0 : index
    %94 = vector.load %arg7[%c0_38, %c0_39, %c0_40] : memref<2x1x32xf32, #tpu.memory_space<vmem>>, vector<1x1x32xf32>
    %95 = vector.shape_cast %94 : vector<1x1x32xf32> to vector<1x32xf32>
    %96 = vector.broadcast %95 : vector<1x32xf32> to vector<8x32xf32>
    %97 = arith.addf %93, %96 : vector<8x32xf32>
    %98 = arith.addf %6, %97 : vector<8x32xf32>
    %c0_41 = arith.constant 0 : index
    %c0_42 = arith.constant 0 : index
    %c0_43 = arith.constant 0 : index
    %99 = vector.load %arg8[%c0_41, %c0_42, %c0_43] : memref<2x1x32xf32, #tpu.memory_space<vmem>>, vector<1x1x32xf32>
    %100 = vector.shape_cast %99 : vector<1x1x32xf32> to vector<1x32xf32>
    %c0_44 = arith.constant 0 : index
    %c0_45 = arith.constant 0 : index
    %c0_46 = arith.constant 0 : index
    %101 = vector.load %arg9[%c0_44, %c0_45, %c0_46] : memref<2x1x32xf32, #tpu.memory_space<vmem>>, vector<1x1x32xf32>
    %102 = vector.shape_cast %101 : vector<1x1x32xf32> to vector<1x32xf32>
    %cst_47 = arith.constant dense<0.000000e+00> : vector<8xf32>
    %103 = vector.multi_reduction <add>, %98, %cst_47 [1] : vector<8x32xf32> to vector<8xf32>
    %104 = vector.shape_cast %103 : vector<8xf32> to vector<8x1xf32>
    %cst_48 = arith.constant 3.200000e+01 : f32
    %105 = vector.broadcast %cst_48 : f32 to vector<8x1xf32>
    %106 = arith.divf %104, %105 : vector<8x1xf32>
    %107 = vector.broadcast %106 : vector<8x1xf32> to vector<8x32xf32>
    %108 = arith.subf %98, %107 : vector<8x32xf32>
    %109 = arith.mulf %108, %108 : vector<8x32xf32>
    %cst_49 = arith.constant dense<0.000000e+00> : vector<8xf32>
    %110 = vector.multi_reduction <add>, %109, %cst_49 [1] : vector<8x32xf32> to vector<8xf32>
    %111 = vector.shape_cast %110 : vector<8xf32> to vector<8x1xf32>
    %cst_50 = arith.constant 3.200000e+01 : f32
    %112 = vector.broadcast %cst_50 : f32 to vector<8x1xf32>
    %113 = arith.divf %111, %112 : vector<8x1xf32>
    %114 = vector.broadcast %106 : vector<8x1xf32> to vector<8x32xf32>
    %115 = arith.subf %98, %114 : vector<8x32xf32>
    %cst_51 = arith.constant 9.99999974E-6 : f32
    %116 = vector.broadcast %cst_51 : f32 to vector<8x1xf32>
    %117 = arith.addf %113, %116 : vector<8x1xf32>
    %118 = math.rsqrt %117 : vector<8x1xf32>
    %119 = vector.broadcast %118 : vector<8x1xf32> to vector<8x32xf32>
    %120 = arith.mulf %115, %119 : vector<8x32xf32>
    %121 = vector.broadcast %100 : vector<1x32xf32> to vector<8x32xf32>
    %122 = arith.mulf %120, %121 : vector<8x32xf32>
    %123 = vector.broadcast %102 : vector<1x32xf32> to vector<8x32xf32>
    %124 = arith.addf %122, %123 : vector<8x32xf32>
    %c0_52 = arith.constant 0 : index
    %c0_53 = arith.constant 0 : index
    %c0_54 = arith.constant 0 : index
    %125 = vector.load %arg10[%c0_52, %c0_53, %c0_54] : memref<2x32x32xf32, #tpu.memory_space<vmem>>, vector<1x32x32xf32>
    %126 = vector.shape_cast %125 : vector<1x32x32xf32> to vector<32x32xf32>
    %cst_55 = arith.constant dense<0.000000e+00> : vector<8x32xf32>
    %127 = tpu.matmul %124, %126, %cst_55 {dimension_numbers = #tpu.dot_dimension_numbers<[1], [0], [0], [1], [0, 0, 1, 1], [], []>} : vector<8x32xf32>, vector<32x32xf32>, vector<8x32xf32> -> vector<8x32xf32>
    %c0_56 = arith.constant 0 : index
    %c0_57 = arith.constant 0 : index
    %c0_58 = arith.constant 0 : index
    %128 = vector.load %arg11[%c0_56, %c0_57, %c0_58] : memref<2x1x32xf32, #tpu.memory_space<vmem>>, vector<1x1x32xf32>
    %129 = vector.shape_cast %128 : vector<1x1x32xf32> to vector<1x32xf32>
    %130 = vector.broadcast %129 : vector<1x32xf32> to vector<8x32xf32>
    %131 = arith.addf %127, %130 : vector<8x32xf32>
    %cst_59 = arith.constant 0.000000e+00 : f32
    %132 = vector.broadcast %cst_59 : f32 to vector<8x32xf32>
    %133 = arith.maximumf %131, %132 : vector<8x32xf32>
    %c0_60 = arith.constant 0 : index
    %c0_61 = arith.constant 0 : index
    %c0_62 = arith.constant 0 : index
    %134 = vector.load %arg12[%c0_60, %c0_61, %c0_62] : memref<2x32x32xf32, #tpu.memory_space<vmem>>, vector<1x32x32xf32>
    %135 = vector.shape_cast %134 : vector<1x32x32xf32> to vector<32x32xf32>
    %cst_63 = arith.constant dense<0.000000e+00> : vector<8x32xf32>
    %136 = tpu.matmul %133, %135, %cst_63 {dimension_numbers = #tpu.dot_dimension_numbers<[1], [0], [0], [1], [0, 0, 1, 1], [], []>} : vector<8x32xf32>, vector<32x32xf32>, vector<8x32xf32> -> vector<8x32xf32>
    %c0_64 = arith.constant 0 : index
    %c0_65 = arith.constant 0 : index
    %c0_66 = arith.constant 0 : index
    %137 = vector.load %arg13[%c0_64, %c0_65, %c0_66] : memref<2x1x32xf32, #tpu.memory_space<vmem>>, vector<1x1x32xf32>
    %138 = vector.shape_cast %137 : vector<1x1x32xf32> to vector<1x32xf32>
    %139 = vector.broadcast %138 : vector<1x32xf32> to vector<8x32xf32>
    %140 = arith.addf %136, %139 : vector<8x32xf32>
    %141 = arith.addf %124, %140 : vector<8x32xf32>
    %c0_67 = arith.constant 0 : index
    %c0_68 = arith.constant 0 : index
    %c0_69 = arith.constant 0 : index
    %142 = vector.load %arg14[%c0_67, %c0_68, %c0_69] : memref<2x1x32xf32, #tpu.memory_space<vmem>>, vector<1x1x32xf32>
    %143 = vector.shape_cast %142 : vector<1x1x32xf32> to vector<1x32xf32>
    %c0_70 = arith.constant 0 : index
    %c0_71 = arith.constant 0 : index
    %c0_72 = arith.constant 0 : index
    %144 = vector.load %arg15[%c0_70, %c0_71, %c0_72] : memref<2x1x32xf32, #tpu.memory_space<vmem>>, vector<1x1x32xf32>
    %145 = vector.shape_cast %144 : vector<1x1x32xf32> to vector<1x32xf32>
    %cst_73 = arith.constant dense<0.000000e+00> : vector<8xf32>
    %146 = vector.multi_reduction <add>, %141, %cst_73 [1] : vector<8x32xf32> to vector<8xf32>
    %147 = vector.shape_cast %146 : vector<8xf32> to vector<8x1xf32>
    %cst_74 = arith.constant 3.200000e+01 : f32
    %148 = vector.broadcast %cst_74 : f32 to vector<8x1xf32>
    %149 = arith.divf %147, %148 : vector<8x1xf32>
    %150 = vector.broadcast %149 : vector<8x1xf32> to vector<8x32xf32>
    %151 = arith.subf %141, %150 : vector<8x32xf32>
    %152 = arith.mulf %151, %151 : vector<8x32xf32>
    %cst_75 = arith.constant dense<0.000000e+00> : vector<8xf32>
    %153 = vector.multi_reduction <add>, %152, %cst_75 [1] : vector<8x32xf32> to vector<8xf32>
    %154 = vector.shape_cast %153 : vector<8xf32> to vector<8x1xf32>
    %cst_76 = arith.constant 3.200000e+01 : f32
    %155 = vector.broadcast %cst_76 : f32 to vector<8x1xf32>
    %156 = arith.divf %154, %155 : vector<8x1xf32>
    %157 = vector.broadcast %149 : vector<8x1xf32> to vector<8x32xf32>
    %158 = arith.subf %141, %157 : vector<8x32xf32>
    %cst_77 = arith.constant 9.99999974E-6 : f32
    %159 = vector.broadcast %cst_77 : f32 to vector<8x1xf32>
    %160 = arith.addf %156, %159 : vector<8x1xf32>
    %161 = math.rsqrt %160 : vector<8x1xf32>
    %162 = vector.broadcast %161 : vector<8x1xf32> to vector<8x32xf32>
    %163 = arith.mulf %158, %162 : vector<8x32xf32>
    %164 = vector.broadcast %143 : vector<1x32xf32> to vector<8x32xf32>
    %165 = arith.mulf %163, %164 : vector<8x32xf32>
    %166 = vector.broadcast %145 : vector<1x32xf32> to vector<8x32xf32>
    %167 = arith.addf %165, %166 : vector<8x32xf32>
    %c1 = arith.constant 1 : index
    %c0_78 = arith.constant 0 : index
    %c0_79 = arith.constant 0 : index
    %168 = vector.load %arg4[%c1, %c0_78, %c0_79] : memref<2x32x96xf32, #tpu.memory_space<vmem>>, vector<1x32x96xf32>
    %169 = vector.shape_cast %168 : vector<1x32x96xf32> to vector<32x96xf32>
    %cst_80 = arith.constant dense<0.000000e+00> : vector<8x96xf32>
    %170 = tpu.matmul %167, %169, %cst_80 {dimension_numbers = #tpu.dot_dimension_numbers<[1], [0], [0], [1], [0, 0, 1, 1], [], []>} : vector<8x32xf32>, vector<32x96xf32>, vector<8x96xf32> -> vector<8x96xf32>
    %c1_81 = arith.constant 1 : index
    %c0_82 = arith.constant 0 : index
    %c0_83 = arith.constant 0 : index
    %171 = vector.load %arg5[%c1_81, %c0_82, %c0_83] : memref<2x1x96xf32, #tpu.memory_space<vmem>>, vector<1x1x96xf32>
    %172 = vector.shape_cast %171 : vector<1x1x96xf32> to vector<1x96xf32>
    %173 = vector.broadcast %172 : vector<1x96xf32> to vector<8x96xf32>
    %174 = arith.addf %170, %173 : vector<8x96xf32>
    %175 = vector.extract_strided_slice %174 {offsets = [0, 0], sizes = [8, 32], strides = [1, 1]} : vector<8x96xf32> to vector<8x32xf32>
    %cst_84 = arith.constant 0.353553385 : f32
    %176 = vector.broadcast %cst_84 : f32 to vector<8x32xf32>
    %177 = arith.mulf %175, %176 : vector<8x32xf32>
    %178 = vector.extract_strided_slice %174 {offsets = [0, 32], sizes = [8, 32], strides = [1, 1]} : vector<8x96xf32> to vector<8x32xf32>
    %179 = vector.extract_strided_slice %174 {offsets = [0, 64], sizes = [8, 32], strides = [1, 1]} : vector<8x96xf32> to vector<8x32xf32>
    %c1_85 = arith.constant 1 : index
    %c0_86 = arith.constant 0 : index
    %c0_87 = arith.constant 0 : index
    %180 = vector.load %arg6[%c1_85, %c0_86, %c0_87] : memref<2x32x32xf32, #tpu.memory_space<vmem>>, vector<1x32x32xf32>
    %181 = vector.shape_cast %180 : vector<1x32x32xf32> to vector<32x32xf32>
    %cst_88 = arith.constant 0.000000e+00 : f32
    %182 = vector.broadcast %cst_88 : f32 to vector<8x32xf32>
    %183 = vector.extract_strided_slice %177 {offsets = [0, 0], sizes = [8, 8], strides = [1, 1]} : vector<8x32xf32> to vector<8x8xf32>
    %184 = vector.extract_strided_slice %178 {offsets = [0, 0], sizes = [8, 8], strides = [1, 1]} : vector<8x32xf32> to vector<8x8xf32>
    %185 = vector.extract_strided_slice %179 {offsets = [0, 0], sizes = [8, 8], strides = [1, 1]} : vector<8x32xf32> to vector<8x8xf32>
    %cst_89 = arith.constant dense<0.000000e+00> : vector<8x8xf32>
    %186 = tpu.matmul %183, %184, %cst_89 {dimension_numbers = #tpu.dot_dimension_numbers<[1], [1], [0], [0], [0, 0, 1, 0], [], []>} : vector<8x8xf32>, vector<8x8xf32>, vector<8x8xf32> -> vector<8x8xf32>
    %cst_90 = arith.constant dense<0xFF800000> : vector<8xf32>
    %187 = vector.multi_reduction <maximumf>, %186, %cst_90 [1] : vector<8x8xf32> to vector<8xf32>
    %188 = vector.shape_cast %187 : vector<8xf32> to vector<8x1xf32>
    %189 = vector.broadcast %188 : vector<8x1xf32> to vector<8x8xf32>
    %190 = arith.subf %186, %189 : vector<8x8xf32>
    %191 = math.exp %190 : vector<8x8xf32>
    %cst_91 = arith.constant dense<0.000000e+00> : vector<8xf32>
    %192 = vector.multi_reduction <add>, %191, %cst_91 [1] : vector<8x8xf32> to vector<8xf32>
    %193 = vector.shape_cast %192 : vector<8xf32> to vector<8x1xf32>
    %194 = tpu.reciprocal %193 {approx = true} : vector<8x1xf32> -> vector<8x1xf32>
    %195 = vector.broadcast %194 : vector<8x1xf32> to vector<8x8xf32>
    %196 = arith.mulf %191, %195 : vector<8x8xf32>
    %cst_92 = arith.constant dense<0.000000e+00> : vector<8x8xf32>
    %197 = tpu.matmul %196, %185, %cst_92 {dimension_numbers = #tpu.dot_dimension_numbers<[1], [0], [0], [1], [0, 0, 1, 1], [], []>} : vector<8x8xf32>, vector<8x8xf32>, vector<8x8xf32> -> vector<8x8xf32>
    %198 = vector.extract_strided_slice %181 {offsets = [0, 0], sizes = [8, 32], strides = [1, 1]} : vector<32x32xf32> to vector<8x32xf32>
    %cst_93 = arith.constant dense<0.000000e+00> : vector<8x32xf32>
    %199 = tpu.matmul %197, %198, %cst_93 {dimension_numbers = #tpu.dot_dimension_numbers<[1], [0], [0], [1], [0, 0, 1, 1], [], []>} : vector<8x8xf32>, vector<8x32xf32>, vector<8x32xf32> -> vector<8x32xf32>
    %200 = arith.addf %182, %199 : vector<8x32xf32>
    %201 = vector.extract_strided_slice %177 {offsets = [0, 8], sizes = [8, 8], strides = [1, 1]} : vector<8x32xf32> to vector<8x8xf32>
    %202 = vector.extract_strided_slice %178 {offsets = [0, 8], sizes = [8, 8], strides = [1, 1]} : vector<8x32xf32> to vector<8x8xf32>
    %203 = vector.extract_strided_slice %179 {offsets = [0, 8], sizes = [8, 8], strides = [1, 1]} : vector<8x32xf32> to vector<8x8xf32>
    %cst_94 = arith.constant dense<0.000000e+00> : vector<8x8xf32>
    %204 = tpu.matmul %201, %202, %cst_94 {dimension_numbers = #tpu.dot_dimension_numbers<[1], [1], [0], [0], [0, 0, 1, 0], [], []>} : vector<8x8xf32>, vector<8x8xf32>, vector<8x8xf32> -> vector<8x8xf32>
    %cst_95 = arith.constant dense<0xFF800000> : vector<8xf32>
    %205 = vector.multi_reduction <maximumf>, %204, %cst_95 [1] : vector<8x8xf32> to vector<8xf32>
    %206 = vector.shape_cast %205 : vector<8xf32> to vector<8x1xf32>
    %207 = vector.broadcast %206 : vector<8x1xf32> to vector<8x8xf32>
    %208 = arith.subf %204, %207 : vector<8x8xf32>
    %209 = math.exp %208 : vector<8x8xf32>
    %cst_96 = arith.constant dense<0.000000e+00> : vector<8xf32>
    %210 = vector.multi_reduction <add>, %209, %cst_96 [1] : vector<8x8xf32> to vector<8xf32>
    %211 = vector.shape_cast %210 : vector<8xf32> to vector<8x1xf32>
    %212 = tpu.reciprocal %211 {approx = true} : vector<8x1xf32> -> vector<8x1xf32>
    %213 = vector.broadcast %212 : vector<8x1xf32> to vector<8x8xf32>
    %214 = arith.mulf %209, %213 : vector<8x8xf32>
    %cst_97 = arith.constant dense<0.000000e+00> : vector<8x8xf32>
    %215 = tpu.matmul %214, %203, %cst_97 {dimension_numbers = #tpu.dot_dimension_numbers<[1], [0], [0], [1], [0, 0, 1, 1], [], []>} : vector<8x8xf32>, vector<8x8xf32>, vector<8x8xf32> -> vector<8x8xf32>
    %216 = vector.extract_strided_slice %181 {offsets = [8, 0], sizes = [8, 32], strides = [1, 1]} : vector<32x32xf32> to vector<8x32xf32>
    %cst_98 = arith.constant dense<0.000000e+00> : vector<8x32xf32>
    %217 = tpu.matmul %215, %216, %cst_98 {dimension_numbers = #tpu.dot_dimension_numbers<[1], [0], [0], [1], [0, 0, 1, 1], [], []>} : vector<8x8xf32>, vector<8x32xf32>, vector<8x32xf32> -> vector<8x32xf32>
    %218 = arith.addf %200, %217 : vector<8x32xf32>
    %219 = vector.extract_strided_slice %177 {offsets = [0, 16], sizes = [8, 8], strides = [1, 1]} : vector<8x32xf32> to vector<8x8xf32>
    %220 = vector.extract_strided_slice %178 {offsets = [0, 16], sizes = [8, 8], strides = [1, 1]} : vector<8x32xf32> to vector<8x8xf32>
    %221 = vector.extract_strided_slice %179 {offsets = [0, 16], sizes = [8, 8], strides = [1, 1]} : vector<8x32xf32> to vector<8x8xf32>
    %cst_99 = arith.constant dense<0.000000e+00> : vector<8x8xf32>
    %222 = tpu.matmul %219, %220, %cst_99 {dimension_numbers = #tpu.dot_dimension_numbers<[1], [1], [0], [0], [0, 0, 1, 0], [], []>} : vector<8x8xf32>, vector<8x8xf32>, vector<8x8xf32> -> vector<8x8xf32>
    %cst_100 = arith.constant dense<0xFF800000> : vector<8xf32>
    %223 = vector.multi_reduction <maximumf>, %222, %cst_100 [1] : vector<8x8xf32> to vector<8xf32>
    %224 = vector.shape_cast %223 : vector<8xf32> to vector<8x1xf32>
    %225 = vector.broadcast %224 : vector<8x1xf32> to vector<8x8xf32>
    %226 = arith.subf %222, %225 : vector<8x8xf32>
    %227 = math.exp %226 : vector<8x8xf32>
    %cst_101 = arith.constant dense<0.000000e+00> : vector<8xf32>
    %228 = vector.multi_reduction <add>, %227, %cst_101 [1] : vector<8x8xf32> to vector<8xf32>
    %229 = vector.shape_cast %228 : vector<8xf32> to vector<8x1xf32>
    %230 = tpu.reciprocal %229 {approx = true} : vector<8x1xf32> -> vector<8x1xf32>
    %231 = vector.broadcast %230 : vector<8x1xf32> to vector<8x8xf32>
    %232 = arith.mulf %227, %231 : vector<8x8xf32>
    %cst_102 = arith.constant dense<0.000000e+00> : vector<8x8xf32>
    %233 = tpu.matmul %232, %221, %cst_102 {dimension_numbers = #tpu.dot_dimension_numbers<[1], [0], [0], [1], [0, 0, 1, 1], [], []>} : vector<8x8xf32>, vector<8x8xf32>, vector<8x8xf32> -> vector<8x8xf32>
    %234 = vector.extract_strided_slice %181 {offsets = [16, 0], sizes = [8, 32], strides = [1, 1]} : vector<32x32xf32> to vector<8x32xf32>
    %cst_103 = arith.constant dense<0.000000e+00> : vector<8x32xf32>
    %235 = tpu.matmul %233, %234, %cst_103 {dimension_numbers = #tpu.dot_dimension_numbers<[1], [0], [0], [1], [0, 0, 1, 1], [], []>} : vector<8x8xf32>, vector<8x32xf32>, vector<8x32xf32> -> vector<8x32xf32>
    %236 = arith.addf %218, %235 : vector<8x32xf32>
    %237 = vector.extract_strided_slice %177 {offsets = [0, 24], sizes = [8, 8], strides = [1, 1]} : vector<8x32xf32> to vector<8x8xf32>
    %238 = vector.extract_strided_slice %178 {offsets = [0, 24], sizes = [8, 8], strides = [1, 1]} : vector<8x32xf32> to vector<8x8xf32>
    %239 = vector.extract_strided_slice %179 {offsets = [0, 24], sizes = [8, 8], strides = [1, 1]} : vector<8x32xf32> to vector<8x8xf32>
    %cst_104 = arith.constant dense<0.000000e+00> : vector<8x8xf32>
    %240 = tpu.matmul %237, %238, %cst_104 {dimension_numbers = #tpu.dot_dimension_numbers<[1], [1], [0], [0], [0, 0, 1, 0], [], []>} : vector<8x8xf32>, vector<8x8xf32>, vector<8x8xf32> -> vector<8x8xf32>
    %cst_105 = arith.constant dense<0xFF800000> : vector<8xf32>
    %241 = vector.multi_reduction <maximumf>, %240, %cst_105 [1] : vector<8x8xf32> to vector<8xf32>
    %242 = vector.shape_cast %241 : vector<8xf32> to vector<8x1xf32>
    %243 = vector.broadcast %242 : vector<8x1xf32> to vector<8x8xf32>
    %244 = arith.subf %240, %243 : vector<8x8xf32>
    %245 = math.exp %244 : vector<8x8xf32>
    %cst_106 = arith.constant dense<0.000000e+00> : vector<8xf32>
    %246 = vector.multi_reduction <add>, %245, %cst_106 [1] : vector<8x8xf32> to vector<8xf32>
    %247 = vector.shape_cast %246 : vector<8xf32> to vector<8x1xf32>
    %248 = tpu.reciprocal %247 {approx = true} : vector<8x1xf32> -> vector<8x1xf32>
    %249 = vector.broadcast %248 : vector<8x1xf32> to vector<8x8xf32>
    %250 = arith.mulf %245, %249 : vector<8x8xf32>
    %cst_107 = arith.constant dense<0.000000e+00> : vector<8x8xf32>
    %251 = tpu.matmul %250, %239, %cst_107 {dimension_numbers = #tpu.dot_dimension_numbers<[1], [0], [0], [1], [0, 0, 1, 1], [], []>} : vector<8x8xf32>, vector<8x8xf32>, vector<8x8xf32> -> vector<8x8xf32>
    %252 = vector.extract_strided_slice %181 {offsets = [24, 0], sizes = [8, 32], strides = [1, 1]} : vector<32x32xf32> to vector<8x32xf32>
    %cst_108 = arith.constant dense<0.000000e+00> : vector<8x32xf32>
    %253 = tpu.matmul %251, %252, %cst_108 {dimension_numbers = #tpu.dot_dimension_numbers<[1], [0], [0], [1], [0, 0, 1, 1], [], []>} : vector<8x8xf32>, vector<8x32xf32>, vector<8x32xf32> -> vector<8x32xf32>
    %254 = arith.addf %236, %253 : vector<8x32xf32>
    %c1_109 = arith.constant 1 : index
    %c0_110 = arith.constant 0 : index
    %c0_111 = arith.constant 0 : index
    %255 = vector.load %arg7[%c1_109, %c0_110, %c0_111] : memref<2x1x32xf32, #tpu.memory_space<vmem>>, vector<1x1x32xf32>
    %256 = vector.shape_cast %255 : vector<1x1x32xf32> to vector<1x32xf32>
    %257 = vector.broadcast %256 : vector<1x32xf32> to vector<8x32xf32>
    %258 = arith.addf %254, %257 : vector<8x32xf32>
    %259 = arith.addf %167, %258 : vector<8x32xf32>
    %c1_112 = arith.constant 1 : index
    %c0_113 = arith.constant 0 : index
    %c0_114 = arith.constant 0 : index
    %260 = vector.load %arg8[%c1_112, %c0_113, %c0_114] : memref<2x1x32xf32, #tpu.memory_space<vmem>>, vector<1x1x32xf32>
    %261 = vector.shape_cast %260 : vector<1x1x32xf32> to vector<1x32xf32>
    %c1_115 = arith.constant 1 : index
    %c0_116 = arith.constant 0 : index
    %c0_117 = arith.constant 0 : index
    %262 = vector.load %arg9[%c1_115, %c0_116, %c0_117] : memref<2x1x32xf32, #tpu.memory_space<vmem>>, vector<1x1x32xf32>
    %263 = vector.shape_cast %262 : vector<1x1x32xf32> to vector<1x32xf32>
    %cst_118 = arith.constant dense<0.000000e+00> : vector<8xf32>
    %264 = vector.multi_reduction <add>, %259, %cst_118 [1] : vector<8x32xf32> to vector<8xf32>
    %265 = vector.shape_cast %264 : vector<8xf32> to vector<8x1xf32>
    %cst_119 = arith.constant 3.200000e+01 : f32
    %266 = vector.broadcast %cst_119 : f32 to vector<8x1xf32>
    %267 = arith.divf %265, %266 : vector<8x1xf32>
    %268 = vector.broadcast %267 : vector<8x1xf32> to vector<8x32xf32>
    %269 = arith.subf %259, %268 : vector<8x32xf32>
    %270 = arith.mulf %269, %269 : vector<8x32xf32>
    %cst_120 = arith.constant dense<0.000000e+00> : vector<8xf32>
    %271 = vector.multi_reduction <add>, %270, %cst_120 [1] : vector<8x32xf32> to vector<8xf32>
    %272 = vector.shape_cast %271 : vector<8xf32> to vector<8x1xf32>
    %cst_121 = arith.constant 3.200000e+01 : f32
    %273 = vector.broadcast %cst_121 : f32 to vector<8x1xf32>
    %274 = arith.divf %272, %273 : vector<8x1xf32>
    %275 = vector.broadcast %267 : vector<8x1xf32> to vector<8x32xf32>
    %276 = arith.subf %259, %275 : vector<8x32xf32>
    %cst_122 = arith.constant 9.99999974E-6 : f32
    %277 = vector.broadcast %cst_122 : f32 to vector<8x1xf32>
    %278 = arith.addf %274, %277 : vector<8x1xf32>
    %279 = math.rsqrt %278 : vector<8x1xf32>
    %280 = vector.broadcast %279 : vector<8x1xf32> to vector<8x32xf32>
    %281 = arith.mulf %276, %280 : vector<8x32xf32>
    %282 = vector.broadcast %261 : vector<1x32xf32> to vector<8x32xf32>
    %283 = arith.mulf %281, %282 : vector<8x32xf32>
    %284 = vector.broadcast %263 : vector<1x32xf32> to vector<8x32xf32>
    %285 = arith.addf %283, %284 : vector<8x32xf32>
    %c1_123 = arith.constant 1 : index
    %c0_124 = arith.constant 0 : index
    %c0_125 = arith.constant 0 : index
    %286 = vector.load %arg10[%c1_123, %c0_124, %c0_125] : memref<2x32x32xf32, #tpu.memory_space<vmem>>, vector<1x32x32xf32>
    %287 = vector.shape_cast %286 : vector<1x32x32xf32> to vector<32x32xf32>
    %cst_126 = arith.constant dense<0.000000e+00> : vector<8x32xf32>
    %288 = tpu.matmul %285, %287, %cst_126 {dimension_numbers = #tpu.dot_dimension_numbers<[1], [0], [0], [1], [0, 0, 1, 1], [], []>} : vector<8x32xf32>, vector<32x32xf32>, vector<8x32xf32> -> vector<8x32xf32>
    %c1_127 = arith.constant 1 : index
    %c0_128 = arith.constant 0 : index
    %c0_129 = arith.constant 0 : index
    %289 = vector.load %arg11[%c1_127, %c0_128, %c0_129] : memref<2x1x32xf32, #tpu.memory_space<vmem>>, vector<1x1x32xf32>
    %290 = vector.shape_cast %289 : vector<1x1x32xf32> to vector<1x32xf32>
    %291 = vector.broadcast %290 : vector<1x32xf32> to vector<8x32xf32>
    %292 = arith.addf %288, %291 : vector<8x32xf32>
    %cst_130 = arith.constant 0.000000e+00 : f32
    %293 = vector.broadcast %cst_130 : f32 to vector<8x32xf32>
    %294 = arith.maximumf %292, %293 : vector<8x32xf32>
    %c1_131 = arith.constant 1 : index
    %c0_132 = arith.constant 0 : index
    %c0_133 = arith.constant 0 : index
    %295 = vector.load %arg12[%c1_131, %c0_132, %c0_133] : memref<2x32x32xf32, #tpu.memory_space<vmem>>, vector<1x32x32xf32>
    %296 = vector.shape_cast %295 : vector<1x32x32xf32> to vector<32x32xf32>
    %cst_134 = arith.constant dense<0.000000e+00> : vector<8x32xf32>
    %297 = tpu.matmul %294, %296, %cst_134 {dimension_numbers = #tpu.dot_dimension_numbers<[1], [0], [0], [1], [0, 0, 1, 1], [], []>} : vector<8x32xf32>, vector<32x32xf32>, vector<8x32xf32> -> vector<8x32xf32>
    %c1_135 = arith.constant 1 : index
    %c0_136 = arith.constant 0 : index
    %c0_137 = arith.constant 0 : index
    %298 = vector.load %arg13[%c1_135, %c0_136, %c0_137] : memref<2x1x32xf32, #tpu.memory_space<vmem>>, vector<1x1x32xf32>
    %299 = vector.shape_cast %298 : vector<1x1x32xf32> to vector<1x32xf32>
    %300 = vector.broadcast %299 : vector<1x32xf32> to vector<8x32xf32>
    %301 = arith.addf %297, %300 : vector<8x32xf32>
    %302 = arith.addf %285, %301 : vector<8x32xf32>
    %c1_138 = arith.constant 1 : index
    %c0_139 = arith.constant 0 : index
    %c0_140 = arith.constant 0 : index
    %303 = vector.load %arg14[%c1_138, %c0_139, %c0_140] : memref<2x1x32xf32, #tpu.memory_space<vmem>>, vector<1x1x32xf32>
    %304 = vector.shape_cast %303 : vector<1x1x32xf32> to vector<1x32xf32>
    %c1_141 = arith.constant 1 : index
    %c0_142 = arith.constant 0 : index
    %c0_143 = arith.constant 0 : index
    %305 = vector.load %arg15[%c1_141, %c0_142, %c0_143] : memref<2x1x32xf32, #tpu.memory_space<vmem>>, vector<1x1x32xf32>
    %306 = vector.shape_cast %305 : vector<1x1x32xf32> to vector<1x32xf32>
    %cst_144 = arith.constant dense<0.000000e+00> : vector<8xf32>
    %307 = vector.multi_reduction <add>, %302, %cst_144 [1] : vector<8x32xf32> to vector<8xf32>
    %308 = vector.shape_cast %307 : vector<8xf32> to vector<8x1xf32>
    %cst_145 = arith.constant 3.200000e+01 : f32
    %309 = vector.broadcast %cst_145 : f32 to vector<8x1xf32>
    %310 = arith.divf %308, %309 : vector<8x1xf32>
    %311 = vector.broadcast %310 : vector<8x1xf32> to vector<8x32xf32>
    %312 = arith.subf %302, %311 : vector<8x32xf32>
    %313 = arith.mulf %312, %312 : vector<8x32xf32>
    %cst_146 = arith.constant dense<0.000000e+00> : vector<8xf32>
    %314 = vector.multi_reduction <add>, %313, %cst_146 [1] : vector<8x32xf32> to vector<8xf32>
    %315 = vector.shape_cast %314 : vector<8xf32> to vector<8x1xf32>
    %cst_147 = arith.constant 3.200000e+01 : f32
    %316 = vector.broadcast %cst_147 : f32 to vector<8x1xf32>
    %317 = arith.divf %315, %316 : vector<8x1xf32>
    %318 = vector.broadcast %310 : vector<8x1xf32> to vector<8x32xf32>
    %319 = arith.subf %302, %318 : vector<8x32xf32>
    %cst_148 = arith.constant 9.99999974E-6 : f32
    %320 = vector.broadcast %cst_148 : f32 to vector<8x1xf32>
    %321 = arith.addf %317, %320 : vector<8x1xf32>
    %322 = math.rsqrt %321 : vector<8x1xf32>
    %323 = vector.broadcast %322 : vector<8x1xf32> to vector<8x32xf32>
    %324 = arith.mulf %319, %323 : vector<8x32xf32>
    %325 = vector.broadcast %304 : vector<1x32xf32> to vector<8x32xf32>
    %326 = arith.mulf %324, %325 : vector<8x32xf32>
    %327 = vector.broadcast %306 : vector<1x32xf32> to vector<8x32xf32>
    %328 = arith.addf %326, %327 : vector<8x32xf32>
    %cst_149 = arith.constant dense<0.000000e+00> : vector<32xf32>
    %329 = vector.multi_reduction <add>, %328, %cst_149 [0] : vector<8x32xf32> to vector<32xf32>
    %330 = vector.shape_cast %329 : vector<32xf32> to vector<1x32xf32>
    %cst_150 = arith.constant 8.000000e+00 : f32
    %331 = vector.broadcast %cst_150 : f32 to vector<1x32xf32>
    %332 = arith.divf %330, %331 : vector<1x32xf32>
    %c0_151 = arith.constant 0 : index
    %c0_152 = arith.constant 0 : index
    %333 = vector.load %arg16[%c0_151, %c0_152] : memref<1x32xf32, #tpu.memory_space<vmem>>, vector<1x32xf32>
    %334 = arith.mulf %332, %333 : vector<1x32xf32>
    %cst_153 = arith.constant dense<0.000000e+00> : vector<1xf32>
    %335 = vector.multi_reduction <add>, %334, %cst_153 [1] : vector<1x32xf32> to vector<1xf32>
    %336 = vector.shape_cast %335 : vector<1xf32> to vector<1x1xf32>
    %c0_154 = arith.constant 0 : index
    %c0_155 = arith.constant 0 : index
    %337 = vector.load %arg17[%c0_154, %c0_155] : memref<1x1xf32, #tpu.memory_space<vmem>>, vector<1x1xf32>
    %338 = arith.addf %336, %337 : vector<1x1xf32>
    %c0_156 = arith.constant 0 : index
    %c0_157 = arith.constant 0 : index
    %c0_158 = arith.constant 0 : index
    %339 = vector.load %arg18[%c0_156, %c0_157, %c0_158] : memref<1x1x1xf32, #tpu.memory_space<vmem>>, vector<1x1x1xf32>
    %340 = vector.shape_cast %339 : vector<1x1x1xf32> to vector<1x1xf32>
    %341 = vector.shape_cast %338 : vector<1x1xf32> to vector<1x1x1xf32>
    tpu.vector_store %arg18[%c0_156, %c0_157, %c0_158], %341 {strides = array<i32>} : memref<1x1x1xf32, #tpu.memory_space<vmem>>, vector<1x1x1xf32>,
    return
  }
  func.func @transform_0(%arg0: i32) -> (i32, i32, i32) {
    %c0_i32 = arith.constant 0 : i32
    %c0_i32_0 = arith.constant 0 : i32
    %c0_i32_1 = arith.constant 0 : i32
    return %arg0, %c0_i32, %c0_i32_0 : i32, i32, i32
  }
  func.func @transform_1(%arg0: i32) -> (i32, i32) {
    %c0_i32 = arith.constant 0 : i32
    %c0_i32_0 = arith.constant 0 : i32
    %c0_i32_1 = arith.constant 0 : i32
    return %c0_i32, %c0_i32_0 : i32, i32
  }
  func.func @transform_2(%arg0: i32) -> (i32, i32) {
    %c0_i32 = arith.constant 0 : i32
    %c0_i32_0 = arith.constant 0 : i32
    %c0_i32_1 = arith.constant 0 : i32
    return %c0_i32, %c0_i32_0 : i32, i32
  }
  func.func @transform_3(%arg0: i32) -> (i32, i32, i32) {
    %c0_i32 = arith.constant 0 : i32
    %c0_i32_0 = arith.constant 0 : i32
    %c0_i32_1 = arith.constant 0 : i32
    %c0_i32_2 = arith.constant 0 : i32
    return %c0_i32, %c0_i32_0, %c0_i32_1 : i32, i32, i32
  }
  func.func @transform_4(%arg0: i32) -> (i32, i32, i32) {
    %c0_i32 = arith.constant 0 : i32
    %c0_i32_0 = arith.constant 0 : i32
    %c0_i32_1 = arith.constant 0 : i32
    %c0_i32_2 = arith.constant 0 : i32
    return %c0_i32, %c0_i32_0, %c0_i32_1 : i32, i32, i32
  }
  func.func @transform_5(%arg0: i32) -> (i32, i32, i32) {
    %c0_i32 = arith.constant 0 : i32
    %c0_i32_0 = arith.constant 0 : i32
    %c0_i32_1 = arith.constant 0 : i32
    %c0_i32_2 = arith.constant 0 : i32
    return %c0_i32, %c0_i32_0, %c0_i32_1 : i32, i32, i32
  }
  func.func @transform_6(%arg0: i32) -> (i32, i32, i32) {
    %c0_i32 = arith.constant 0 : i32
    %c0_i32_0 = arith.constant 0 : i32
    %c0_i32_1 = arith.constant 0 : i32
    %c0_i32_2 = arith.constant 0 : i32
    return %c0_i32, %c0_i32_0, %c0_i32_1 : i32, i32, i32
  }
  func.func @transform_7(%arg0: i32) -> (i32, i32, i32) {
    %c0_i32 = arith.constant 0 : i32
    %c0_i32_0 = arith.constant 0 : i32
    %c0_i32_1 = arith.constant 0 : i32
    %c0_i32_2 = arith.constant 0 : i32
    return %c0_i32, %c0_i32_0, %c0_i32_1 : i32, i32, i32
  }
  func.func @transform_8(%arg0: i32) -> (i32, i32, i32) {
    %c0_i32 = arith.constant 0 : i32
    %c0_i32_0 = arith.constant 0 : i32
    %c0_i32_1 = arith.constant 0 : i32
    %c0_i32_2 = arith.constant 0 : i32
    return %c0_i32, %c0_i32_0, %c0_i32_1 : i32, i32, i32
  }
  func.func @transform_9(%arg0: i32) -> (i32, i32, i32) {
    %c0_i32 = arith.constant 0 : i32
    %c0_i32_0 = arith.constant 0 : i32
    %c0_i32_1 = arith.constant 0 : i32
    %c0_i32_2 = arith.constant 0 : i32
    return %c0_i32, %c0_i32_0, %c0_i32_1 : i32, i32, i32
  }
  func.func @transform_10(%arg0: i32) -> (i32, i32, i32) {
    %c0_i32 = arith.constant 0 : i32
    %c0_i32_0 = arith.constant 0 : i32
    %c0_i32_1 = arith.constant 0 : i32
    %c0_i32_2 = arith.constant 0 : i32
    return %c0_i32, %c0_i32_0, %c0_i32_1 : i32, i32, i32
  }
  func.func @transform_11(%arg0: i32) -> (i32, i32, i32) {
    %c0_i32 = arith.constant 0 : i32
    %c0_i32_0 = arith.constant 0 : i32
    %c0_i32_1 = arith.constant 0 : i32
    %c0_i32_2 = arith.constant 0 : i32
    return %c0_i32, %c0_i32_0, %c0_i32_1 : i32, i32, i32
  }
  func.func @transform_12(%arg0: i32) -> (i32, i32, i32) {
    %c0_i32 = arith.constant 0 : i32
    %c0_i32_0 = arith.constant 0 : i32
    %c0_i32_1 = arith.constant 0 : i32
    %c0_i32_2 = arith.constant 0 : i32
    return %c0_i32, %c0_i32_0, %c0_i32_1 : i32, i32, i32
  }
  func.func @transform_13(%arg0: i32) -> (i32, i32, i32) {
    %c0_i32 = arith.constant 0 : i32
    %c0_i32_0 = arith.constant 0 : i32
    %c0_i32_1 = arith.constant 0 : i32
    %c0_i32_2 = arith.constant 0 : i32
    return %c0_i32, %c0_i32_0, %c0_i32_1 : i32, i32, i32
  }
  func.func @transform_14(%arg0: i32) -> (i32, i32, i32) {
    %c0_i32 = arith.constant 0 : i32
    %c0_i32_0 = arith.constant 0 : i32
    %c0_i32_1 = arith.constant 0 : i32
    %c0_i32_2 = arith.constant 0 : i32
    return %c0_i32, %c0_i32_0, %c0_i32_1 : i32, i32, i32
  }
  func.func @transform_15(%arg0: i32) -> (i32, i32) {
    %c0_i32 = arith.constant 0 : i32
    %c0_i32_0 = arith.constant 0 : i32
    %c0_i32_1 = arith.constant 0 : i32
    return %c0_i32, %c0_i32_0 : i32, i32
  }
  func.func @transform_16(%arg0: i32) -> (i32, i32) {
    %c0_i32 = arith.constant 0 : i32
    %c0_i32_0 = arith.constant 0 : i32
    %c0_i32_1 = arith.constant 0 : i32
    return %c0_i32, %c0_i32_0 : i32, i32
  }
  func.func @transform_17(%arg0: i32) -> (i32, i32, i32) {
    %c0_i32 = arith.constant 0 : i32
    %c0_i32_0 = arith.constant 0 : i32
    %c0_i32_1 = arith.constant 0 : i32
    return %arg0, %c0_i32, %c0_i32_0 : i32, i32, i32
  }
}

</mosaic_0001>

<llo_original>
// kernel: tpu_custom_call.1
$region0: #{tpu_custom_call.1}
  #allocation0 [shape = 'u32[]', space=smem, size = 0x4, offset = 0x4, fixed_abs, tag = 'smem constant byte address 0x4 - core index']
  #allocation1 [shape = 'u32[144,128]{1,0:T(1,128)}', space=vmem, size = 0x12000, scoped, tag = 'internal scratch']
  #allocation2 [shape = 'f32[1,1]{1,0:T(1,128)S(1)}', space=vmem, size = 0x200, scoped, tag = 'scoped memory for tpu_custom_call.1']
  %s0 = inlined_call_operand.hbm [shape: f32[2,8,8], index: 0, kind: input, shape index: {}]
  %s1 = inlined_call_operand.hbm [shape: f32[8,32], index: 1, kind: input, shape index: {}]
  %s2 = inlined_call_operand.vmem [shape: f32[1,32], index: 2, kind: input, shape index: {}]
  %s3 = inlined_call_operand.hbm [shape: f32[2,32,96], index: 3, kind: input, shape index: {}]
  %s4 = inlined_call_operand.vmem [shape: f32[2,1,96], index: 4, kind: input, shape index: {}]
  %s5 = inlined_call_operand.hbm [shape: f32[2,32,32], index: 5, kind: input, shape index: {}]
  %s6 = inlined_call_operand.vmem [shape: f32[2,1,32], index: 6, kind: input, shape index: {}]
  %s7 = inlined_call_operand.vmem [shape: f32[2,1,32], index: 7, kind: input, shape index: {}]
  %s8 = inlined_call_operand.vmem [shape: f32[2,1,32], index: 8, kind: input, shape index: {}]
  %s9 = inlined_call_operand.hbm [shape: f32[2,32,32], index: 9, kind: input, shape index: {}]
  %s10 = inlined_call_operand.vmem [shape: f32[2,1,32], index: 10, kind: input, shape index: {}]
  %s11 = inlined_call_operand.hbm [shape: f32[2,32,32], index: 11, kind: input, shape index: {}]
  %s12 = inlined_call_operand.vmem [shape: f32[2,1,32], index: 12, kind: input, shape index: {}]
  %s13 = inlined_call_operand.vmem [shape: f32[2,1,32], index: 13, kind: input, shape index: {}]
  %s14 = inlined_call_operand.vmem [shape: f32[2,1,32], index: 14, kind: input, shape index: {}]
  %s15 = inlined_call_operand.vmem [shape: f32[1,32], index: 15, kind: input, shape index: {}]
  %s16 = inlined_call_operand.<no memory space> [shape: f32[1,1], index: 16, kind: input, shape index: {}]
  %s17 = inlined_call_operand.vmem [shape: f32[2,1,1], index: 17, kind: output, shape index: {}]
  %s18 = sld [smem:[#allocation0]]
  $region125: #{tpu_custom_call.1} parent=0
    _
  %s20 = ssub.s32 1, %s18
  %s21 = scalar_select 0, %s20, %s18
  %v22 = vstv %s16
  %23 = vst [vmem:[#allocation2] sm:$0x1] %v22
  $region1: #{tpu_custom_call.1} parent=0
    #allocation3 [shape = 'u8[8192]{0}', space=vmem, size = 0x2000, scoped, tag = 'input window, operand 0']
    #allocation4 [shape = 's32[2]{0}', space=sflag, size = 0x8, scoped, tag = 'scoped memory for tpu_custom_call.1']
    #allocation5 [shape = 'u8[4096]{0}', space=vmem, size = 0x1000, scoped, tag = 'input window, operand 1, single buffered']
    #allocation6 [shape = 's32[1]{0}', space=sflag, size = 0x4, scoped, tag = 'scoped memory for tpu_custom_call.1']
    #allocation7 [shape = 'u8[32768]{0}', space=vmem, size = 0x8000, scoped, tag = 'input window, operand 3, single buffered']
    #allocation8 [shape = 'u8[32768]{0}', space=vmem, size = 0x8000, scoped, tag = 'input window, operand 5, single buffered']
    #allocation9 [shape = 's32[1]{0}', space=sflag, size = 0x4, scoped, tag = 'scoped memory for tpu_custom_call.1']
    #allocation10 [shape = 'u8[32768]{0}', space=vmem, size = 0x8000, scoped, tag = 'input window, operand 9, single buffered']
    #allocation11 [shape = 'u8[32768]{0}', space=vmem, size = 0x8000, scoped, tag = 'input window, operand 11, single buffered']
    #allocation12 [shape = 's32[1]{0}', space=sflag, size = 0x4, scoped, tag = 'scoped memory for tpu_custom_call.1']
    %24 = vsyncpa [#allocation4], 0
    %s25 = scalar_lea.sflag [#allocation4], 1
    %26 = vsyncpa %s25, 0
    %27 = vsyncpa [#allocation6], 0
    %28 = vsyncpa [#allocation9], 0
    %29 = vsyncpa [#allocation12], 0
    loop: start=0, step=1, limit=4
    $region2: #{tpu_custom_call.1} parent=1 // loop_pre_header
      _
    $region3: #{tpu_custom_call.1} parent=1 // loop_header
      %s31 = sphi 0, %s35
      %p32 = scmp.ge.s32.totalorder %s31, 4
      %s41 = sphi 0, %s43
      %s44 = sphi 0, %s41
      %s45 = sphi 0, %s44
      %s61 = sphi 0, %s45
      %s65 = sphi 0, %s65
      %s67 = sphi 0, %s65
      %s68 = sphi 0, %s67
      %s82 = sphi 0, %s68
      %s86 = sphi 0, %s86
      %s88 = sphi 0, %s86
      %s89 = sphi 0, %s88
      %s103 = sphi 0, %s89
      %s107 = sphi 0, %s107
      %s109 = sphi 0, %s107
      %s110 = sphi 0, %s109
      %s124 = sphi 0, %s110
      %s128 = sphi 0, %s128
      %s130 = sphi 0, %s128
      %s131 = sphi 0, %s130
      %s145 = sphi 0, %s131
      %s149 = sphi 0, %s149
      %s151 = sphi 0, %s149
      %s152 = sphi 0, %s151
      %s166 = sphi 0, %s152
      %s170 = sphi 0, %s170
      %s172 = sphi 0, %s170
      %s173 = sphi 0, %s172
      %s187 = sphi 0, %s173
      %s191 = sphi 0, %s191
      %s193 = sphi 0, %s191
      %s194 = sphi 0, %s193
      %s208 = sphi 0, %s194
      %s212 = sphi 0, %s212
      %s214 = sphi 0, %s212
      %s215 = sphi 0, %s214
      %s229 = sphi 0, %s215
      %s233 = sphi 0, %s233
      %s235 = sphi 0, %s233
      %s236 = sphi 0, %s235
      %s250 = sphi 0, %s236
      %s254 = sphi 0, %s254
      %s256 = sphi 0, %s254
      %s257 = sphi 0, %s256
      %s271 = sphi 0, %s257
      %s275 = sphi 0, %s275
      %s277 = sphi 0, %s275
      %s278 = sphi 0, %s277
      %s292 = sphi 0, %s278
      %s296 = sphi 0, %s296
      %s298 = sphi 0, %s296
      %s299 = sphi 0, %s298
      %s313 = sphi 0, %s299
      %s317 = sphi 0, %s317
      %s319 = sphi 0, %s317
      %s320 = sphi 0, %s319
      %s334 = sphi 0, %s320
      %s338 = sphi 0, %s338
      %s340 = sphi 0, %s338
      %s341 = sphi 0, %s340
      %s355 = sphi 0, %s341
      %s359 = sphi 0, %s359
      %s361 = sphi 0, %s359
      %s362 = sphi 0, %s361
      %s376 = sphi 0, %s362
      %s380 = sphi 0, %s380
      %s382 = sphi 0, %s380
      %s383 = sphi 0, %s382
      %s397 = sphi 0, %s383
      %s403 = sphi 0, %s405
      %s406 = sphi 0, %s403
      %s407 = sphi 0, %s406
      %s423 = sphi 0, %s407
    $region4: #{tpu_custom_call.1} parent=1 // loop_header_branch
      %34 = sbr.rel (%p32) target = $region8
    $region5: #{tpu_custom_call.1} parent=1 // loop_body
      %s36 = ssub.s32 %s31, 1
      %s37 = ssub.s32 %s31, 2
      %s38 = sadd.s32 %s31, 1
      %s39 = ssub.s32 %s31, %s38
      %p40 = scmp.eq.s32.totalorder %s39, 0
      %s42 = sadd.s32 %s41, 1
      %s43 = scalar_select %p40, %s41, %s42
      %p46 = pneg %p40
      %p47 = scmp.eq.s32.totalorder %s31, 1
      %p48 = por %p46, %p47
      %p49 = scmp.ne.s32.totalorder %s41, %s44
      %p50 = scmp.eq.s32.totalorder %s31, 0
      %p51 = por %p49, %p50
      %p52 = scmp.ne.s32.totalorder %s41, %s44
      %p53 = scmp.eq.s32.totalorder %s36, 1
      %p54 = por %p52, %p53
      %p55 = scmp.ne.s32.totalorder %s44, %s45
      %p56 = scmp.eq.s32.totalorder %s36, 0
      %p57 = por %p55, %p56
      %p58 = scmp.ne.s32.totalorder %s44, %s45
      %p59 = scmp.eq.s32.totalorder %s37, 1
      %p60 = por %p58, %p59
      %p62 = scmp.ne.s32.totalorder %s45, %s61
      %p63 = scmp.eq.s32.totalorder %s37, 0
      %p64 = por %p62, %p63
      %s66 = sadd.s32 %s65, 1
      %p69 = scmp.eq.s32.totalorder %s31, 1
      %p70 = scmp.ne.s32.totalorder %s65, %s67
      %p71 = scmp.eq.s32.totalorder %s31, 0
      %p72 = por %p70, %p71
      %p73 = scmp.ne.s32.totalorder %s65, %s67
      %p74 = scmp.eq.s32.totalorder %s36, 1
      %p75 = por %p73, %p74
      %p76 = scmp.ne.s32.totalorder %s67, %s68
      %p77 = scmp.eq.s32.totalorder %s36, 0
      %p78 = por %p76, %p77
      %p79 = scmp.ne.s32.totalorder %s67, %s68
      %p80 = scmp.eq.s32.totalorder %s37, 1
      %p81 = por %p79, %p80
      %p83 = scmp.ne.s32.totalorder %s68, %s82
      %p84 = scmp.eq.s32.totalorder %s37, 0
      %p85 = por %p83, %p84
      %s87 = sadd.s32 %s86, 1
      %p90 = scmp.eq.s32.totalorder %s31, 1
      %p91 = scmp.ne.s32.totalorder %s86, %s88
      %p92 = scmp.eq.s32.totalorder %s31, 0
      %p93 = por %p91, %p92
      %p94 = scmp.ne.s32.totalorder %s86, %s88
      %p95 = scmp.eq.s32.totalorder %s36, 1
      %p96 = por %p94, %p95
      %p97 = scmp.ne.s32.totalorder %s88, %s89
      %p98 = scmp.eq.s32.totalorder %s36, 0
      %p99 = por %p97, %p98
      %p100 = scmp.ne.s32.totalorder %s88, %s89
      %p101 = scmp.eq.s32.totalorder %s37, 1
      %p102 = por %p100, %p101
      %p104 = scmp.ne.s32.totalorder %s89, %s103
      %p105 = scmp.eq.s32.totalorder %s37, 0
      %p106 = por %p104, %p105
      %s108 = sadd.s32 %s107, 1
      %p111 = scmp.eq.s32.totalorder %s31, 1
      %p112 = scmp.ne.s32.totalorder %s107, %s109
      %p113 = scmp.eq.s32.totalorder %s31, 0
      %p114 = por %p112, %p113
      %p115 = scmp.ne.s32.totalorder %s107, %s109
      %p116 = scmp.eq.s32.totalorder %s36, 1
      %p117 = por %p115, %p116
      %p118 = scmp.ne.s32.totalorder %s109, %s110
      %p119 = scmp.eq.s32.totalorder %s36, 0
      %p120 = por %p118, %p119
      %p121 = scmp.ne.s32.totalorder %s109, %s110
      %p122 = scmp.eq.s32.totalorder %s37, 1
      %p123 = por %p121, %p122
      %p125 = scmp.ne.s32.totalorder %s110, %s124
      %p126 = scmp.eq.s32.totalorder %s37, 0
      %p127 = por %p125, %p126
      %s129 = sadd.s32 %s128, 1
      %p132 = scmp.eq.s32.totalorder %s31, 1
      %p133 = scmp.ne.s32.totalorder %s128, %s130
      %p134 = scmp.eq.s32.totalorder %s31, 0
      %p135 = por %p133, %p134
      %p136 = scmp.ne.s32.totalorder %s128, %s130
      %p137 = scmp.eq.s32.totalorder %s36, 1
      %p138 = por %p136, %p137
      %p139 = scmp.ne.s32.totalorder %s130, %s131
      %p140 = scmp.eq.s32.totalorder %s36, 0
      %p141 = por %p139, %p140
      %p142 = scmp.ne.s32.totalorder %s130, %s131
      %p143 = scmp.eq.s32.totalorder %s37, 1
      %p144 = por %p142, %p143
      %p146 = scmp.ne.s32.totalorder %s131, %s145
      %p147 = scmp.eq.s32.totalorder %s37, 0
      %p148 = por %p146, %p147
      %s150 = sadd.s32 %s149, 1
      %p153 = scmp.eq.s32.totalorder %s31, 1
      %p154 = scmp.ne.s32.totalorder %s149, %s151
      %p155 = scmp.eq.s32.totalorder %s31, 0
      %p156 = por %p154, %p155
      %p157 = scmp.ne.s32.totalorder %s149, %s151
      %p158 = scmp.eq.s32.totalorder %s36, 1
      %p159 = por %p157, %p158
      %p160 = scmp.ne.s32.totalorder %s151, %s152
      %p161 = scmp.eq.s32.totalorder %s36, 0
      %p162 = por %p160, %p161
      %p163 = scmp.ne.s32.totalorder %s151, %s152
      %p164 = scmp.eq.s32.totalorder %s37, 1
      %p165 = por %p163, %p164
      %p167 = scmp.ne.s32.totalorder %s152, %s166
      %p168 = scmp.eq.s32.totalorder %s37, 0
      %p169 = por %p167, %p168
      %s171 = sadd.s32 %s170, 1
      %p174 = scmp.eq.s32.totalorder %s31, 1
      %p175 = scmp.ne.s32.totalorder %s170, %s172
      %p176 = scmp.eq.s32.totalorder %s31, 0
      %p177 = por %p175, %p176
      %p178 = scmp.ne.s32.totalorder %s170, %s172
      %p179 = scmp.eq.s32.totalorder %s36, 1
      %p180 = por %p178, %p179
      %p181 = scmp.ne.s32.totalorder %s172, %s173
      %p182 = scmp.eq.s32.totalorder %s36, 0
      %p183 = por %p181, %p182
      %p184 = scmp.ne.s32.totalorder %s172, %s173
      %p185 = scmp.eq.s32.totalorder %s37, 1
      %p186 = por %p184, %p185
      %p188 = scmp.ne.s32.totalorder %s173, %s187
      %p189 = scmp.eq.s32.totalorder %s37, 0
      %p190 = por %p188, %p189
      %s192 = sadd.s32 %s191, 1
      %p195 = scmp.eq.s32.totalorder %s31, 1
      %p196 = scmp.ne.s32.totalorder %s191, %s193
      %p197 = scmp.eq.s32.totalorder %s31, 0
      %p198 = por %p196, %p197
      %p199 = scmp.ne.s32.totalorder %s191, %s193
      %p200 = scmp.eq.s32.totalorder %s36, 1
      %p201 = por %p199, %p200
      %p202 = scmp.ne.s32.totalorder %s193, %s194
      %p203 = scmp.eq.s32.totalorder %s36, 0
      %p204 = por %p202, %p203
      %p205 = scmp.ne.s32.totalorder %s193, %s194
      %p206 = scmp.eq.s32.totalorder %s37, 1
      %p207 = por %p205, %p206
      %p209 = scmp.ne.s32.totalorder %s194, %s208
      %p210 = scmp.eq.s32.totalorder %s37, 0
      %p211 = por %p209, %p210
      %s213 = sadd.s32 %s212, 1
      %p216 = scmp.eq.s32.totalorder %s31, 1
      %p217 = scmp.ne.s32.totalorder %s212, %s214
      %p218 = scmp.eq.s32.totalorder %s31, 0
      %p219 = por %p217, %p218
      %p220 = scmp.ne.s32.totalorder %s212, %s214
      %p221 = scmp.eq.s32.totalorder %s36, 1
      %p222 = por %p220, %p221
      %p223 = scmp.ne.s32.totalorder %s214, %s215
      %p224 = scmp.eq.s32.totalorder %s36, 0
      %p225 = por %p223, %p224
      %p226 = scmp.ne.s32.totalorder %s214, %s215
      %p227 = scmp.eq.s32.totalorder %s37, 1
      %p228 = por %p226, %p227
      %p230 = scmp.ne.s32.totalorder %s215, %s229
      %p231 = scmp.eq.s32.totalorder %s37, 0
      %p232 = por %p230, %p231
      %s234 = sadd.s32 %s233, 1
      %p237 = scmp.eq.s32.totalorder %s31, 1
      %p238 = scmp.ne.s32.totalorder %s233, %s235
      %p239 = scmp.eq.s32.totalorder %s31, 0
      %p240 = por %p238, %p239
      %p241 = scmp.ne.s32.totalorder %s233, %s235
      %p242 = scmp.eq.s32.totalorder %s36, 1
      %p243 = por %p241, %p242
      %p244 = scmp.ne.s32.totalorder %s235, %s236
      %p245 = scmp.eq.s32.totalorder %s36, 0
      %p246 = por %p244, %p245
      %p247 = scmp.ne.s32.totalorder %s235, %s236
      %p248 = scmp.eq.s32.totalorder %s37, 1
      %p249 = por %p247, %p248
      %p251 = scmp.ne.s32.totalorder %s236, %s250
      %p252 = scmp.eq.s32.totalorder %s37, 0
      %p253 = por %p251, %p252
      %s255 = sadd.s32 %s254, 1
      %p258 = scmp.eq.s32.totalorder %s31, 1
      %p259 = scmp.ne.s32.totalorder %s254, %s256
      %p260 = scmp.eq.s32.totalorder %s31, 0
      %p261 = por %p259, %p260
      %p262 = scmp.ne.s32.totalorder %s254, %s256
      %p263 = scmp.eq.s32.totalorder %s36, 1
      %p264 = por %p262, %p263
      %p265 = scmp.ne.s32.totalorder %s256, %s257
      %p266 = scmp.eq.s32.totalorder %s36, 0
      %p267 = por %p265, %p266
      %p268 = scmp.ne.s32.totalorder %s256, %s257
      %p269 = scmp.eq.s32.totalorder %s37, 1
      %p270 = por %p268, %p269
      %p272 = scmp.ne.s32.totalorder %s257, %s271
      %p273 = scmp.eq.s32.totalorder %s37, 0
      %p274 = por %p272, %p273
      %s276 = sadd.s32 %s275, 1
      %p279 = scmp.eq.s32.totalorder %s31, 1
      %p280 = scmp.ne.s32.totalorder %s275, %s277
      %p281 = scmp.eq.s32.totalorder %s31, 0
      %p282 = por %p280, %p281
      %p283 = scmp.ne.s32.totalorder %s275, %s277
      %p284 = scmp.eq.s32.totalorder %s36, 1
      %p285 = por %p283, %p284
      %p286 = scmp.ne.s32.totalorder %s277, %s278
      %p287 = scmp.eq.s32.totalorder %s36, 0
      %p288 = por %p286, %p287
      %p289 = scmp.ne.s32.totalorder %s277, %s278
      %p290 = scmp.eq.s32.totalorder %s37, 1
      %p291 = por %p289, %p290
      %p293 = scmp.ne.s32.totalorder %s278, %s292
      %p294 = scmp.eq.s32.totalorder %s37, 0
      %p295 = por %p293, %p294
      %s297 = sadd.s32 %s296, 1
      %p300 = scmp.eq.s32.totalorder %s31, 1
      %p301 = scmp.ne.s32.totalorder %s296, %s298
      %p302 = scmp.eq.s32.totalorder %s31, 0
      %p303 = por %p301, %p302
      %p304 = scmp.ne.s32.totalorder %s296, %s298
      %p305 = scmp.eq.s32.totalorder %s36, 1
      %p306 = por %p304, %p305
      %p307 = scmp.ne.s32.totalorder %s298, %s299
      %p308 = scmp.eq.s32.totalorder %s36, 0
      %p309 = por %p307, %p308
      %p310 = scmp.ne.s32.totalorder %s298, %s299
      %p311 = scmp.eq.s32.totalorder %s37, 1
      %p312 = por %p310, %p311
      %p314 = scmp.ne.s32.totalorder %s299, %s313
      %p315 = scmp.eq.s32.totalorder %s37, 0
      %p316 = por %p314, %p315
      %s318 = sadd.s32 %s317, 1
      %p321 = scmp.eq.s32.totalorder %s31, 1
      %p322 = scmp.ne.s32.totalorder %s317, %s319
      %p323 = scmp.eq.s32.totalorder %s31, 0
      %p324 = por %p322, %p323
      %p325 = scmp.ne.s32.totalorder %s317, %s319
      %p326 = scmp.eq.s32.totalorder %s36, 1
      %p327 = por %p325, %p326
      %p328 = scmp.ne.s32.totalorder %s319, %s320
      %p329 = scmp.eq.s32.totalorder %s36, 0
      %p330 = por %p328, %p329
      %p331 = scmp.ne.s32.totalorder %s319, %s320
      %p332 = scmp.eq.s32.totalorder %s37, 1
      %p333 = por %p331, %p332
      %p335 = scmp.ne.s32.totalorder %s320, %s334
      %p336 = scmp.eq.s32.totalorder %s37, 0
      %p337 = por %p335, %p336
      %s339 = sadd.s32 %s338, 1
      %p342 = scmp.eq.s32.totalorder %s31, 1
      %p343 = scmp.ne.s32.totalorder %s338, %s340
      %p344 = scmp.eq.s32.totalorder %s31, 0
      %p345 = por %p343, %p344
      %p346 = scmp.ne.s32.totalorder %s338, %s340
      %p347 = scmp.eq.s32.totalorder %s36, 1
      %p348 = por %p346, %p347
      %p349 = scmp.ne.s32.totalorder %s340, %s341
      %p350 = scmp.eq.s32.totalorder %s36, 0
      %p351 = por %p349, %p350
      %p352 = scmp.ne.s32.totalorder %s340, %s341
      %p353 = scmp.eq.s32.totalorder %s37, 1
      %p354 = por %p352, %p353
      %p356 = scmp.ne.s32.totalorder %s341, %s355
      %p357 = scmp.eq.s32.totalorder %s37, 0
      %p358 = por %p356, %p357
      %s360 = sadd.s32 %s359, 1
      %p363 = scmp.eq.s32.totalorder %s31, 1
      %p364 = scmp.ne.s32.totalorder %s359, %s361
      %p365 = scmp.eq.s32.totalorder %s31, 0
      %p366 = por %p364, %p365
      %p367 = scmp.ne.s32.totalorder %s359, %s361
      %p368 = scmp.eq.s32.totalorder %s36, 1
      %p369 = por %p367, %p368
      %p370 = scmp.ne.s32.totalorder %s361, %s362
      %p371 = scmp.eq.s32.totalorder %s36, 0
      %p372 = por %p370, %p371
      %p373 = scmp.ne.s32.totalorder %s361, %s362
      %p374 = scmp.eq.s32.totalorder %s37, 1
      %p375 = por %p373, %p374
      %p377 = scmp.ne.s32.totalorder %s362, %s376
      %p378 = scmp.eq.s32.totalorder %s37, 0
      %p379 = por %p377, %p378
      %s381 = sadd.s32 %s380, 1
      %p384 = scmp.eq.s32.totalorder %s31, 1
      %p385 = scmp.ne.s32.totalorder %s380, %s382
      %p386 = scmp.eq.s32.totalorder %s31, 0
      %p387 = por %p385, %p386
      %p388 = scmp.ne.s32.totalorder %s380, %s382
      %p389 = scmp.eq.s32.totalorder %s36, 1
      %p390 = por %p388, %p389
      %p391 = scmp.ne.s32.totalorder %s382, %s383
      %p392 = scmp.eq.s32.totalorder %s36, 0
      %p393 = por %p391, %p392
      %p394 = scmp.ne.s32.totalorder %s382, %s383
      %p395 = scmp.eq.s32.totalorder %s37, 1
      %p396 = por %p394, %p395
      %p398 = scmp.ne.s32.totalorder %s383, %s397
      %p399 = scmp.eq.s32.totalorder %s37, 0
      %p400 = por %p398, %p399
      %s401 = ssub.s32 %s31, %s38
      %p402 = scmp.eq.s32.totalorder %s401, 0
      %s404 = sadd.s32 %s403, 1
      %s405 = scalar_select %p402, %s403, %s404
      %p408 = pneg %p402
      %p409 = scmp.eq.s32.totalorder %s31, 1
      %p410 = por %p408, %p409
      %p411 = scmp.ne.s32.totalorder %s403, %s406
      %p412 = scmp.eq.s32.totalorder %s31, 0
      %p413 = por %p411, %p412
      %p414 = scmp.ne.s32.totalorder %s403, %s406
      %p415 = scmp.eq.s32.totalorder %s36, 1
      %p416 = por %p414, %p415
      %p417 = scmp.ne.s32.totalorder %s406, %s407
      %p418 = scmp.eq.s32.totalorder %s36, 0
      %p419 = por %p417, %p418
      %p420 = scmp.ne.s32.totalorder %s406, %s407
      %p421 = scmp.eq.s32.totalorder %s37, 1
      %p422 = por %p420, %p421
      %p424 = scmp.ne.s32.totalorder %s407, %s423
      %p425 = scmp.eq.s32.totalorder %s37, 0
      %p426 = por %p424, %p425
      %p427 = scmp.le.s32.totalorder 1, %s31
      %p428 = scmp.lt.s32.totalorder %s31, 3
      %p429 = pnand %p427, %p428
      %p430 = pneg %p429
      // Predicated region
      $region9: #{tpu_custom_call.1} parent=5 // pred_check
        _
      $region10: #{tpu_custom_call.1} parent=5 // pred_check_branch
        %432 = sbr.rel (%p429) target = $region12
      $region11: #{tpu_custom_call.1} parent=5 // pred_region
        %s433 = ssub.s32 %s31, 1
        // Predicated region
        $region13: #{tpu_custom_call.1} parent=11 // pred_check
          %p434 = pneg %p78
        $region14: #{tpu_custom_call.1} parent=11 // pred_check_branch
          %436 = sbr.rel (%p434) target = $region16
        $region15: #{tpu_custom_call.1} parent=11 // pred_region
          %s438 = ssub.s32 128, 128
          %439 = vsyncadd [#allocation6], %s438
          %s441 = sshll.u32 [#allocation5], 4
          %s442 = int_to_ptr.vmem [resolvable:$true] %s441
          %444 = dma.hbm_to_vmem [thread:$0]  %s1, 128, %s442, [#allocation6]
        $region16: #{tpu_custom_call.1} parent=11 // pred_fallthru
          _
        // Predicated region
        $region17: #{tpu_custom_call.1} parent=11 // pred_check
          %p445 = pneg %p99
        $region18: #{tpu_custom_call.1} parent=11 // pred_check_branch
          %447 = sbr.rel (%p445) target = $region20
        $region19: #{tpu_custom_call.1} parent=11 // pred_region
          _
        $region20: #{tpu_custom_call.1} parent=11 // pred_fallthru
          _
        // Predicated region
        $region21: #{tpu_custom_call.1} parent=11 // pred_check
          %p448 = pneg %p120
        $region22: #{tpu_custom_call.1} parent=11 // pred_check_branch
          %450 = sbr.rel (%p448) target = $region24
        $region23: #{tpu_custom_call.1} parent=11 // pred_region
          %s452 = ssub.s32 1024, 1024
          %453 = vsyncadd [#allocation6], %s452
          %s454 = sshll.u32 [#allocation7], 4
          %s455 = int_to_ptr.vmem [resolvable:$true] %s454
          %460 = dma.hbm_to_vmem [thread:$0]  %s3, 1024, %s455, [#allocation6], 128, 128, 8
        $region24: #{tpu_custom_call.1} parent=11 // pred_fallthru
          _
        // Predicated region
        $region25: #{tpu_custom_call.1} parent=11 // pred_check
          %p461 = pneg %p141
        $region26: #{tpu_custom_call.1} parent=11 // pred_check_branch
          %463 = sbr.rel (%p461) target = $region28
        $region27: #{tpu_custom_call.1} parent=11 // pred_region
          _
        $region28: #{tpu_custom_call.1} parent=11 // pred_fallthru
          _
        // Predicated region
        $region29: #{tpu_custom_call.1} parent=11 // pred_check
          %p464 = pneg %p162
        $region30: #{tpu_custom_call.1} parent=11 // pred_check_branch
          %466 = sbr.rel (%p464) target = $region32
        $region31: #{tpu_custom_call.1} parent=11 // pred_region
          %s468 = ssub.s32 1024, 1024
          %469 = vsyncadd [#allocation9], %s468
          %s470 = sshll.u32 [#allocation8], 4
          %s471 = int_to_ptr.vmem [resolvable:$true] %s470
          %476 = dma.hbm_to_vmem [thread:$0]  %s5, 1024, %s471, [#allocation9], 128, 128, 8
        $region32: #{tpu_custom_call.1} parent=11 // pred_fallthru
          _
        // Predicated region
        $region33: #{tpu_custom_call.1} parent=11 // pred_check
          %p477 = pneg %p183
        $region34: #{tpu_custom_call.1} parent=11 // pred_check_branch
          %479 = sbr.rel (%p477) target = $region36
        $region35: #{tpu_custom_call.1} parent=11 // pred_region
          _
        $region36: #{tpu_custom_call.1} parent=11 // pred_fallthru
          _
        // Predicated region
        $region37: #{tpu_custom_call.1} parent=11 // pred_check
          %p480 = pneg %p204
        $region38: #{tpu_custom_call.1} parent=11 // pred_check_branch
          %482 = sbr.rel (%p480) target = $region40
        $region39: #{tpu_custom_call.1} parent=11 // pred_region
          _
        $region40: #{tpu_custom_call.1} parent=11 // pred_fallthru
          _
        // Predicated region
        $region41: #{tpu_custom_call.1} parent=11 // pred_check
          %p483 = pneg %p225
        $region42: #{tpu_custom_call.1} parent=11 // pred_check_branch
          %485 = sbr.rel (%p483) target = $region44
        $region43: #{tpu_custom_call.1} parent=11 // pred_region
          _
        $region44: #{tpu_custom_call.1} parent=11 // pred_fallthru
          _
        // Predicated region
        $region45: #{tpu_custom_call.1} parent=11 // pred_check
          %p486 = pneg %p246
        $region46: #{tpu_custom_call.1} parent=11 // pred_check_branch
          %488 = sbr.rel (%p486) target = $region48
        $region47: #{tpu_custom_call.1} parent=11 // pred_region
          %s490 = ssub.s32 1024, 1024
          %491 = vsyncadd [#allocation9], %s490
          %s492 = sshll.u32 [#allocation10], 4
          %s493 = int_to_ptr.vmem [resolvable:$true] %s492
          %498 = dma.hbm_to_vmem [thread:$0]  %s9, 1024, %s493, [#allocation9], 128, 128, 8
        $region48: #{tpu_custom_call.1} parent=11 // pred_fallthru
          _
        // Predicated region
        $region49: #{tpu_custom_call.1} parent=11 // pred_check
          %p499 = pneg %p267
        $region50: #{tpu_custom_call.1} parent=11 // pred_check_branch
          %501 = sbr.rel (%p499) target = $region52
        $region51: #{tpu_custom_call.1} parent=11 // pred_region
          _
        $region52: #{tpu_custom_call.1} parent=11 // pred_fallthru
          _
        // Predicated region
        $region53: #{tpu_custom_call.1} parent=11 // pred_check
          %p502 = pneg %p288
        $region54: #{tpu_custom_call.1} parent=11 // pred_check_branch
          %504 = sbr.rel (%p502) target = $region56
        $region55: #{tpu_custom_call.1} parent=11 // pred_region
          %s506 = ssub.s32 1024, 1024
          %507 = vsyncadd [#allocation12], %s506
          %s508 = sshll.u32 [#allocation11], 4
          %s509 = int_to_ptr.vmem [resolvable:$true] %s508
          %514 = dma.hbm_to_vmem [thread:$0]  %s11, 1024, %s509, [#allocation12], 128, 128, 8
        $region56: #{tpu_custom_call.1} parent=11 // pred_fallthru
          _
        // Predicated region
        $region57: #{tpu_custom_call.1} parent=11 // pred_check
          %p515 = pneg %p309
        $region58: #{tpu_custom_call.1} parent=11 // pred_check_branch
          %517 = sbr.rel (%p515) target = $region60
        $region59: #{tpu_custom_call.1} parent=11 // pred_region
          _
        $region60: #{tpu_custom_call.1} parent=11 // pred_fallthru
          _
        // Predicated region
        $region61: #{tpu_custom_call.1} parent=11 // pred_check
          %p518 = pneg %p330
        $region62: #{tpu_custom_call.1} parent=11 // pred_check_branch
          %520 = sbr.rel (%p518) target = $region64
        $region63: #{tpu_custom_call.1} parent=11 // pred_region
          _
        $region64: #{tpu_custom_call.1} parent=11 // pred_fallthru
          _
        // Predicated region
        $region65: #{tpu_custom_call.1} parent=11 // pred_check
          %p521 = pneg %p351
        $region66: #{tpu_custom_call.1} parent=11 // pred_check_branch
          %523 = sbr.rel (%p521) target = $region68
        $region67: #{tpu_custom_call.1} parent=11 // pred_region
          _
        $region68: #{tpu_custom_call.1} parent=11 // pred_fallthru
          _
        // Predicated region
        $region69: #{tpu_custom_call.1} parent=11 // pred_check
          %p524 = pneg %p372
        $region70: #{tpu_custom_call.1} parent=11 // pred_check_branch
          %526 = sbr.rel (%p524) target = $region72
        $region71: #{tpu_custom_call.1} parent=11 // pred_region
          _
        $region72: #{tpu_custom_call.1} parent=11 // pred_fallthru
          _
        // Predicated region
        $region73: #{tpu_custom_call.1} parent=11 // pred_check
          %p527 = pneg %p393
        $region74: #{tpu_custom_call.1} parent=11 // pred_check_branch
          %529 = sbr.rel (%p527) target = $region76
        $region75: #{tpu_custom_call.1} parent=11 // pred_region
          _
        $region76: #{tpu_custom_call.1} parent=11 // pred_fallthru
          _
      $region12: #{tpu_custom_call.1} parent=5 // pred_fallthru
        _
      %p530 = scmp.lt.s32.totalorder %s31, 2
      // Predicated region
      $region77: #{tpu_custom_call.1} parent=5 // pred_check
        %p531 = pneg %p530
      $region78: #{tpu_custom_call.1} parent=5 // pred_check_branch
        %533 = sbr.rel (%p531) target = $region80
      $region79: #{tpu_custom_call.1} parent=5 // pred_region
        // Predicated region
        $region81: #{tpu_custom_call.1} parent=79 // pred_check
          %p534 = pneg %p51
        $region82: #{tpu_custom_call.1} parent=79 // pred_check_branch
          %536 = sbr.rel (%p534) target = $region84
        $region83: #{tpu_custom_call.1} parent=79 // pred_region
          %s537 = sand.u32 %s41, 1
          %s538 = scalar_lea.sflag [#allocation4], %s537
          %s539 = sand.u32 %s41, 1
          %s540 = smul.addr %s539, 8
          %s541 = scalar_lea.vmem [#allocation3], %s540
          %s543 = ssub.s32 128, 128
          %544 = vsyncadd %s538, %s543
          %s545 = smul.addr %s31, 128
          %s546 = scalar_lea.hbm %s0, %s545
          %s548 = sshll.u32 %s541, 4
          %s549 = int_to_ptr.vmem [resolvable:$true] %s548
          %551 = dma.hbm_to_vmem [thread:$0]  %s546, 128, %s549, %s538
        $region84: #{tpu_custom_call.1} parent=79 // pred_fallthru
          _
      $region80: #{tpu_custom_call.1} parent=5 // pred_fallthru
        _
      %p552 = scmp.le.s32.totalorder 1, %s31
      %p553 = scmp.lt.s32.totalorder %s31, 3
      %p554 = pnand %p552, %p553
      %p555 = pneg %p554
      // Predicated region
      $region85: #{tpu_custom_call.1} parent=5 // pred_check
        _
      $region86: #{tpu_custom_call.1} parent=5 // pred_check_branch
        %557 = sbr.rel (%p554) target = $region88
      $region87: #{tpu_custom_call.1} parent=5 // pred_region
        %s558 = ssub.s32 %s31, 1
        %s559 = sand.u32 %s44, 1
        %s560 = scalar_lea.sflag [#allocation4], %s559
        %s561 = sand.u32 %s44, 1
        %s562 = smul.addr %s561, 8
        %s563 = scalar_lea.vmem [#allocation3], %s562
        // Predicated region
        $region89: #{tpu_custom_call.1} parent=87 // pred_check
          %p564 = pneg %p57
        $region90: #{tpu_custom_call.1} parent=87 // pred_check_branch
          %566 = sbr.rel (%p564) target = $region92
        $region91: #{tpu_custom_call.1} parent=87 // pred_region
          %567 = dma.done %s560, 128
        $region92: #{tpu_custom_call.1} parent=87 // pred_fallthru
          _
        // Predicated region
        $region93: #{tpu_custom_call.1} parent=87 // pred_check
          %p568 = pneg %p78
        $region94: #{tpu_custom_call.1} parent=87 // pred_check_branch
          %570 = sbr.rel (%p568) target = $region96
        $region95: #{tpu_custom_call.1} parent=87 // pred_region
          %571 = dma.done [#allocation6], 128
        $region96: #{tpu_custom_call.1} parent=87 // pred_fallthru
          _
        // Predicated region
        $region97: #{tpu_custom_call.1} parent=87 // pred_check
          %p572 = pneg %p120
        $region98: #{tpu_custom_call.1} parent=87 // pred_check_branch
          %574 = sbr.rel (%p572) target = $region100
        $region99: #{tpu_custom_call.1} parent=87 // pred_region
          %575 = dma.done [#allocation6], 1024
        $region100: #{tpu_custom_call.1} parent=87 // pred_fallthru
          _
        // Predicated region
        $region101: #{tpu_custom_call.1} parent=87 // pred_check
          %p576 = pneg %p162
        $region102: #{tpu_custom_call.1} parent=87 // pred_check_branch
          %578 = sbr.rel (%p576) target = $region104
        $region103: #{tpu_custom_call.1} parent=87 // pred_region
          %579 = dma.done [#allocation9], 1024
        $region104: #{tpu_custom_call.1} parent=87 // pred_fallthru
          _
        // Predicated region
        $region105: #{tpu_custom_call.1} parent=87 // pred_check
          %p580 = pneg %p246
        $region106: #{tpu_custom_call.1} parent=87 // pred_check_branch
          %582 = sbr.rel (%p580) target = $region108
        $region107: #{tpu_custom_call.1} parent=87 // pred_region
          %583 = dma.done [#allocation9], 1024
        $region108: #{tpu_custom_call.1} parent=87 // pred_fallthru
          _
        // Predicated region
        $region109: #{tpu_custom_call.1} parent=87 // pred_check
          %p584 = pneg %p288
        $region110: #{tpu_custom_call.1} parent=87 // pred_check_branch
          %586 = sbr.rel (%p584) target = $region112
        $region111: #{tpu_custom_call.1} parent=87 // pred_region
          %587 = dma.done [#allocation12], 1024
        $region112: #{tpu_custom_call.1} parent=87 // pred_fallthru
          _
        %s588 = sand.u32 %s44, 1
        %s589 = scalar_lea.sflag [#allocation4], %s588
        %s590 = sand.u32 %s44, 1
        %s591 = smul.addr %s590, 8
        %s592 = scalar_lea.vmem [#allocation3], %s591
        %p593 = pneg %p57
        %p594 = pneg %p54
        %p595 = pneg %p78
        %p596 = pneg %p75
        %p597 = pneg %p99
        %p598 = pneg %p96
        %p599 = pneg %p120
        %p600 = pneg %p117
        %p601 = pneg %p141
        %p602 = pneg %p138
        %p603 = pneg %p162
        %p604 = pneg %p159
        %p605 = pneg %p183
        %p606 = pneg %p180
        %p607 = pneg %p204
        %p608 = pneg %p201
        %p609 = pneg %p225
        %p610 = pneg %p222
        %p611 = pneg %p246
        %p612 = pneg %p243
        %p613 = pneg %p267
        %p614 = pneg %p264
        %p615 = pneg %p288
        %p616 = pneg %p285
        %p617 = pneg %p309
        %p618 = pneg %p306
        %p619 = pneg %p330
        %p620 = pneg %p327
        %p621 = pneg %p351
        %p622 = pneg %p348
        %p623 = pneg %p372
        %p624 = pneg %p369
        %p625 = pneg %p393
        %p626 = pneg %p390
        %p627 = pneg %p419
        %p628 = pneg %p416
        %p629 = scmp.lt.s32.totalorder %s36, 1
        %s630 = scalar_select %p629, %s36, 1
        %s631 = scalar_lea.vmem %s17, %s630
        %p632 = scmp.lt.s32.totalorder %s36, 1
        %s633 = scalar_select %p632, %s36, 1
        %s634 = scalar_lea.vmem %s17, %s633
        %v635 = vld [vmem:[%s563] sm:$0xff]
        %v636 = vld [vmem:[#allocation5] sm:$0xff]
        %v637 = vld [vmem:[%s2] sm:$0x1]
        %v639 = vlaneseq
        %v640 = vshrl.u32 %v639, 7
        %v641 = vsub.s32 0, %v640
        %v642 = vrot.slane %v637, %v641
        %vm644 = vcmask 64512
        %v646 = vsel %vm644, %v635, 0
        %648 = vmatprep.subr.mxu0 0.0
        %649 = vmatpush1.msra.mxu0 %v636
        %650 = vmatprep.subr.mxu0 0.0
        %651 = vmatpush1.msra.mxu0 0.0
        %652 = vmatprep.subr.mxu0 0.0
        %653 = vmatpush1.msra.mxu0 0.0
        %654 = vmatprep.subr.mxu0 0.0
        %655 = vmatpush1.msra.mxu0 0.0
        %656 = vmatprep.subr.mxu0 0.0
        %657 = vmatpush1.msra.mxu0 0.0
        %658 = vmatprep.subr.mxu0 0.0
        %659 = vmatpush1.msra.mxu0 0.0
        %660 = vmatprep.subr.mxu0 0.0
        %661 = vmatpush1.msra.mxu0 0.0
        %662 = vmatprep.subr.mxu0 0.0
        %663 = vmatpush1.msra.mxu0 0.0
        %664 = vmatprep.subr.mxu0 0.0
        %665 = vmatpush1.msra.mxu0 0.0
        %666 = vmatprep.subr.mxu0 0.0
        %667 = vmatpush1.msra.mxu0 0.0
        %668 = vmatprep.subr.mxu0 0.0
        %669 = vmatpush1.msra.mxu0 0.0
        %670 = vmatprep.subr.mxu0 0.0
        %671 = vmatpush1.msra.mxu0 0.0
        %672 = vmatprep.subr.mxu0 0.0
        %673 = vmatpush1.msra.mxu0 0.0
        %674 = vmatprep.subr.mxu0 0.0
        %675 = vmatpush1.msra.mxu0 0.0
        %676 = vmatprep.subr.mxu0 0.0
        %677 = vmatpush1.msra.mxu0 0.0
        %678 = vmatprep.subr.mxu0 0.0
        %679 = vmatpush1.msra.mxu0 0.0
        %680 = vmatprep.subr.mxu0 0.0
        %681 = vmatpush1.msra.mxu0 0.0
        %682 = vmatprep.subr.mxu0 0.0
        %683 = vmatpush1.msra.mxu0 0.0
        %684 = vmatprep.subr.mxu0 0.0
        %685 = vmatpush1.msra.mxu0 0.0
        %686 = vmatprep.subr.mxu0 0.0
        %687 = vmatpush1.msra.mxu0 0.0
        %688 = vmatprep.subr.mxu0 0.0
        %689 = vmatpush1.msra.mxu0 0.0
        %690 = vmatprep.subr.mxu0 0.0
        %691 = vmatpush1.msra.mxu0 0.0
        %692 = vmatprep.subr.mxu0 0.0
        %693 = vmatpush1.msra.mxu0 0.0
        %694 = vmatprep.subr.mxu0 0.0
        %695 = vmatpush1.msra.mxu0 0.0
        %696 = vmatprep.subr.mxu0 0.0
        %697 = vmatpush1.msra.mxu0 0.0
        %698 = vmatprep.subr.mxu0 0.0
        %699 = vmatpush1.msra.mxu0 0.0
        %700 = vmatprep.subr.mxu0 0.0
        %701 = vmatpush1.msra.mxu0 0.0
        %702 = vmatprep.subr.mxu0 0.0
        %703 = vmatpush1.msra.mxu0 0.0
        %704 = vmatprep.subr.mxu0 0.0
        %705 = vmatpush1.msra.mxu0 0.0
        %706 = vmatprep.subr.mxu0 0.0
        %707 = vmatpush1.msra.mxu0 0.0
        %708 = vmatprep.subr.mxu0 0.0
        %709 = vmatpush1.msra.mxu0 0.0
        %710 = vmatprep.subr.mxu0 0.0
        %711 = vmatpush1.msra.mxu0 0.0
        %712 = vmatprep.mubr.f32.mxu0 0.0
        %713 = vmatmul.mubr.f32.gmra.mrb[0].mxu0 %v646
        %v714 = vpop.f32.mrb[0].mxu0
        %v715 = vadd.f32 %v642, %v714
        %v716 = vpop.f32.mrb[0].mxu0
        %717 = vdwg.mxu0
        %v718 = vld [vmem:[#allocation7] sm:$0xff]
        %v719 = vld [vmem:[#allocation7 + $0x8] sm:$0xff]
        %v720 = vld [vmem:[#allocation7 + $0x10] sm:$0xff]
        %v721 = vld [vmem:[#allocation7 + $0x18] sm:$0xff]
        %v722 = vld [vmem:[%s4] sm:$0x1]
        %v724 = vlaneseq
        %v725 = vshrl.u32 %v724, 7
        %v726 = vsub.s32 0, %v725
        %v727 = vrot.slane %v722, %v726
        %vm729 = vcmask 261120
        %v731 = vsel %vm729, %v715, 0
        %733 = vmatprep.subr.mxu0 0.0
        %734 = vmatpush1.msra.mxu0 %v718
        %735 = vmatprep.subr.mxu0 0.0
        %736 = vmatpush1.msra.mxu0 %v719
        %737 = vmatprep.subr.mxu0 0.0
        %738 = vmatpush1.msra.mxu0 %v720
        %739 = vmatprep.subr.mxu0 0.0
        %740 = vmatpush1.msra.mxu0 %v721
        %741 = vmatprep.subr.mxu0 0.0
        %742 = vmatpush1.msra.mxu0 0.0
        %743 = vmatprep.subr.mxu0 0.0
        %744 = vmatpush1.msra.mxu0 0.0
        %745 = vmatprep.subr.mxu0 0.0
        %746 = vmatpush1.msra.mxu0 0.0
        %747 = vmatprep.subr.mxu0 0.0
        %748 = vmatpush1.msra.mxu0 0.0
        %749 = vmatprep.subr.mxu0 0.0
        %750 = vmatpush1.msra.mxu0 0.0
        %751 = vmatprep.subr.mxu0 0.0
        %752 = vmatpush1.msra.mxu0 0.0
        %753 = vmatprep.subr.mxu0 0.0
        %754 = vmatpush1.msra.mxu0 0.0
        %755 = vmatprep.subr.mxu0 0.0
        %756 = vmatpush1.msra.mxu0 0.0
        %757 = vmatprep.subr.mxu0 0.0
        %758 = vmatpush1.msra.mxu0 0.0
        %759 = vmatprep.subr.mxu0 0.0
        %760 = vmatpush1.msra.mxu0 0.0
        %761 = vmatprep.subr.mxu0 0.0
        %762 = vmatpush1.msra.mxu0 0.0
        %763 = vmatprep.subr.mxu0 0.0
        %764 = vmatpush1.msra.mxu0 0.0
        %765 = vmatprep.subr.mxu0 0.0
        %766 = vmatpush1.msra.mxu0 0.0
        %767 = vmatprep.subr.mxu0 0.0
        %768 = vmatpush1.msra.mxu0 0.0
        %769 = vmatprep.subr.mxu0 0.0
        %770 = vmatpush1.msra.mxu0 0.0
        %771 = vmatprep.subr.mxu0 0.0
        %772 = vmatpush1.msra.mxu0 0.0
        %773 = vmatprep.subr.mxu0 0.0
        %774 = vmatpush1.msra.mxu0 0.0
        %775 = vmatprep.subr.mxu0 0.0
        %776 = vmatpush1.msra.mxu0 0.0
        %777 = vmatprep.subr.mxu0 0.0
        %778 = vmatpush1.msra.mxu0 0.0
        %779 = vmatprep.subr.mxu0 0.0
        %780 = vmatpush1.msra.mxu0 0.0
        %781 = vmatprep.subr.mxu0 0.0
        %782 = vmatpush1.msra.mxu0 0.0
        %783 = vmatprep.subr.mxu0 0.0
        %784 = vmatpush1.msra.mxu0 0.0
        %785 = vmatprep.subr.mxu0 0.0
        %786 = vmatpush1.msra.mxu0 0.0
        %787 = vmatprep.subr.mxu0 0.0
        %788 = vmatpush1.msra.mxu0 0.0
        %789 = vmatprep.subr.mxu0 0.0
        %790 = vmatpush1.msra.mxu0 0.0
        %791 = vmatprep.subr.mxu0 0.0
        %792 = vmatpush1.msra.mxu0 0.0
        %793 = vmatprep.subr.mxu0 0.0
        %794 = vmatpush1.msra.mxu0 0.0
        %795 = vmatprep.subr.mxu0 0.0
        %796 = vmatpush1.msra.mxu0 0.0
        %797 = vmatprep.mubr.f32.mxu0 0.0
        %798 = vmatmul.mubr.f32.gmra.mrb[0].mxu0 %v731
        %v799 = vpop.f32.mrb[0].mxu0
        %v800 = vadd.f32 %v727, %v799
        %v801 = vpop.f32.mrb[0].mxu0
        %802 = vdwg.mxu0
        %v803 = vmul.f32 %v800, 0.35355338
        %v804 = vld [vmem:[#allocation8] sm:$0xff]
        %v805 = vld [vmem:[#allocation8 + $0x8] sm:$0xff]
        %v806 = vld [vmem:[#allocation8 + $0x10] sm:$0xff]
        %v807 = vld [vmem:[#allocation8 + $0x18] sm:$0xff]
        %809 = vrot.lane.b32.xlu0 %v800, 96
        %v810 = vpop.permute.xlu0 %809
        %v812 = vsel %vm644, %v803, 0
        %v814 = vsel %vm644, %v810, 0
        %816 = vmatprep.subr.mxu0 0.0
        %817 = vmatpush1.xpose.msra.mxu0 %v814
        %818 = vmatprep.subr.mxu0 0.0
        %819 = vmatpush1.xpose.msra.mxu0 0.0
        %820 = vmatprep.subr.mxu0 0.0
        %821 = vmatpush1.xpose.msra.mxu0 0.0
        %822 = vmatprep.subr.mxu0 0.0
        %823 = vmatpush1.xpose.msra.mxu0 0.0
        %824 = vmatprep.subr.mxu0 0.0
        %825 = vmatpush1.xpose.msra.mxu0 0.0
        %826 = vmatprep.subr.mxu0 0.0
        %827 = vmatpush1.xpose.msra.mxu0 0.0
        %828 = vmatprep.subr.mxu0 0.0
        %829 = vmatpush1.xpose.msra.mxu0 0.0
        %830 = vmatprep.subr.mxu0 0.0
        %831 = vmatpush1.xpose.msra.mxu0 0.0
        %832 = vmatprep.subr.mxu0 0.0
        %833 = vmatpush1.xpose.msra.mxu0 0.0
        %834 = vmatprep.subr.mxu0 0.0
        %835 = vmatpush1.xpose.msra.mxu0 0.0
        %836 = vmatprep.subr.mxu0 0.0
        %837 = vmatpush1.xpose.msra.mxu0 0.0
        %838 = vmatprep.subr.mxu0 0.0
        %839 = vmatpush1.xpose.msra.mxu0 0.0
        %840 = vmatprep.subr.mxu0 0.0
        %841 = vmatpush1.xpose.msra.mxu0 0.0
        %842 = vmatprep.subr.mxu0 0.0
        %843 = vmatpush1.xpose.msra.mxu0 0.0
        %844 = vmatprep.subr.mxu0 0.0
        %845 = vmatpush1.xpose.msra.mxu0 0.0
        %846 = vmatprep.subr.mxu0 0.0
        %847 = vmatpush1.xpose.msra.mxu0 0.0
        %848 = vmatprep.subr.mxu0 0.0
        %849 = vmatpush1.xpose.msra.mxu0 0.0
        %850 = vmatprep.subr.mxu0 0.0
        %851 = vmatpush1.xpose.msra.mxu0 0.0
        %852 = vmatprep.subr.mxu0 0.0
        %853 = vmatpush1.xpose.msra.mxu0 0.0
        %854 = vmatprep.subr.mxu0 0.0
        %855 = vmatpush1.xpose.msra.mxu0 0.0
        %856 = vmatprep.subr.mxu0 0.0
        %857 = vmatpush1.xpose.msra.mxu0 0.0
        %858 = vmatprep.subr.mxu0 0.0
        %859 = vmatpush1.xpose.msra.mxu0 0.0
        %860 = vmatprep.subr.mxu0 0.0
        %861 = vmatpush1.xpose.msra.mxu0 0.0
        %862 = vmatprep.subr.mxu0 0.0
        %863 = vmatpush1.xpose.msra.mxu0 0.0
        %864 = vmatprep.subr.mxu0 0.0
        %865 = vmatpush1.xpose.msra.mxu0 0.0
        %866 = vmatprep.subr.mxu0 0.0
        %867 = vmatpush1.xpose.msra.mxu0 0.0
        %868 = vmatprep.subr.mxu0 0.0
        %869 = vmatpush1.xpose.msra.mxu0 0.0
        %870 = vmatprep.subr.mxu0 0.0
        %871 = vmatpush1.xpose.msra.mxu0 0.0
        %872 = vmatprep.subr.mxu0 0.0
        %873 = vmatpush1.xpose.msra.mxu0 0.0
        %874 = vmatprep.subr.mxu0 0.0
        %875 = vmatpush1.xpose.msra.mxu0 0.0
        %876 = vmatprep.subr.mxu0 0.0
        %877 = vmatpush1.xpose.msra.mxu0 0.0
        %878 = vmatprep.subr.mxu0 0.0
        %879 = vmatpush1.xpose.msra.mxu0 0.0
        %880 = vmatprep.mubr.f32.mxu0 0.0
        %881 = vmatmul.mubr.f32.gmra.mrb[0].mxu0 %v812
        %v882 = vpop.f32.mrb[0].mxu0
        %v883 = vadd.f32 0.0, %v882
        %v884 = vpop.f32.mrb[0].mxu0
        %885 = vdwg.mxu0
        %v886 = vsel %vm644, %v883, -inf
        %887 = vmax.xlane.f32.xlu0 %v886
        %v888 = vpop.xlane.xlu0 %887
        %v889 = vsub.f32 %v883, %v888
        %v890 = vmul.f32 %v889, 1.442695
        %v891 = vpow.pop %v890
        %v892 = vsel %vm644, %v891, 0.0
        %893 = vadd.xlane.f32.xlu0 %v892
        %v894 = vpop.xlane.xlu0 %893
        %v895 = vrcp.pop %v894
        %v896 = vmul.f32 %v891, %v895
        %897 = vrot.lane.b32.xlu0 %v800, 64
        %v898 = vpop.permute.xlu0 %897
        %v901 = vsel %vm644, %v896, 0
        %903 = vmatprep.subr.mxu0 0.0
        %904 = vmatpush1.msra.mxu0 %v898
        %905 = vmatprep.subr.mxu0 0.0
        %906 = vmatpush1.msra.mxu0 0.0
        %907 = vmatprep.subr.mxu0 0.0
        %908 = vmatpush1.msra.mxu0 0.0
        %909 = vmatprep.subr.mxu0 0.0
        %910 = vmatpush1.msra.mxu0 0.0
        %911 = vmatprep.subr.mxu0 0.0
        %912 = vmatpush1.msra.mxu0 0.0
        %913 = vmatprep.subr.mxu0 0.0
        %914 = vmatpush1.msra.mxu0 0.0
        %915 = vmatprep.subr.mxu0 0.0
        %916 = vmatpush1.msra.mxu0 0.0
        %917 = vmatprep.subr.mxu0 0.0
        %918 = vmatpush1.msra.mxu0 0.0
        %919 = vmatprep.subr.mxu0 0.0
        %920 = vmatpush1.msra.mxu0 0.0
        %921 = vmatprep.subr.mxu0 0.0
        %922 = vmatpush1.msra.mxu0 0.0
        %923 = vmatprep.subr.mxu0 0.0
        %924 = vmatpush1.msra.mxu0 0.0
        %925 = vmatprep.subr.mxu0 0.0
        %926 = vmatpush1.msra.mxu0 0.0
        %927 = vmatprep.subr.mxu0 0.0
        %928 = vmatpush1.msra.mxu0 0.0
        %929 = vmatprep.subr.mxu0 0.0
        %930 = vmatpush1.msra.mxu0 0.0
        %931 = vmatprep.subr.mxu0 0.0
        %932 = vmatpush1.msra.mxu0 0.0
        %933 = vmatprep.subr.mxu0 0.0
        %934 = vmatpush1.msra.mxu0 0.0
        %935 = vmatprep.subr.mxu0 0.0
        %936 = vmatpush1.msra.mxu0 0.0
        %937 = vmatprep.subr.mxu0 0.0
        %938 = vmatpush1.msra.mxu0 0.0
        %939 = vmatprep.subr.mxu0 0.0
        %940 = vmatpush1.msra.mxu0 0.0
        %941 = vmatprep.subr.mxu0 0.0
        %942 = vmatpush1.msra.mxu0 0.0
        %943 = vmatprep.subr.mxu0 0.0
        %944 = vmatpush1.msra.mxu0 0.0
        %945 = vmatprep.subr.mxu0 0.0
        %946 = vmatpush1.msra.mxu0 0.0
        %947 = vmatprep.subr.mxu0 0.0
        %948 = vmatpush1.msra.mxu0 0.0
        %949 = vmatprep.subr.mxu0 0.0
        %950 = vmatpush1.msra.mxu0 0.0
        %951 = vmatprep.subr.mxu0 0.0
        %952 = vmatpush1.msra.mxu0 0.0
        %953 = vmatprep.subr.mxu0 0.0
        %954 = vmatpush1.msra.mxu0 0.0
        %955 = vmatprep.subr.mxu0 0.0
        %956 = vmatpush1.msra.mxu0 0.0
        %957 = vmatprep.subr.mxu0 0.0
        %958 = vmatpush1.msra.mxu0 0.0
        %959 = vmatprep.subr.mxu0 0.0
        %960 = vmatpush1.msra.mxu0 0.0
        %961 = vmatprep.subr.mxu0 0.0
        %962 = vmatpush1.msra.mxu0 0.0
        %963 = vmatprep.subr.mxu0 0.0
        %964 = vmatpush1.msra.mxu0 0.0
        %965 = vmatprep.subr.mxu0 0.0
        %966 = vmatpush1.msra.mxu0 0.0
        %967 = vmatprep.mubr.f32.mxu0 0.0
        %968 = vmatmul.mubr.f32.gmra.mrb[0].mxu0 %v901
        %v969 = vpop.f32.mrb[0].mxu0
        %v970 = vadd.f32 0.0, %v969
        %v971 = vpop.f32.mrb[0].mxu0
        %972 = vdwg.mxu0
        %973 = vrot.lane.b32.xlu0 %v803, 120
        %v974 = vpop.permute.xlu0 %973
        %975 = vrot.lane.b32.xlu0 %v800, 88
        %v976 = vpop.permute.xlu0 %975
        %v977 = vsel %vm644, %v974, 0
        %v979 = vsel %vm644, %v976, 0
        %981 = vmatprep.subr.mxu0 0.0
        %982 = vmatpush1.xpose.msra.mxu0 %v979
        %983 = vmatprep.subr.mxu0 0.0
        %984 = vmatpush1.xpose.msra.mxu0 0.0
        %985 = vmatprep.subr.mxu0 0.0
        %986 = vmatpush1.xpose.msra.mxu0 0.0
        %987 = vmatprep.subr.mxu0 0.0
        %988 = vmatpush1.xpose.msra.mxu0 0.0
        %989 = vmatprep.subr.mxu0 0.0
        %990 = vmatpush1.xpose.msra.mxu0 0.0
        %991 = vmatprep.subr.mxu0 0.0
        %992 = vmatpush1.xpose.msra.mxu0 0.0
        %993 = vmatprep.subr.mxu0 0.0
        %994 = vmatpush1.xpose.msra.mxu0 0.0
        %995 = vmatprep.subr.mxu0 0.0
        %996 = vmatpush1.xpose.msra.mxu0 0.0
        %997 = vmatprep.subr.mxu0 0.0
        %998 = vmatpush1.xpose.msra.mxu0 0.0
        %999 = vmatprep.subr.mxu0 0.0
        %1000 = vmatpush1.xpose.msra.mxu0 0.0
        %1001 = vmatprep.subr.mxu0 0.0
        %1002 = vmatpush1.xpose.msra.mxu0 0.0
        %1003 = vmatprep.subr.mxu0 0.0
        %1004 = vmatpush1.xpose.msra.mxu0 0.0
        %1005 = vmatprep.subr.mxu0 0.0
        %1006 = vmatpush1.xpose.msra.mxu0 0.0
        %1007 = vmatprep.subr.mxu0 0.0
        %1008 = vmatpush1.xpose.msra.mxu0 0.0
        %1009 = vmatprep.subr.mxu0 0.0
        %1010 = vmatpush1.xpose.msra.mxu0 0.0
        %1011 = vmatprep.subr.mxu0 0.0
        %1012 = vmatpush1.xpose.msra.mxu0 0.0
        %1013 = vmatprep.subr.mxu0 0.0
        %1014 = vmatpush1.xpose.msra.mxu0 0.0
        %1015 = vmatprep.subr.mxu0 0.0
        %1016 = vmatpush1.xpose.msra.mxu0 0.0
        %1017 = vmatprep.subr.mxu0 0.0
        %1018 = vmatpush1.xpose.msra.mxu0 0.0
        %1019 = vmatprep.subr.mxu0 0.0
        %1020 = vmatpush1.xpose.msra.mxu0 0.0
        %1021 = vmatprep.subr.mxu0 0.0
        %1022 = vmatpush1.xpose.msra.mxu0 0.0
        %1023 = vmatprep.subr.mxu0 0.0
        %1024 = vmatpush1.xpose.msra.mxu0 0.0
        %1025 = vmatprep.subr.mxu0 0.0
        %1026 = vmatpush1.xpose.msra.mxu0 0.0
        %1027 = vmatprep.subr.mxu0 0.0
        %1028 = vmatpush1.xpose.msra.mxu0 0.0
        %1029 = vmatprep.subr.mxu0 0.0
        %1030 = vmatpush1.xpose.msra.mxu0 0.0
        %1031 = vmatprep.subr.mxu0 0.0
        %1032 = vmatpush1.xpose.msra.mxu0 0.0
        %1033 = vmatprep.subr.mxu0 0.0
        %1034 = vmatpush1.xpose.msra.mxu0 0.0
        %1035 = vmatprep.subr.mxu0 0.0
        %1036 = vmatpush1.xpose.msra.mxu0 0.0
        %1037 = vmatprep.subr.mxu0 0.0
        %1038 = vmatpush1.xpose.msra.mxu0 0.0
        %1039 = vmatprep.subr.mxu0 0.0
        %1040 = vmatpush1.xpose.msra.mxu0 0.0
        %1041 = vmatprep.subr.mxu0 0.0
        %1042 = vmatpush1.xpose.msra.mxu0 0.0
        %1043 = vmatprep.subr.mxu0 0.0
        %1044 = vmatpush1.xpose.msra.mxu0 0.0
        %1045 = vmatprep.mubr.f32.mxu0 0.0
        %1046 = vmatmul.mubr.f32.gmra.mrb[0].mxu0 %v977
        %v1047 = vpop.f32.mrb[0].mxu0
        %v1048 = vadd.f32 0.0, %v1047
        %v1049 = vpop.f32.mrb[0].mxu0
        %1050 = vdwg.mxu0
        %v1051 = vsel %vm644, %v1048, -inf
        %1052 = vmax.xlane.f32.xlu0 %v1051
        %v1053 = vpop.xlane.xlu0 %1052
        %v1054 = vsub.f32 %v1048, %v1053
        %v1055 = vmul.f32 %v1054, 1.442695
        %v1056 = vpow.pop %v1055
        %v1057 = vsel %vm644, %v1056, 0.0
        %1058 = vadd.xlane.f32.xlu0 %v1057
        %v1059 = vpop.xlane.xlu0 %1058
        %v1060 = vrcp.pop %v1059
        %v1061 = vmul.f32 %v1056, %v1060
        %1062 = vrot.lane.b32.xlu0 %v800, 56
        %v1063 = vpop.permute.xlu0 %1062
        %v1066 = vsel %vm644, %v1061, 0
        %1068 = vmatprep.subr.mxu0 0.0
        %1069 = vmatpush1.msra.mxu0 %v1063
        %1070 = vmatprep.subr.mxu0 0.0
        %1071 = vmatpush1.msra.mxu0 0.0
        %1072 = vmatprep.subr.mxu0 0.0
        %1073 = vmatpush1.msra.mxu0 0.0
        %1074 = vmatprep.subr.mxu0 0.0
        %1075 = vmatpush1.msra.mxu0 0.0
        %1076 = vmatprep.subr.mxu0 0.0
        %1077 = vmatpush1.msra.mxu0 0.0
        %1078 = vmatprep.subr.mxu0 0.0
        %1079 = vmatpush1.msra.mxu0 0.0
        %1080 = vmatprep.subr.mxu0 0.0
        %1081 = vmatpush1.msra.mxu0 0.0
        %1082 = vmatprep.subr.mxu0 0.0
        %1083 = vmatpush1.msra.mxu0 0.0
        %1084 = vmatprep.subr.mxu0 0.0
        %1085 = vmatpush1.msra.mxu0 0.0
        %1086 = vmatprep.subr.mxu0 0.0
        %1087 = vmatpush1.msra.mxu0 0.0
        %1088 = vmatprep.subr.mxu0 0.0
        %1089 = vmatpush1.msra.mxu0 0.0
        %1090 = vmatprep.subr.mxu0 0.0
        %1091 = vmatpush1.msra.mxu0 0.0
        %1092 = vmatprep.subr.mxu0 0.0
        %1093 = vmatpush1.msra.mxu0 0.0
        %1094 = vmatprep.subr.mxu0 0.0
        %1095 = vmatpush1.msra.mxu0 0.0
        %1096 = vmatprep.subr.mxu0 0.0
        %1097 = vmatpush1.msra.mxu0 0.0
        %1098 = vmatprep.subr.mxu0 0.0
        %1099 = vmatpush1.msra.mxu0 0.0
        %1100 = vmatprep.subr.mxu0 0.0
        %1101 = vmatpush1.msra.mxu0 0.0
        %1102 = vmatprep.subr.mxu0 0.0
        %1103 = vmatpush1.msra.mxu0 0.0
        %1104 = vmatprep.subr.mxu0 0.0
        %1105 = vmatpush1.msra.mxu0 0.0
        %1106 = vmatprep.subr.mxu0 0.0
        %1107 = vmatpush1.msra.mxu0 0.0
        %1108 = vmatprep.subr.mxu0 0.0
        %1109 = vmatpush1.msra.mxu0 0.0
        %1110 = vmatprep.subr.mxu0 0.0
        %1111 = vmatpush1.msra.mxu0 0.0
        %1112 = vmatprep.subr.mxu0 0.0
        %1113 = vmatpush1.msra.mxu0 0.0
        %1114 = vmatprep.subr.mxu0 0.0
        %1115 = vmatpush1.msra.mxu0 0.0
        %1116 = vmatprep.subr.mxu0 0.0
        %1117 = vmatpush1.msra.mxu0 0.0
        %1118 = vmatprep.subr.mxu0 0.0
        %1119 = vmatpush1.msra.mxu0 0.0
        %1120 = vmatprep.subr.mxu0 0.0
        %1121 = vmatpush1.msra.mxu0 0.0
        %1122 = vmatprep.subr.mxu0 0.0
        %1123 = vmatpush1.msra.mxu0 0.0
        %1124 = vmatprep.subr.mxu0 0.0
        %1125 = vmatpush1.msra.mxu0 0.0
        %1126 = vmatprep.subr.mxu0 0.0
        %1127 = vmatpush1.msra.mxu0 0.0
        %1128 = vmatprep.subr.mxu0 0.0
        %1129 = vmatpush1.msra.mxu0 0.0
        %1130 = vmatprep.subr.mxu0 0.0
        %1131 = vmatpush1.msra.mxu0 0.0
        %1132 = vmatprep.mubr.f32.mxu0 0.0
        %1133 = vmatmul.mubr.f32.gmra.mrb[0].mxu0 %v1066
        %v1134 = vpop.f32.mrb[0].mxu0
        %v1135 = vadd.f32 0.0, %v1134
        %v1136 = vpop.f32.mrb[0].mxu0
        %1137 = vdwg.mxu0
        %v1139 = vsel %vm644, %v1135, 0
        %1141 = vmatprep.subr.mxu0 0.0
        %1142 = vmatpush1.msra.mxu0 %v805
        %1143 = vmatprep.subr.mxu0 0.0
        %1144 = vmatpush1.msra.mxu0 0.0
        %1145 = vmatprep.subr.mxu0 0.0
        %1146 = vmatpush1.msra.mxu0 0.0
        %1147 = vmatprep.subr.mxu0 0.0
        %1148 = vmatpush1.msra.mxu0 0.0
        %1149 = vmatprep.subr.mxu0 0.0
        %1150 = vmatpush1.msra.mxu0 0.0
        %1151 = vmatprep.subr.mxu0 0.0
        %1152 = vmatpush1.msra.mxu0 0.0
        %1153 = vmatprep.subr.mxu0 0.0
        %1154 = vmatpush1.msra.mxu0 0.0
        %1155 = vmatprep.subr.mxu0 0.0
        %1156 = vmatpush1.msra.mxu0 0.0
        %1157 = vmatprep.subr.mxu0 0.0
        %1158 = vmatpush1.msra.mxu0 0.0
        %1159 = vmatprep.subr.mxu0 0.0
        %1160 = vmatpush1.msra.mxu0 0.0
        %1161 = vmatprep.subr.mxu0 0.0
        %1162 = vmatpush1.msra.mxu0 0.0
        %1163 = vmatprep.subr.mxu0 0.0
        %1164 = vmatpush1.msra.mxu0 0.0
        %1165 = vmatprep.subr.mxu0 0.0
        %1166 = vmatpush1.msra.mxu0 0.0
        %1167 = vmatprep.subr.mxu0 0.0
        %1168 = vmatpush1.msra.mxu0 0.0
        %1169 = vmatprep.subr.mxu0 0.0
        %1170 = vmatpush1.msra.mxu0 0.0
        %1171 = vmatprep.subr.mxu0 0.0
        %1172 = vmatpush1.msra.mxu0 0.0
        %1173 = vmatprep.subr.mxu0 0.0
        %1174 = vmatpush1.msra.mxu0 0.0
        %1175 = vmatprep.subr.mxu0 0.0
        %1176 = vmatpush1.msra.mxu0 0.0
        %1177 = vmatprep.subr.mxu0 0.0
        %1178 = vmatpush1.msra.mxu0 0.0
        %1179 = vmatprep.subr.mxu0 0.0
        %1180 = vmatpush1.msra.mxu0 0.0
        %1181 = vmatprep.subr.mxu0 0.0
        %1182 = vmatpush1.msra.mxu0 0.0
        %1183 = vmatprep.subr.mxu0 0.0
        %1184 = vmatpush1.msra.mxu0 0.0
        %1185 = vmatprep.subr.mxu0 0.0
        %1186 = vmatpush1.msra.mxu0 0.0
        %1187 = vmatprep.subr.mxu0 0.0
        %1188 = vmatpush1.msra.mxu0 0.0
        %1189 = vmatprep.subr.mxu0 0.0
        %1190 = vmatpush1.msra.mxu0 0.0
        %1191 = vmatprep.subr.mxu0 0.0
        %1192 = vmatpush1.msra.mxu0 0.0
        %1193 = vmatprep.subr.mxu0 0.0
        %1194 = vmatpush1.msra.mxu0 0.0
        %1195 = vmatprep.subr.mxu0 0.0
        %1196 = vmatpush1.msra.mxu0 0.0
        %1197 = vmatprep.subr.mxu0 0.0
        %1198 = vmatpush1.msra.mxu0 0.0
        %1199 = vmatprep.subr.mxu0 0.0
        %1200 = vmatpush1.msra.mxu0 0.0
        %1201 = vmatprep.subr.mxu0 0.0
        %1202 = vmatpush1.msra.mxu0 0.0
        %1203 = vmatprep.subr.mxu0 0.0
        %1204 = vmatpush1.msra.mxu0 0.0
        %1205 = vmatprep.mubr.f32.mxu0 0.0
        %1206 = vmatmul.mubr.f32.gmra.mrb[0].mxu0 %v1139
        %v1207 = vpop.f32.mrb[0].mxu0
        %v1208 = vadd.f32 0.0, %v1207
        %v1209 = vpop.f32.mrb[0].mxu0
        %1210 = vdwg.mxu0
        %v1212 = vsel %vm644, %v970, 0
        %1214 = vmatprep.subr.mxu0 0.0
        %1215 = vmatpush1.msra.mxu0 %v804
        %1216 = vmatprep.subr.mxu0 0.0
        %1217 = vmatpush1.msra.mxu0 0.0
        %1218 = vmatprep.subr.mxu0 0.0
        %1219 = vmatpush1.msra.mxu0 0.0
        %1220 = vmatprep.subr.mxu0 0.0
        %1221 = vmatpush1.msra.mxu0 0.0
        %1222 = vmatprep.subr.mxu0 0.0
        %1223 = vmatpush1.msra.mxu0 0.0
        %1224 = vmatprep.subr.mxu0 0.0
        %1225 = vmatpush1.msra.mxu0 0.0
        %1226 = vmatprep.subr.mxu0 0.0
        %1227 = vmatpush1.msra.mxu0 0.0
        %1228 = vmatprep.subr.mxu0 0.0
        %1229 = vmatpush1.msra.mxu0 0.0
        %1230 = vmatprep.subr.mxu0 0.0
        %1231 = vmatpush1.msra.mxu0 0.0
        %1232 = vmatprep.subr.mxu0 0.0
        %1233 = vmatpush1.msra.mxu0 0.0
        %1234 = vmatprep.subr.mxu0 0.0
        %1235 = vmatpush1.msra.mxu0 0.0
        %1236 = vmatprep.subr.mxu0 0.0
        %1237 = vmatpush1.msra.mxu0 0.0
        %1238 = vmatprep.subr.mxu0 0.0
        %1239 = vmatpush1.msra.mxu0 0.0
        %1240 = vmatprep.subr.mxu0 0.0
        %1241 = vmatpush1.msra.mxu0 0.0
        %1242 = vmatprep.subr.mxu0 0.0
        %1243 = vmatpush1.msra.mxu0 0.0
        %1244 = vmatprep.subr.mxu0 0.0
        %1245 = vmatpush1.msra.mxu0 0.0
        %1246 = vmatprep.subr.mxu0 0.0
        %1247 = vmatpush1.msra.mxu0 0.0
        %1248 = vmatprep.subr.mxu0 0.0
        %1249 = vmatpush1.msra.mxu0 0.0
        %1250 = vmatprep.subr.mxu0 0.0
        %1251 = vmatpush1.msra.mxu0 0.0
        %1252 = vmatprep.subr.mxu0 0.0
        %1253 = vmatpush1.msra.mxu0 0.0
        %1254 = vmatprep.subr.mxu0 0.0
        %1255 = vmatpush1.msra.mxu0 0.0
        %1256 = vmatprep.subr.mxu0 0.0
        %1257 = vmatpush1.msra.mxu0 0.0
        %1258 = vmatprep.subr.mxu0 0.0
        %1259 = vmatpush1.msra.mxu0 0.0
        %1260 = vmatprep.subr.mxu0 0.0
        %1261 = vmatpush1.msra.mxu0 0.0
        %1262 = vmatprep.subr.mxu0 0.0
        %1263 = vmatpush1.msra.mxu0 0.0
        %1264 = vmatprep.subr.mxu0 0.0
        %1265 = vmatpush1.msra.mxu0 0.0
        %1266 = vmatprep.subr.mxu0 0.0
        %1267 = vmatpush1.msra.mxu0 0.0
        %1268 = vmatprep.subr.mxu0 0.0
        %1269 = vmatpush1.msra.mxu0 0.0
        %1270 = vmatprep.subr.mxu0 0.0
        %1271 = vmatpush1.msra.mxu0 0.0
        %1272 = vmatprep.subr.mxu0 0.0
        %1273 = vmatpush1.msra.mxu0 0.0
        %1274 = vmatprep.subr.mxu0 0.0
        %1275 = vmatpush1.msra.mxu0 0.0
        %1276 = vmatprep.subr.mxu0 0.0
        %1277 = vmatpush1.msra.mxu0 0.0
        %1278 = vmatprep.mubr.f32.mxu0 0.0
        %1279 = vmatmul.mubr.f32.gmra.mrb[0].mxu0 %v1212
        %v1280 = vpop.f32.mrb[0].mxu0
        %v1281 = vadd.f32 %v1208, %v1280
        %v1282 = vpop.f32.mrb[0].mxu0
        %1283 = vdwg.mxu0
        %1284 = vrot.lane.b32.xlu0 %v803, 112
        %v1285 = vpop.permute.xlu0 %1284
        %1286 = vrot.lane.b32.xlu0 %v800, 80
        %v1287 = vpop.permute.xlu0 %1286
        %v1288 = vsel %vm644, %v1285, 0
        %v1290 = vsel %vm644, %v1287, 0
        %1292 = vmatprep.subr.mxu0 0.0
        %1293 = vmatpush1.xpose.msra.mxu0 %v1290
        %1294 = vmatprep.subr.mxu0 0.0
        %1295 = vmatpush1.xpose.msra.mxu0 0.0
        %1296 = vmatprep.subr.mxu0 0.0
        %1297 = vmatpush1.xpose.msra.mxu0 0.0
        %1298 = vmatprep.subr.mxu0 0.0
        %1299 = vmatpush1.xpose.msra.mxu0 0.0
        %1300 = vmatprep.subr.mxu0 0.0
        %1301 = vmatpush1.xpose.msra.mxu0 0.0
        %1302 = vmatprep.subr.mxu0 0.0
        %1303 = vmatpush1.xpose.msra.mxu0 0.0
        %1304 = vmatprep.subr.mxu0 0.0
        %1305 = vmatpush1.xpose.msra.mxu0 0.0
        %1306 = vmatprep.subr.mxu0 0.0
        %1307 = vmatpush1.xpose.msra.mxu0 0.0
        %1308 = vmatprep.subr.mxu0 0.0
        %1309 = vmatpush1.xpose.msra.mxu0 0.0
        %1310 = vmatprep.subr.mxu0 0.0
        %1311 = vmatpush1.xpose.msra.mxu0 0.0
        %1312 = vmatprep.subr.mxu0 0.0
        %1313 = vmatpush1.xpose.msra.mxu0 0.0
        %1314 = vmatprep.subr.mxu0 0.0
        %1315 = vmatpush1.xpose.msra.mxu0 0.0
        %1316 = vmatprep.subr.mxu0 0.0
        %1317 = vmatpush1.xpose.msra.mxu0 0.0
        %1318 = vmatprep.subr.mxu0 0.0
        %1319 = vmatpush1.xpose.msra.mxu0 0.0
        %1320 = vmatprep.subr.mxu0 0.0
        %1321 = vmatpush1.xpose.msra.mxu0 0.0
        %1322 = vmatprep.subr.mxu0 0.0
        %1323 = vmatpush1.xpose.msra.mxu0 0.0
        %1324 = vmatprep.subr.mxu0 0.0
        %1325 = vmatpush1.xpose.msra.mxu0 0.0
        %1326 = vmatprep.subr.mxu0 0.0
        %1327 = vmatpush1.xpose.msra.mxu0 0.0
        %1328 = vmatprep.subr.mxu0 0.0
        %1329 = vmatpush1.xpose.msra.mxu0 0.0
        %1330 = vmatprep.subr.mxu0 0.0
        %1331 = vmatpush1.xpose.msra.mxu0 0.0
        %1332 = vmatprep.subr.mxu0 0.0
        %1333 = vmatpush1.xpose.msra.mxu0 0.0
        %1334 = vmatprep.subr.mxu0 0.0
        %1335 = vmatpush1.xpose.msra.mxu0 0.0
        %1336 = vmatprep.subr.mxu0 0.0
        %1337 = vmatpush1.xpose.msra.mxu0 0.0
        %1338 = vmatprep.subr.mxu0 0.0
        %1339 = vmatpush1.xpose.msra.mxu0 0.0
        %1340 = vmatprep.subr.mxu0 0.0
        %1341 = vmatpush1.xpose.msra.mxu0 0.0
        %1342 = vmatprep.subr.mxu0 0.0
        %1343 = vmatpush1.xpose.msra.mxu0 0.0
        %1344 = vmatprep.subr.mxu0 0.0
        %1345 = vmatpush1.xpose.msra.mxu0 0.0
        %1346 = vmatprep.subr.mxu0 0.0
        %1347 = vmatpush1.xpose.msra.mxu0 0.0
        %1348 = vmatprep.subr.mxu0 0.0
        %1349 = vmatpush1.xpose.msra.mxu0 0.0
        %1350 = vmatprep.subr.mxu0 0.0
        %1351 = vmatpush1.xpose.msra.mxu0 0.0
        %1352 = vmatprep.subr.mxu0 0.0
        %1353 = vmatpush1.xpose.msra.mxu0 0.0
        %1354 = vmatprep.subr.mxu0 0.0
        %1355 = vmatpush1.xpose.msra.mxu0 0.0
        %1356 = vmatprep.mubr.f32.mxu0 0.0
        %1357 = vmatmul.mubr.f32.gmra.mrb[0].mxu0 %v1288
        %v1358 = vpop.f32.mrb[0].mxu0
        %v1359 = vadd.f32 0.0, %v1358
        %v1360 = vpop.f32.mrb[0].mxu0
        %1361 = vdwg.mxu0
        %v1362 = vsel %vm644, %v1359, -inf
        %1363 = vmax.xlane.f32.xlu0 %v1362
        %v1364 = vpop.xlane.xlu0 %1363
        %v1365 = vsub.f32 %v1359, %v1364
        %v1366 = vmul.f32 %v1365, 1.442695
        %v1367 = vpow.pop %v1366
        %v1368 = vsel %vm644, %v1367, 0.0
        %1369 = vadd.xlane.f32.xlu0 %v1368
        %v1370 = vpop.xlane.xlu0 %1369
        %v1371 = vrcp.pop %v1370
        %v1372 = vmul.f32 %v1367, %v1371
        %1373 = vrot.lane.b32.xlu0 %v800, 48
        %v1374 = vpop.permute.xlu0 %1373
        %v1377 = vsel %vm644, %v1372, 0
        %1379 = vmatprep.subr.mxu0 0.0
        %1380 = vmatpush1.msra.mxu0 %v1374
        %1381 = vmatprep.subr.mxu0 0.0
        %1382 = vmatpush1.msra.mxu0 0.0
        %1383 = vmatprep.subr.mxu0 0.0
        %1384 = vmatpush1.msra.mxu0 0.0
        %1385 = vmatprep.subr.mxu0 0.0
        %1386 = vmatpush1.msra.mxu0 0.0
        %1387 = vmatprep.subr.mxu0 0.0
        %1388 = vmatpush1.msra.mxu0 0.0
        %1389 = vmatprep.subr.mxu0 0.0
        %1390 = vmatpush1.msra.mxu0 0.0
        %1391 = vmatprep.subr.mxu0 0.0
        %1392 = vmatpush1.msra.mxu0 0.0
        %1393 = vmatprep.subr.mxu0 0.0
        %1394 = vmatpush1.msra.mxu0 0.0
        %1395 = vmatprep.subr.mxu0 0.0
        %1396 = vmatpush1.msra.mxu0 0.0
        %1397 = vmatprep.subr.mxu0 0.0
        %1398 = vmatpush1.msra.mxu0 0.0
        %1399 = vmatprep.subr.mxu0 0.0
        %1400 = vmatpush1.msra.mxu0 0.0
        %1401 = vmatprep.subr.mxu0 0.0
        %1402 = vmatpush1.msra.mxu0 0.0
        %1403 = vmatprep.subr.mxu0 0.0
        %1404 = vmatpush1.msra.mxu0 0.0
        %1405 = vmatprep.subr.mxu0 0.0
        %1406 = vmatpush1.msra.mxu0 0.0
        %1407 = vmatprep.subr.mxu0 0.0
        %1408 = vmatpush1.msra.mxu0 0.0
        %1409 = vmatprep.subr.mxu0 0.0
        %1410 = vmatpush1.msra.mxu0 0.0
        %1411 = vmatprep.subr.mxu0 0.0
        %1412 = vmatpush1.msra.mxu0 0.0
        %1413 = vmatprep.subr.mxu0 0.0
        %1414 = vmatpush1.msra.mxu0 0.0
        %1415 = vmatprep.subr.mxu0 0.0
        %1416 = vmatpush1.msra.mxu0 0.0
        %1417 = vmatprep.subr.mxu0 0.0
        %1418 = vmatpush1.msra.mxu0 0.0
        %1419 = vmatprep.subr.mxu0 0.0
        %1420 = vmatpush1.msra.mxu0 0.0
        %1421 = vmatprep.subr.mxu0 0.0
        %1422 = vmatpush1.msra.mxu0 0.0
        %1423 = vmatprep.subr.mxu0 0.0
        %1424 = vmatpush1.msra.mxu0 0.0
        %1425 = vmatprep.subr.mxu0 0.0
        %1426 = vmatpush1.msra.mxu0 0.0
        %1427 = vmatprep.subr.mxu0 0.0
        %1428 = vmatpush1.msra.mxu0 0.0
        %1429 = vmatprep.subr.mxu0 0.0
        %1430 = vmatpush1.msra.mxu0 0.0
        %1431 = vmatprep.subr.mxu0 0.0
        %1432 = vmatpush1.msra.mxu0 0.0
        %1433 = vmatprep.subr.mxu0 0.0
        %1434 = vmatpush1.msra.mxu0 0.0
        %1435 = vmatprep.subr.mxu0 0.0
        %1436 = vmatpush1.msra.mxu0 0.0
        %1437 = vmatprep.subr.mxu0 0.0
        %1438 = vmatpush1.msra.mxu0 0.0
        %1439 = vmatprep.subr.mxu0 0.0
        %1440 = vmatpush1.msra.mxu0 0.0
        %1441 = vmatprep.subr.mxu0 0.0
        %1442 = vmatpush1.msra.mxu0 0.0
        %1443 = vmatprep.mubr.f32.mxu0 0.0
        %1444 = vmatmul.mubr.f32.gmra.mrb[0].mxu0 %v1377
        %v1445 = vpop.f32.mrb[0].mxu0
        %v1446 = vadd.f32 0.0, %v1445
        %v1447 = vpop.f32.mrb[0].mxu0
        %1448 = vdwg.mxu0
        %v1450 = vsel %vm644, %v1446, 0
        %1452 = vmatprep.subr.mxu0 0.0
        %1453 = vmatpush1.msra.mxu0 %v806
        %1454 = vmatprep.subr.mxu0 0.0
        %1455 = vmatpush1.msra.mxu0 0.0
        %1456 = vmatprep.subr.mxu0 0.0
        %1457 = vmatpush1.msra.mxu0 0.0
        %1458 = vmatprep.subr.mxu0 0.0
        %1459 = vmatpush1.msra.mxu0 0.0
        %1460 = vmatprep.subr.mxu0 0.0
        %1461 = vmatpush1.msra.mxu0 0.0
        %1462 = vmatprep.subr.mxu0 0.0
        %1463 = vmatpush1.msra.mxu0 0.0
        %1464 = vmatprep.subr.mxu0 0.0
        %1465 = vmatpush1.msra.mxu0 0.0
        %1466 = vmatprep.subr.mxu0 0.0
        %1467 = vmatpush1.msra.mxu0 0.0
        %1468 = vmatprep.subr.mxu0 0.0
        %1469 = vmatpush1.msra.mxu0 0.0
        %1470 = vmatprep.subr.mxu0 0.0
        %1471 = vmatpush1.msra.mxu0 0.0
        %1472 = vmatprep.subr.mxu0 0.0
        %1473 = vmatpush1.msra.mxu0 0.0
        %1474 = vmatprep.subr.mxu0 0.0
        %1475 = vmatpush1.msra.mxu0 0.0
        %1476 = vmatprep.subr.mxu0 0.0
        %1477 = vmatpush1.msra.mxu0 0.0
        %1478 = vmatprep.subr.mxu0 0.0
        %1479 = vmatpush1.msra.mxu0 0.0
        %1480 = vmatprep.subr.mxu0 0.0
        %1481 = vmatpush1.msra.mxu0 0.0
        %1482 = vmatprep.subr.mxu0 0.0
        %1483 = vmatpush1.msra.mxu0 0.0
        %1484 = vmatprep.subr.mxu0 0.0
        %1485 = vmatpush1.msra.mxu0 0.0
        %1486 = vmatprep.subr.mxu0 0.0
        %1487 = vmatpush1.msra.mxu0 0.0
        %1488 = vmatprep.subr.mxu0 0.0
        %1489 = vmatpush1.msra.mxu0 0.0
        %1490 = vmatprep.subr.mxu0 0.0
        %1491 = vmatpush1.msra.mxu0 0.0
        %1492 = vmatprep.subr.mxu0 0.0
        %1493 = vmatpush1.msra.mxu0 0.0
        %1494 = vmatprep.subr.mxu0 0.0
        %1495 = vmatpush1.msra.mxu0 0.0
        %1496 = vmatprep.subr.mxu0 0.0
        %1497 = vmatpush1.msra.mxu0 0.0
        %1498 = vmatprep.subr.mxu0 0.0
        %1499 = vmatpush1.msra.mxu0 0.0
        %1500 = vmatprep.subr.mxu0 0.0
        %1501 = vmatpush1.msra.mxu0 0.0
        %1502 = vmatprep.subr.mxu0 0.0
        %1503 = vmatpush1.msra.mxu0 0.0
        %1504 = vmatprep.subr.mxu0 0.0
        %1505 = vmatpush1.msra.mxu0 0.0
        %1506 = vmatprep.subr.mxu0 0.0
        %1507 = vmatpush1.msra.mxu0 0.0
        %1508 = vmatprep.subr.mxu0 0.0
        %1509 = vmatpush1.msra.mxu0 0.0
        %1510 = vmatprep.subr.mxu0 0.0
        %1511 = vmatpush1.msra.mxu0 0.0
        %1512 = vmatprep.subr.mxu0 0.0
        %1513 = vmatpush1.msra.mxu0 0.0
        %1514 = vmatprep.subr.mxu0 0.0
        %1515 = vmatpush1.msra.mxu0 0.0
        %1516 = vmatprep.mubr.f32.mxu0 0.0
        %1517 = vmatmul.mubr.f32.gmra.mrb[0].mxu0 %v1450
        %v1518 = vpop.f32.mrb[0].mxu0
        %v1519 = vadd.f32 0.0, %v1518
        %v1520 = vpop.f32.mrb[0].mxu0
        %1521 = vdwg.mxu0
        %v1522 = vadd.f32 %v1281, %v1519
        %1523 = vrot.lane.b32.xlu0 %v803, 104
        %v1524 = vpop.permute.xlu0 %1523
        %1525 = vrot.lane.b32.xlu0 %v800, 72
        %v1526 = vpop.permute.xlu0 %1525
        %v1527 = vsel %vm644, %v1524, 0
        %v1529 = vsel %vm644, %v1526, 0
        %1531 = vmatprep.subr.mxu0 0.0
        %1532 = vmatpush1.xpose.msra.mxu0 %v1529
        %1533 = vmatprep.subr.mxu0 0.0
        %1534 = vmatpush1.xpose.msra.mxu0 0.0
        %1535 = vmatprep.subr.mxu0 0.0
        %1536 = vmatpush1.xpose.msra.mxu0 0.0
        %1537 = vmatprep.subr.mxu0 0.0
        %1538 = vmatpush1.xpose.msra.mxu0 0.0
        %1539 = vmatprep.subr.mxu0 0.0
        %1540 = vmatpush1.xpose.msra.mxu0 0.0
        %1541 = vmatprep.subr.mxu0 0.0
        %1542 = vmatpush1.xpose.msra.mxu0 0.0
        %1543 = vmatprep.subr.mxu0 0.0
        %1544 = vmatpush1.xpose.msra.mxu0 0.0
        %1545 = vmatprep.subr.mxu0 0.0
        %1546 = vmatpush1.xpose.msra.mxu0 0.0
        %1547 = vmatprep.subr.mxu0 0.0
        %1548 = vmatpush1.xpose.msra.mxu0 0.0
        %1549 = vmatprep.subr.mxu0 0.0
        %1550 = vmatpush1.xpose.msra.mxu0 0.0
        %1551 = vmatprep.subr.mxu0 0.0
        %1552 = vmatpush1.xpose.msra.mxu0 0.0
        %1553 = vmatprep.subr.mxu0 0.0
        %1554 = vmatpush1.xpose.msra.mxu0 0.0
        %1555 = vmatprep.subr.mxu0 0.0
        %1556 = vmatpush1.xpose.msra.mxu0 0.0
        %1557 = vmatprep.subr.mxu0 0.0
        %1558 = vmatpush1.xpose.msra.mxu0 0.0
        %1559 = vmatprep.subr.mxu0 0.0
        %1560 = vmatpush1.xpose.msra.mxu0 0.0
        %1561 = vmatprep.subr.mxu0 0.0
        %1562 = vmatpush1.xpose.msra.mxu0 0.0
        %1563 = vmatprep.subr.mxu0 0.0
        %1564 = vmatpush1.xpose.msra.mxu0 0.0
        %1565 = vmatprep.subr.mxu0 0.0
        %1566 = vmatpush1.xpose.msra.mxu0 0.0
        %1567 = vmatprep.subr.mxu0 0.0
        %1568 = vmatpush1.xpose.msra.mxu0 0.0
        %1569 = vmatprep.subr.mxu0 0.0
        %1570 = vmatpush1.xpose.msra.mxu0 0.0
        %1571 = vmatprep.subr.mxu0 0.0
        %1572 = vmatpush1.xpose.msra.mxu0 0.0
        %1573 = vmatprep.subr.mxu0 0.0
        %1574 = vmatpush1.xpose.msra.mxu0 0.0
        %1575 = vmatprep.subr.mxu0 0.0
        %1576 = vmatpush1.xpose.msra.mxu0 0.0
        %1577 = vmatprep.subr.mxu0 0.0
        %1578 = vmatpush1.xpose.msra.mxu0 0.0
        %1579 = vmatprep.subr.mxu0 0.0
        %1580 = vmatpush1.xpose.msra.mxu0 0.0
        %1581 = vmatprep.subr.mxu0 0.0
        %1582 = vmatpush1.xpose.msra.mxu0 0.0
        %1583 = vmatprep.subr.mxu0 0.0
        %1584 = vmatpush1.xpose.msra.mxu0 0.0
        %1585 = vmatprep.subr.mxu0 0.0
        %1586 = vmatpush1.xpose.msra.mxu0 0.0
        %1587 = vmatprep.subr.mxu0 0.0
        %1588 = vmatpush1.xpose.msra.mxu0 0.0
        %1589 = vmatprep.subr.mxu0 0.0
        %1590 = vmatpush1.xpose.msra.mxu0 0.0
        %1591 = vmatprep.subr.mxu0 0.0
        %1592 = vmatpush1.xpose.msra.mxu0 0.0
        %1593 = vmatprep.subr.mxu0 0.0
        %1594 = vmatpush1.xpose.msra.mxu0 0.0
        %1595 = vmatprep.mubr.f32.mxu0 0.0
        %1596 = vmatmul.mubr.f32.gmra.mrb[0].mxu0 %v1527
        %v1597 = vpop.f32.mrb[0].mxu0
        %v1598 = vadd.f32 0.0, %v1597
        %v1599 = vpop.f32.mrb[0].mxu0
        %1600 = vdwg.mxu0
        %v1601 = vsel %vm644, %v1598, -inf
        %1602 = vmax.xlane.f32.xlu0 %v1601
        %v1603 = vpop.xlane.xlu0 %1602
        %v1604 = vsub.f32 %v1598, %v1603
        %v1605 = vmul.f32 %v1604, 1.442695
        %v1606 = vpow.pop %v1605
        %v1607 = vsel %vm644, %v1606, 0.0
        %1608 = vadd.xlane.f32.xlu0 %v1607
        %v1609 = vpop.xlane.xlu0 %1608
        %v1610 = vrcp.pop %v1609
        %v1611 = vmul.f32 %v1606, %v1610
        %1612 = vrot.lane.b32.xlu0 %v800, 40
        %v1613 = vpop.permute.xlu0 %1612
        %v1616 = vsel %vm644, %v1611, 0
        %1618 = vmatprep.subr.mxu0 0.0
        %1619 = vmatpush1.msra.mxu0 %v1613
        %1620 = vmatprep.subr.mxu0 0.0
        %1621 = vmatpush1.msra.mxu0 0.0
        %1622 = vmatprep.subr.mxu0 0.0
        %1623 = vmatpush1.msra.mxu0 0.0
        %1624 = vmatprep.subr.mxu0 0.0
        %1625 = vmatpush1.msra.mxu0 0.0
        %1626 = vmatprep.subr.mxu0 0.0
        %1627 = vmatpush1.msra.mxu0 0.0
        %1628 = vmatprep.subr.mxu0 0.0
        %1629 = vmatpush1.msra.mxu0 0.0
        %1630 = vmatprep.subr.mxu0 0.0
        %1631 = vmatpush1.msra.mxu0 0.0
        %1632 = vmatprep.subr.mxu0 0.0
        %1633 = vmatpush1.msra.mxu0 0.0
        %1634 = vmatprep.subr.mxu0 0.0
        %1635 = vmatpush1.msra.mxu0 0.0
        %1636 = vmatprep.subr.mxu0 0.0
        %1637 = vmatpush1.msra.mxu0 0.0
        %1638 = vmatprep.subr.mxu0 0.0
        %1639 = vmatpush1.msra.mxu0 0.0
        %1640 = vmatprep.subr.mxu0 0.0
        %1641 = vmatpush1.msra.mxu0 0.0
        %1642 = vmatprep.subr.mxu0 0.0
        %1643 = vmatpush1.msra.mxu0 0.0
        %1644 = vmatprep.subr.mxu0 0.0
        %1645 = vmatpush1.msra.mxu0 0.0
        %1646 = vmatprep.subr.mxu0 0.0
        %1647 = vmatpush1.msra.mxu0 0.0
        %1648 = vmatprep.subr.mxu0 0.0
        %1649 = vmatpush1.msra.mxu0 0.0
        %1650 = vmatprep.subr.mxu0 0.0
        %1651 = vmatpush1.msra.mxu0 0.0
        %1652 = vmatprep.subr.mxu0 0.0
        %1653 = vmatpush1.msra.mxu0 0.0
        %1654 = vmatprep.subr.mxu0 0.0
        %1655 = vmatpush1.msra.mxu0 0.0
        %1656 = vmatprep.subr.mxu0 0.0
        %1657 = vmatpush1.msra.mxu0 0.0
        %1658 = vmatprep.subr.mxu0 0.0
        %1659 = vmatpush1.msra.mxu0 0.0
        %1660 = vmatprep.subr.mxu0 0.0
        %1661 = vmatpush1.msra.mxu0 0.0
        %1662 = vmatprep.subr.mxu0 0.0
        %1663 = vmatpush1.msra.mxu0 0.0
        %1664 = vmatprep.subr.mxu0 0.0
        %1665 = vmatpush1.msra.mxu0 0.0
        %1666 = vmatprep.subr.mxu0 0.0
        %1667 = vmatpush1.msra.mxu0 0.0
        %1668 = vmatprep.subr.mxu0 0.0
        %1669 = vmatpush1.msra.mxu0 0.0
        %1670 = vmatprep.subr.mxu0 0.0
        %1671 = vmatpush1.msra.mxu0 0.0
        %1672 = vmatprep.subr.mxu0 0.0
        %1673 = vmatpush1.msra.mxu0 0.0
        %1674 = vmatprep.subr.mxu0 0.0
        %1675 = vmatpush1.msra.mxu0 0.0
        %1676 = vmatprep.subr.mxu0 0.0
        %1677 = vmatpush1.msra.mxu0 0.0
        %1678 = vmatprep.subr.mxu0 0.0
        %1679 = vmatpush1.msra.mxu0 0.0
        %1680 = vmatprep.subr.mxu0 0.0
        %1681 = vmatpush1.msra.mxu0 0.0
        %1682 = vmatprep.mubr.f32.mxu0 0.0
        %1683 = vmatmul.mubr.f32.gmra.mrb[0].mxu0 %v1616
        %v1684 = vpop.f32.mrb[0].mxu0
        %v1685 = vadd.f32 0.0, %v1684
        %v1686 = vpop.f32.mrb[0].mxu0
        %1687 = vdwg.mxu0
        %v1689 = vsel %vm644, %v1685, 0
        %1691 = vmatprep.subr.mxu0 0.0
        %1692 = vmatpush1.msra.mxu0 %v807
        %1693 = vmatprep.subr.mxu0 0.0
        %1694 = vmatpush1.msra.mxu0 0.0
        %1695 = vmatprep.subr.mxu0 0.0
        %1696 = vmatpush1.msra.mxu0 0.0
        %1697 = vmatprep.subr.mxu0 0.0
        %1698 = vmatpush1.msra.mxu0 0.0
        %1699 = vmatprep.subr.mxu0 0.0
        %1700 = vmatpush1.msra.mxu0 0.0
        %1701 = vmatprep.subr.mxu0 0.0
        %1702 = vmatpush1.msra.mxu0 0.0
        %1703 = vmatprep.subr.mxu0 0.0
        %1704 = vmatpush1.msra.mxu0 0.0
        %1705 = vmatprep.subr.mxu0 0.0
        %1706 = vmatpush1.msra.mxu0 0.0
        %1707 = vmatprep.subr.mxu0 0.0
        %1708 = vmatpush1.msra.mxu0 0.0
        %1709 = vmatprep.subr.mxu0 0.0
        %1710 = vmatpush1.msra.mxu0 0.0
        %1711 = vmatprep.subr.mxu0 0.0
        %1712 = vmatpush1.msra.mxu0 0.0
        %1713 = vmatprep.subr.mxu0 0.0
        %1714 = vmatpush1.msra.mxu0 0.0
        %1715 = vmatprep.subr.mxu0 0.0
        %1716 = vmatpush1.msra.mxu0 0.0
        %1717 = vmatprep.subr.mxu0 0.0
        %1718 = vmatpush1.msra.mxu0 0.0
        %1719 = vmatprep.subr.mxu0 0.0
        %1720 = vmatpush1.msra.mxu0 0.0
        %1721 = vmatprep.subr.mxu0 0.0
        %1722 = vmatpush1.msra.mxu0 0.0
        %1723 = vmatprep.subr.mxu0 0.0
        %1724 = vmatpush1.msra.mxu0 0.0
        %1725 = vmatprep.subr.mxu0 0.0
        %1726 = vmatpush1.msra.mxu0 0.0
        %1727 = vmatprep.subr.mxu0 0.0
        %1728 = vmatpush1.msra.mxu0 0.0
        %1729 = vmatprep.subr.mxu0 0.0
        %1730 = vmatpush1.msra.mxu0 0.0
        %1731 = vmatprep.subr.mxu0 0.0
        %1732 = vmatpush1.msra.mxu0 0.0
        %1733 = vmatprep.subr.mxu0 0.0
        %1734 = vmatpush1.msra.mxu0 0.0
        %1735 = vmatprep.subr.mxu0 0.0
        %1736 = vmatpush1.msra.mxu0 0.0
        %1737 = vmatprep.subr.mxu0 0.0
        %1738 = vmatpush1.msra.mxu0 0.0
        %1739 = vmatprep.subr.mxu0 0.0
        %1740 = vmatpush1.msra.mxu0 0.0
        %1741 = vmatprep.subr.mxu0 0.0
        %1742 = vmatpush1.msra.mxu0 0.0
        %1743 = vmatprep.subr.mxu0 0.0
        %1744 = vmatpush1.msra.mxu0 0.0
        %1745 = vmatprep.subr.mxu0 0.0
        %1746 = vmatpush1.msra.mxu0 0.0
        %1747 = vmatprep.subr.mxu0 0.0
        %1748 = vmatpush1.msra.mxu0 0.0
        %1749 = vmatprep.subr.mxu0 0.0
        %1750 = vmatpush1.msra.mxu0 0.0
        %1751 = vmatprep.subr.mxu0 0.0
        %1752 = vmatpush1.msra.mxu0 0.0
        %1753 = vmatprep.subr.mxu0 0.0
        %1754 = vmatpush1.msra.mxu0 0.0
        %1755 = vmatprep.mubr.f32.mxu0 0.0
        %1756 = vmatmul.mubr.f32.gmra.mrb[0].mxu0 %v1689
        %v1757 = vpop.f32.mrb[0].mxu0
        %v1758 = vadd.f32 0.0, %v1757
        %v1759 = vpop.f32.mrb[0].mxu0
        %1760 = vdwg.mxu0
        %v1761 = vadd.f32 %v1522, %v1758
        %v1762 = vld [vmem:[%s6] sm:$0x1]
        %v1764 = vlaneseq
        %v1765 = vshrl.u32 %v1764, 7
        %v1766 = vsub.s32 0, %v1765
        %v1767 = vrot.slane %v1762, %v1766
        %v1769 = vadd.f32 %v1761, %v1767
        %v1770 = vadd.f32 %v715, %v1769
        %v1771 = vld [vmem:[%s7] sm:$0x1]
        %v1772 = vld [vmem:[%s8] sm:$0x1]
        %v1773 = vsel %vm729, %v1770, 0.0
        %1774 = vadd.xlane.f32.xlu0 %v1773
        %v1775 = vpop.xlane.xlu0 %1774
        %v1776 = vrcp.pop 32.0
        %v1777 = vmul.f32 %v1775, %v1776
        %v1778 = vsub.f32 %v1770, %v1777
        %v1779 = vmul.f32 %v1778, %v1778
        %v1780 = vsel %vm729, %v1779, 0.0
        %1781 = vadd.xlane.f32.xlu0 %v1780
        %v1782 = vpop.xlane.xlu0 %1781
        %v1783 = vmul.f32 %v1782, %v1776
        %v1784 = vadd.f32 %v1783, 1e-05
        %v1785 = vrsqrt.pop %v1784
        %v1786 = vmul.f32 %v1778, %v1785
        %v1788 = vlaneseq
        %v1789 = vshrl.u32 %v1788, 7
        %v1790 = vsub.s32 0, %v1789
        %v1791 = vrot.slane %v1771, %v1790
        %v1793 = vmul.f32 %v1786, %v1791
        %v1795 = vlaneseq
        %v1796 = vshrl.u32 %v1795, 7
        %v1797 = vsub.s32 0, %v1796
        %v1798 = vrot.slane %v1772, %v1797
        %v1800 = vadd.f32 %v1793, %v1798
        %v1801 = vld [vmem:[#allocation10] sm:$0xff]
        %v1802 = vld [vmem:[#allocation10 + $0x8] sm:$0xff]
        %v1803 = vld [vmem:[#allocation10 + $0x10] sm:$0xff]
        %v1804 = vld [vmem:[#allocation10 + $0x18] sm:$0xff]
        %v1805 = vld [vmem:[%s10] sm:$0x1]
        %v1807 = vlaneseq
        %v1808 = vshrl.u32 %v1807, 7
        %v1809 = vsub.s32 0, %v1808
        %v1810 = vrot.slane %v1805, %v1809
        %v1813 = vsel %vm729, %v1800, 0
        %1815 = vmatprep.subr.mxu0 0.0
        %1816 = vmatpush1.msra.mxu0 %v1801
        %1817 = vmatprep.subr.mxu0 0.0
        %1818 = vmatpush1.msra.mxu0 %v1802
        %1819 = vmatprep.subr.mxu0 0.0
        %1820 = vmatpush1.msra.mxu0 %v1803
        %1821 = vmatprep.subr.mxu0 0.0
        %1822 = vmatpush1.msra.mxu0 %v1804
        %1823 = vmatprep.subr.mxu0 0.0
        %1824 = vmatpush1.msra.mxu0 0.0
        %1825 = vmatprep.subr.mxu0 0.0
        %1826 = vmatpush1.msra.mxu0 0.0
        %1827 = vmatprep.subr.mxu0 0.0
        %1828 = vmatpush1.msra.mxu0 0.0
        %1829 = vmatprep.subr.mxu0 0.0
        %1830 = vmatpush1.msra.mxu0 0.0
        %1831 = vmatprep.subr.mxu0 0.0
        %1832 = vmatpush1.msra.mxu0 0.0
        %1833 = vmatprep.subr.mxu0 0.0
        %1834 = vmatpush1.msra.mxu0 0.0
        %1835 = vmatprep.subr.mxu0 0.0
        %1836 = vmatpush1.msra.mxu0 0.0
        %1837 = vmatprep.subr.mxu0 0.0
        %1838 = vmatpush1.msra.mxu0 0.0
        %1839 = vmatprep.subr.mxu0 0.0
        %1840 = vmatpush1.msra.mxu0 0.0
        %1841 = vmatprep.subr.mxu0 0.0
        %1842 = vmatpush1.msra.mxu0 0.0
        %1843 = vmatprep.subr.mxu0 0.0
        %1844 = vmatpush1.msra.mxu0 0.0
        %1845 = vmatprep.subr.mxu0 0.0
        %1846 = vmatpush1.msra.mxu0 0.0
        %1847 = vmatprep.subr.mxu0 0.0
        %1848 = vmatpush1.msra.mxu0 0.0
        %1849 = vmatprep.subr.mxu0 0.0
        %1850 = vmatpush1.msra.mxu0 0.0
        %1851 = vmatprep.subr.mxu0 0.0
        %1852 = vmatpush1.msra.mxu0 0.0
        %1853 = vmatprep.subr.mxu0 0.0
        %1854 = vmatpush1.msra.mxu0 0.0
        %1855 = vmatprep.subr.mxu0 0.0
        %1856 = vmatpush1.msra.mxu0 0.0
        %1857 = vmatprep.subr.mxu0 0.0
        %1858 = vmatpush1.msra.mxu0 0.0
        %1859 = vmatprep.subr.mxu0 0.0
        %1860 = vmatpush1.msra.mxu0 0.0
        %1861 = vmatprep.subr.mxu0 0.0
        %1862 = vmatpush1.msra.mxu0 0.0
        %1863 = vmatprep.subr.mxu0 0.0
        %1864 = vmatpush1.msra.mxu0 0.0
        %1865 = vmatprep.subr.mxu0 0.0
        %1866 = vmatpush1.msra.mxu0 0.0
        %1867 = vmatprep.subr.mxu0 0.0
        %1868 = vmatpush1.msra.mxu0 0.0
        %1869 = vmatprep.subr.mxu0 0.0
        %1870 = vmatpush1.msra.mxu0 0.0
        %1871 = vmatprep.subr.mxu0 0.0
        %1872 = vmatpush1.msra.mxu0 0.0
        %1873 = vmatprep.subr.mxu0 0.0
        %1874 = vmatpush1.msra.mxu0 0.0
        %1875 = vmatprep.subr.mxu0 0.0
        %1876 = vmatpush1.msra.mxu0 0.0
        %1877 = vmatprep.subr.mxu0 0.0
        %1878 = vmatpush1.msra.mxu0 0.0
        %1879 = vmatprep.mubr.f32.mxu0 0.0
        %1880 = vmatmul.mubr.f32.gmra.mrb[0].mxu0 %v1813
        %v1881 = vpop.f32.mrb[0].mxu0
        %v1882 = vadd.f32 %v1810, %v1881
        %v1883 = vpop.f32.mrb[0].mxu0
        %1884 = vdwg.mxu0
        %v1885 = vmax.f32 %v1882, 0.0
        %v1886 = vld [vmem:[#allocation11] sm:$0xff]
        %v1887 = vld [vmem:[#allocation11 + $0x8] sm:$0xff]
        %v1888 = vld [vmem:[#allocation11 + $0x10] sm:$0xff]
        %v1889 = vld [vmem:[#allocation11 + $0x18] sm:$0xff]
        %v1890 = vld [vmem:[%s12] sm:$0x1]
        %v1892 = vlaneseq
        %v1893 = vshrl.u32 %v1892, 7
        %v1894 = vsub.s32 0, %v1893
        %v1895 = vrot.slane %v1890, %v1894
        %v1898 = vsel %vm729, %v1885, 0
        %1900 = vmatprep.subr.mxu0 0.0
        %1901 = vmatpush1.msra.mxu0 %v1886
        %1902 = vmatprep.subr.mxu0 0.0
        %1903 = vmatpush1.msra.mxu0 %v1887
        %1904 = vmatprep.subr.mxu0 0.0
        %1905 = vmatpush1.msra.mxu0 %v1888
        %1906 = vmatprep.subr.mxu0 0.0
        %1907 = vmatpush1.msra.mxu0 %v1889
        %1908 = vmatprep.subr.mxu0 0.0
        %1909 = vmatpush1.msra.mxu0 0.0
        %1910 = vmatprep.subr.mxu0 0.0
        %1911 = vmatpush1.msra.mxu0 0.0
        %1912 = vmatprep.subr.mxu0 0.0
        %1913 = vmatpush1.msra.mxu0 0.0
        %1914 = vmatprep.subr.mxu0 0.0
        %1915 = vmatpush1.msra.mxu0 0.0
        %1916 = vmatprep.subr.mxu0 0.0
        %1917 = vmatpush1.msra.mxu0 0.0
        %1918 = vmatprep.subr.mxu0 0.0
        %1919 = vmatpush1.msra.mxu0 0.0
        %1920 = vmatprep.subr.mxu0 0.0
        %1921 = vmatpush1.msra.mxu0 0.0
        %1922 = vmatprep.subr.mxu0 0.0
        %1923 = vmatpush1.msra.mxu0 0.0
        %1924 = vmatprep.subr.mxu0 0.0
        %1925 = vmatpush1.msra.mxu0 0.0
        %1926 = vmatprep.subr.mxu0 0.0
        %1927 = vmatpush1.msra.mxu0 0.0
        %1928 = vmatprep.subr.mxu0 0.0
        %1929 = vmatpush1.msra.mxu0 0.0
        %1930 = vmatprep.subr.mxu0 0.0
        %1931 = vmatpush1.msra.mxu0 0.0
        %1932 = vmatprep.subr.mxu0 0.0
        %1933 = vmatpush1.msra.mxu0 0.0
        %1934 = vmatprep.subr.mxu0 0.0
        %1935 = vmatpush1.msra.mxu0 0.0
        %1936 = vmatprep.subr.mxu0 0.0
        %1937 = vmatpush1.msra.mxu0 0.0
        %1938 = vmatprep.subr.mxu0 0.0
        %1939 = vmatpush1.msra.mxu0 0.0
        %1940 = vmatprep.subr.mxu0 0.0
        %1941 = vmatpush1.msra.mxu0 0.0
        %1942 = vmatprep.subr.mxu0 0.0
        %1943 = vmatpush1.msra.mxu0 0.0
        %1944 = vmatprep.subr.mxu0 0.0
        %1945 = vmatpush1.msra.mxu0 0.0
        %1946 = vmatprep.subr.mxu0 0.0
        %1947 = vmatpush1.msra.mxu0 0.0
        %1948 = vmatprep.subr.mxu0 0.0
        %1949 = vmatpush1.msra.mxu0 0.0
        %1950 = vmatprep.subr.mxu0 0.0
        %1951 = vmatpush1.msra.mxu0 0.0
        %1952 = vmatprep.subr.mxu0 0.0
        %1953 = vmatpush1.msra.mxu0 0.0
        %1954 = vmatprep.subr.mxu0 0.0
        %1955 = vmatpush1.msra.mxu0 0.0
        %1956 = vmatprep.subr.mxu0 0.0
        %1957 = vmatpush1.msra.mxu0 0.0
        %1958 = vmatprep.subr.mxu0 0.0
        %1959 = vmatpush1.msra.mxu0 0.0
        %1960 = vmatprep.subr.mxu0 0.0
        %1961 = vmatpush1.msra.mxu0 0.0
        %1962 = vmatprep.subr.mxu0 0.0
        %1963 = vmatpush1.msra.mxu0 0.0
        %1964 = vmatprep.mubr.f32.mxu0 0.0
        %1965 = vmatmul.mubr.f32.gmra.mrb[0].mxu0 %v1898
        %v1966 = vpop.f32.mrb[0].mxu0
        %v1967 = vadd.f32 %v1895, %v1966
        %v1968 = vpop.f32.mrb[0].mxu0
        %1969 = vdwg.mxu0
        %v1970 = vadd.f32 %v1800, %v1967
        %v1971 = vld [vmem:[%s13] sm:$0x1]
        %v1972 = vld [vmem:[%s14] sm:$0x1]
        %v1973 = vsel %vm729, %v1970, 0.0
        %1974 = vadd.xlane.f32.xlu0 %v1973
        %v1975 = vpop.xlane.xlu0 %1974
        %v1976 = vmul.f32 %v1975, %v1776
        %v1977 = vsub.f32 %v1970, %v1976
        %v1978 = vmul.f32 %v1977, %v1977
        %v1979 = vsel %vm729, %v1978, 0.0
        %1980 = vadd.xlane.f32.xlu0 %v1979
        %v1981 = vpop.xlane.xlu0 %1980
        %v1982 = vmul.f32 %v1981, %v1776
        %v1983 = vadd.f32 %v1982, 1e-05
        %v1984 = vrsqrt.pop %v1983
        %v1985 = vmul.f32 %v1977, %v1984
        %v1987 = vlaneseq
        %v1988 = vshrl.u32 %v1987, 7
        %v1989 = vsub.s32 0, %v1988
        %v1990 = vrot.slane %v1971, %v1989
        %v1992 = vmul.f32 %v1985, %v1990
        %v1994 = vlaneseq
        %v1995 = vshrl.u32 %v1994, 7
        %v1996 = vsub.s32 0, %v1995
        %v1997 = vrot.slane %v1972, %v1996
        %v1999 = vadd.f32 %v1992, %v1997
        %s2000 = scalar_lea.vmem [#allocation7], 32
        %v2001 = vld [vmem:[%s2000] sm:$0xff]
        %v2002 = vld [vmem:[%s2000 + $0x8] sm:$0xff]
        %v2003 = vld [vmem:[%s2000 + $0x10] sm:$0xff]
        %v2004 = vld [vmem:[%s2000 + $0x18] sm:$0xff]
        %s2005 = scalar_lea.vmem %s4, 1
        %v2006 = vld [vmem:[%s2005] sm:$0x1]
        %v2008 = vlaneseq
        %v2009 = vshrl.u32 %v2008, 7
        %v2010 = vsub.s32 0, %v2009
        %v2011 = vrot.slane %v2006, %v2010
        %v2014 = vsel %vm729, %v1999, 0
        %2016 = vmatprep.subr.mxu0 0.0
        %2017 = vmatpush1.msra.mxu0 %v2001
        %2018 = vmatprep.subr.mxu0 0.0
        %2019 = vmatpush1.msra.mxu0 %v2002
        %2020 = vmatprep.subr.mxu0 0.0
        %2021 = vmatpush1.msra.mxu0 %v2003
        %2022 = vmatprep.subr.mxu0 0.0
        %2023 = vmatpush1.msra.mxu0 %v2004
        %2024 = vmatprep.subr.mxu0 0.0
        %2025 = vmatpush1.msra.mxu0 0.0
        %2026 = vmatprep.subr.mxu0 0.0
        %2027 = vmatpush1.msra.mxu0 0.0
        %2028 = vmatprep.subr.mxu0 0.0
        %2029 = vmatpush1.msra.mxu0 0.0
        %2030 = vmatprep.subr.mxu0 0.0
        %2031 = vmatpush1.msra.mxu0 0.0
        %2032 = vmatprep.subr.mxu0 0.0
        %2033 = vmatpush1.msra.mxu0 0.0
        %2034 = vmatprep.subr.mxu0 0.0
        %2035 = vmatpush1.msra.mxu0 0.0
        %2036 = vmatprep.subr.mxu0 0.0
        %2037 = vmatpush1.msra.mxu0 0.0
        %2038 = vmatprep.subr.mxu0 0.0
        %2039 = vmatpush1.msra.mxu0 0.0
        %2040 = vmatprep.subr.mxu0 0.0
        %2041 = vmatpush1.msra.mxu0 0.0
        %2042 = vmatprep.subr.mxu0 0.0
        %2043 = vmatpush1.msra.mxu0 0.0
        %2044 = vmatprep.subr.mxu0 0.0
        %2045 = vmatpush1.msra.mxu0 0.0
        %2046 = vmatprep.subr.mxu0 0.0
        %2047 = vmatpush1.msra.mxu0 0.0
        %2048 = vmatprep.subr.mxu0 0.0
        %2049 = vmatpush1.msra.mxu0 0.0
        %2050 = vmatprep.subr.mxu0 0.0
        %2051 = vmatpush1.msra.mxu0 0.0
        %2052 = vmatprep.subr.mxu0 0.0
        %2053 = vmatpush1.msra.mxu0 0.0
        %2054 = vmatprep.subr.mxu0 0.0
        %2055 = vmatpush1.msra.mxu0 0.0
        %2056 = vmatprep.subr.mxu0 0.0
        %2057 = vmatpush1.msra.mxu0 0.0
        %2058 = vmatprep.subr.mxu0 0.0
        %2059 = vmatpush1.msra.mxu0 0.0
        %2060 = vmatprep.subr.mxu0 0.0
        %2061 = vmatpush1.msra.mxu0 0.0
        %2062 = vmatprep.subr.mxu0 0.0
        %2063 = vmatpush1.msra.mxu0 0.0
        %2064 = vmatprep.subr.mxu0 0.0
        %2065 = vmatpush1.msra.mxu0 0.0
        %2066 = vmatprep.subr.mxu0 0.0
        %2067 = vmatpush1.msra.mxu0 0.0
        %2068 = vmatprep.subr.mxu0 0.0
        %2069 = vmatpush1.msra.mxu0 0.0
        %2070 = vmatprep.subr.mxu0 0.0
        %2071 = vmatpush1.msra.mxu0 0.0
        %2072 = vmatprep.subr.mxu0 0.0
        %2073 = vmatpush1.msra.mxu0 0.0
        %2074 = vmatprep.subr.mxu0 0.0
        %2075 = vmatpush1.msra.mxu0 0.0
        %2076 = vmatprep.subr.mxu0 0.0
        %2077 = vmatpush1.msra.mxu0 0.0
        %2078 = vmatprep.subr.mxu0 0.0
        %2079 = vmatpush1.msra.mxu0 0.0
        %2080 = vmatprep.mubr.f32.mxu0 0.0
        %2081 = vmatmul.mubr.f32.gmra.mrb[0].mxu0 %v2014
        %v2082 = vpop.f32.mrb[0].mxu0
        %v2083 = vadd.f32 %v2011, %v2082
        %v2084 = vpop.f32.mrb[0].mxu0
        %2085 = vdwg.mxu0
        %v2086 = vmul.f32 %v2083, 0.35355338
        %s2087 = scalar_lea.vmem [#allocation8], 32
        %v2088 = vld [vmem:[%s2087] sm:$0xff]
        %v2089 = vld [vmem:[%s2087 + $0x8] sm:$0xff]
        %v2090 = vld [vmem:[%s2087 + $0x10] sm:$0xff]
        %v2091 = vld [vmem:[%s2087 + $0x18] sm:$0xff]
        %2093 = vrot.lane.b32.xlu0 %v2083, 96
        %v2094 = vpop.permute.xlu0 %2093
        %v2096 = vsel %vm644, %v2086, 0
        %v2098 = vsel %vm644, %v2094, 0
        %2100 = vmatprep.subr.mxu0 0.0
        %2101 = vmatpush1.xpose.msra.mxu0 %v2098
        %2102 = vmatprep.subr.mxu0 0.0
        %2103 = vmatpush1.xpose.msra.mxu0 0.0
        %2104 = vmatprep.subr.mxu0 0.0
        %2105 = vmatpush1.xpose.msra.mxu0 0.0
        %2106 = vmatprep.subr.mxu0 0.0
        %2107 = vmatpush1.xpose.msra.mxu0 0.0
        %2108 = vmatprep.subr.mxu0 0.0
        %2109 = vmatpush1.xpose.msra.mxu0 0.0
        %2110 = vmatprep.subr.mxu0 0.0
        %2111 = vmatpush1.xpose.msra.mxu0 0.0
        %2112 = vmatprep.subr.mxu0 0.0
        %2113 = vmatpush1.xpose.msra.mxu0 0.0
        %2114 = vmatprep.subr.mxu0 0.0
        %2115 = vmatpush1.xpose.msra.mxu0 0.0
        %2116 = vmatprep.subr.mxu0 0.0
        %2117 = vmatpush1.xpose.msra.mxu0 0.0
        %2118 = vmatprep.subr.mxu0 0.0
        %2119 = vmatpush1.xpose.msra.mxu0 0.0
        %2120 = vmatprep.subr.mxu0 0.0
        %2121 = vmatpush1.xpose.msra.mxu0 0.0
        %2122 = vmatprep.subr.mxu0 0.0
        %2123 = vmatpush1.xpose.msra.mxu0 0.0
        %2124 = vmatprep.subr.mxu0 0.0
        %2125 = vmatpush1.xpose.msra.mxu0 0.0
        %2126 = vmatprep.subr.mxu0 0.0
        %2127 = vmatpush1.xpose.msra.mxu0 0.0
        %2128 = vmatprep.subr.mxu0 0.0
        %2129 = vmatpush1.xpose.msra.mxu0 0.0
        %2130 = vmatprep.subr.mxu0 0.0
        %2131 = vmatpush1.xpose.msra.mxu0 0.0
        %2132 = vmatprep.subr.mxu0 0.0
        %2133 = vmatpush1.xpose.msra.mxu0 0.0
        %2134 = vmatprep.subr.mxu0 0.0
        %2135 = vmatpush1.xpose.msra.mxu0 0.0
        %2136 = vmatprep.subr.mxu0 0.0
        %2137 = vmatpush1.xpose.msra.mxu0 0.0
        %2138 = vmatprep.subr.mxu0 0.0
        %2139 = vmatpush1.xpose.msra.mxu0 0.0
        %2140 = vmatprep.subr.mxu0 0.0
        %2141 = vmatpush1.xpose.msra.mxu0 0.0
        %2142 = vmatprep.subr.mxu0 0.0
        %2143 = vmatpush1.xpose.msra.mxu0 0.0
        %2144 = vmatprep.subr.mxu0 0.0
        %2145 = vmatpush1.xpose.msra.mxu0 0.0
        %2146 = vmatprep.subr.mxu0 0.0
        %2147 = vmatpush1.xpose.msra.mxu0 0.0
        %2148 = vmatprep.subr.mxu0 0.0
        %2149 = vmatpush1.xpose.msra.mxu0 0.0
        %2150 = vmatprep.subr.mxu0 0.0
        %2151 = vmatpush1.xpose.msra.mxu0 0.0
        %2152 = vmatprep.subr.mxu0 0.0
        %2153 = vmatpush1.xpose.msra.mxu0 0.0
        %2154 = vmatprep.subr.mxu0 0.0
        %2155 = vmatpush1.xpose.msra.mxu0 0.0
        %2156 = vmatprep.subr.mxu0 0.0
        %2157 = vmatpush1.xpose.msra.mxu0 0.0
        %2158 = vmatprep.subr.mxu0 0.0
        %2159 = vmatpush1.xpose.msra.mxu0 0.0
        %2160 = vmatprep.subr.mxu0 0.0
        %2161 = vmatpush1.xpose.msra.mxu0 0.0
        %2162 = vmatprep.subr.mxu0 0.0
        %2163 = vmatpush1.xpose.msra.mxu0 0.0
        %2164 = vmatprep.mubr.f32.mxu0 0.0
        %2165 = vmatmul.mubr.f32.gmra.mrb[0].mxu0 %v2096
        %v2166 = vpop.f32.mrb[0].mxu0
        %v2167 = vadd.f32 0.0, %v2166
        %v2168 = vpop.f32.mrb[0].mxu0
        %2169 = vdwg.mxu0
        %v2170 = vsel %vm644, %v2167, -inf
        %2171 = vmax.xlane.f32.xlu0 %v2170
        %v2172 = vpop.xlane.xlu0 %2171
        %v2173 = vsub.f32 %v2167, %v2172
        %v2174 = vmul.f32 %v2173, 1.442695
        %v2175 = vpow.pop %v2174
        %v2176 = vsel %vm644, %v2175, 0.0
        %2177 = vadd.xlane.f32.xlu0 %v2176
        %v2178 = vpop.xlane.xlu0 %2177
        %v2179 = vrcp.pop %v2178
        %v2180 = vmul.f32 %v2175, %v2179
        %2181 = vrot.lane.b32.xlu0 %v2083, 64
        %v2182 = vpop.permute.xlu0 %2181
        %v2185 = vsel %vm644, %v2180, 0
        %2187 = vmatprep.subr.mxu0 0.0
        %2188 = vmatpush1.msra.mxu0 %v2182
        %2189 = vmatprep.subr.mxu0 0.0
        %2190 = vmatpush1.msra.mxu0 0.0
        %2191 = vmatprep.subr.mxu0 0.0
        %2192 = vmatpush1.msra.mxu0 0.0
        %2193 = vmatprep.subr.mxu0 0.0
        %2194 = vmatpush1.msra.mxu0 0.0
        %2195 = vmatprep.subr.mxu0 0.0
        %2196 = vmatpush1.msra.mxu0 0.0
        %2197 = vmatprep.subr.mxu0 0.0
        %2198 = vmatpush1.msra.mxu0 0.0
        %2199 = vmatprep.subr.mxu0 0.0
        %2200 = vmatpush1.msra.mxu0 0.0
        %2201 = vmatprep.subr.mxu0 0.0
        %2202 = vmatpush1.msra.mxu0 0.0
        %2203 = vmatprep.subr.mxu0 0.0
        %2204 = vmatpush1.msra.mxu0 0.0
        %2205 = vmatprep.subr.mxu0 0.0
        %2206 = vmatpush1.msra.mxu0 0.0
        %2207 = vmatprep.subr.mxu0 0.0
        %2208 = vmatpush1.msra.mxu0 0.0
        %2209 = vmatprep.subr.mxu0 0.0
        %2210 = vmatpush1.msra.mxu0 0.0
        %2211 = vmatprep.subr.mxu0 0.0
        %2212 = vmatpush1.msra.mxu0 0.0
        %2213 = vmatprep.subr.mxu0 0.0
        %2214 = vmatpush1.msra.mxu0 0.0
        %2215 = vmatprep.subr.mxu0 0.0
        %2216 = vmatpush1.msra.mxu0 0.0
        %2217 = vmatprep.subr.mxu0 0.0
        %2218 = vmatpush1.msra.mxu0 0.0
        %2219 = vmatprep.subr.mxu0 0.0
        %2220 = vmatpush1.msra.mxu0 0.0
        %2221 = vmatprep.subr.mxu0 0.0
        %2222 = vmatpush1.msra.mxu0 0.0
        %2223 = vmatprep.subr.mxu0 0.0
        %2224 = vmatpush1.msra.mxu0 0.0
        %2225 = vmatprep.subr.mxu0 0.0
        %2226 = vmatpush1.msra.mxu0 0.0
        %2227 = vmatprep.subr.mxu0 0.0
        %2228 = vmatpush1.msra.mxu0 0.0
        %2229 = vmatprep.subr.mxu0 0.0
        %2230 = vmatpush1.msra.mxu0 0.0
        %2231 = vmatprep.subr.mxu0 0.0
        %2232 = vmatpush1.msra.mxu0 0.0
        %2233 = vmatprep.subr.mxu0 0.0
        %2234 = vmatpush1.msra.mxu0 0.0
        %2235 = vmatprep.subr.mxu0 0.0
        %2236 = vmatpush1.msra.mxu0 0.0
        %2237 = vmatprep.subr.mxu0 0.0
        %2238 = vmatpush1.msra.mxu0 0.0
        %2239 = vmatprep.subr.mxu0 0.0
        %2240 = vmatpush1.msra.mxu0 0.0
        %2241 = vmatprep.subr.mxu0 0.0
        %2242 = vmatpush1.msra.mxu0 0.0
        %2243 = vmatprep.subr.mxu0 0.0
        %2244 = vmatpush1.msra.mxu0 0.0
        %2245 = vmatprep.subr.mxu0 0.0
        %2246 = vmatpush1.msra.mxu0 0.0
        %2247 = vmatprep.subr.mxu0 0.0
        %2248 = vmatpush1.msra.mxu0 0.0
        %2249 = vmatprep.subr.mxu0 0.0
        %2250 = vmatpush1.msra.mxu0 0.0
        %2251 = vmatprep.mubr.f32.mxu0 0.0
        %2252 = vmatmul.mubr.f32.gmra.mrb[0].mxu0 %v2185
        %v2253 = vpop.f32.mrb[0].mxu0
        %v2254 = vadd.f32 0.0, %v2253
        %v2255 = vpop.f32.mrb[0].mxu0
        %2256 = vdwg.mxu0
        %2257 = vrot.lane.b32.xlu0 %v2086, 120
        %v2258 = vpop.permute.xlu0 %2257
        %2259 = vrot.lane.b32.xlu0 %v2083, 88
        %v2260 = vpop.permute.xlu0 %2259
        %v2261 = vsel %vm644, %v2258, 0
        %v2263 = vsel %vm644, %v2260, 0
        %2265 = vmatprep.subr.mxu0 0.0
        %2266 = vmatpush1.xpose.msra.mxu0 %v2263
        %2267 = vmatprep.subr.mxu0 0.0
        %2268 = vmatpush1.xpose.msra.mxu0 0.0
        %2269 = vmatprep.subr.mxu0 0.0
        %2270 = vmatpush1.xpose.msra.mxu0 0.0
        %2271 = vmatprep.subr.mxu0 0.0
        %2272 = vmatpush1.xpose.msra.mxu0 0.0
        %2273 = vmatprep.subr.mxu0 0.0
        %2274 = vmatpush1.xpose.msra.mxu0 0.0
        %2275 = vmatprep.subr.mxu0 0.0
        %2276 = vmatpush1.xpose.msra.mxu0 0.0
        %2277 = vmatprep.subr.mxu0 0.0
        %2278 = vmatpush1.xpose.msra.mxu0 0.0
        %2279 = vmatprep.subr.mxu0 0.0
        %2280 = vmatpush1.xpose.msra.mxu0 0.0
        %2281 = vmatprep.subr.mxu0 0.0
        %2282 = vmatpush1.xpose.msra.mxu0 0.0
        %2283 = vmatprep.subr.mxu0 0.0
        %2284 = vmatpush1.xpose.msra.mxu0 0.0
        %2285 = vmatprep.subr.mxu0 0.0
        %2286 = vmatpush1.xpose.msra.mxu0 0.0
        %2287 = vmatprep.subr.mxu0 0.0
        %2288 = vmatpush1.xpose.msra.mxu0 0.0
        %2289 = vmatprep.subr.mxu0 0.0
        %2290 = vmatpush1.xpose.msra.mxu0 0.0
        %2291 = vmatprep.subr.mxu0 0.0
        %2292 = vmatpush1.xpose.msra.mxu0 0.0
        %2293 = vmatprep.subr.mxu0 0.0
        %2294 = vmatpush1.xpose.msra.mxu0 0.0
        %2295 = vmatprep.subr.mxu0 0.0
        %2296 = vmatpush1.xpose.msra.mxu0 0.0
        %2297 = vmatprep.subr.mxu0 0.0
        %2298 = vmatpush1.xpose.msra.mxu0 0.0
        %2299 = vmatprep.subr.mxu0 0.0
        %2300 = vmatpush1.xpose.msra.mxu0 0.0
        %2301 = vmatprep.subr.mxu0 0.0
        %2302 = vmatpush1.xpose.msra.mxu0 0.0
        %2303 = vmatprep.subr.mxu0 0.0
        %2304 = vmatpush1.xpose.msra.mxu0 0.0
        %2305 = vmatprep.subr.mxu0 0.0
        %2306 = vmatpush1.xpose.msra.mxu0 0.0
        %2307 = vmatprep.subr.mxu0 0.0
        %2308 = vmatpush1.xpose.msra.mxu0 0.0
        %2309 = vmatprep.subr.mxu0 0.0
        %2310 = vmatpush1.xpose.msra.mxu0 0.0
        %2311 = vmatprep.subr.mxu0 0.0
        %2312 = vmatpush1.xpose.msra.mxu0 0.0
        %2313 = vmatprep.subr.mxu0 0.0
        %2314 = vmatpush1.xpose.msra.mxu0 0.0
        %2315 = vmatprep.subr.mxu0 0.0
        %2316 = vmatpush1.xpose.msra.mxu0 0.0
        %2317 = vmatprep.subr.mxu0 0.0
        %2318 = vmatpush1.xpose.msra.mxu0 0.0
        %2319 = vmatprep.subr.mxu0 0.0
        %2320 = vmatpush1.xpose.msra.mxu0 0.0
        %2321 = vmatprep.subr.mxu0 0.0
        %2322 = vmatpush1.xpose.msra.mxu0 0.0
        %2323 = vmatprep.subr.mxu0 0.0
        %2324 = vmatpush1.xpose.msra.mxu0 0.0
        %2325 = vmatprep.subr.mxu0 0.0
        %2326 = vmatpush1.xpose.msra.mxu0 0.0
        %2327 = vmatprep.subr.mxu0 0.0
        %2328 = vmatpush1.xpose.msra.mxu0 0.0
        %2329 = vmatprep.mubr.f32.mxu0 0.0
        %2330 = vmatmul.mubr.f32.gmra.mrb[0].mxu0 %v2261
        %v2331 = vpop.f32.mrb[0].mxu0
        %v2332 = vadd.f32 0.0, %v2331
        %v2333 = vpop.f32.mrb[0].mxu0
        %2334 = vdwg.mxu0
        %v2335 = vsel %vm644, %v2332, -inf
        %2336 = vmax.xlane.f32.xlu0 %v2335
        %v2337 = vpop.xlane.xlu0 %2336
        %v2338 = vsub.f32 %v2332, %v2337
        %v2339 = vmul.f32 %v2338, 1.442695
        %v2340 = vpow.pop %v2339
        %v2341 = vsel %vm644, %v2340, 0.0
        %2342 = vadd.xlane.f32.xlu0 %v2341
        %v2343 = vpop.xlane.xlu0 %2342
        %v2344 = vrcp.pop %v2343
        %v2345 = vmul.f32 %v2340, %v2344
        %2346 = vrot.lane.b32.xlu0 %v2083, 56
        %v2347 = vpop.permute.xlu0 %2346
        %v2350 = vsel %vm644, %v2345, 0
        %2352 = vmatprep.subr.mxu0 0.0
        %2353 = vmatpush1.msra.mxu0 %v2347
        %2354 = vmatprep.subr.mxu0 0.0
        %2355 = vmatpush1.msra.mxu0 0.0
        %2356 = vmatprep.subr.mxu0 0.0
        %2357 = vmatpush1.msra.mxu0 0.0
        %2358 = vmatprep.subr.mxu0 0.0
        %2359 = vmatpush1.msra.mxu0 0.0
        %2360 = vmatprep.subr.mxu0 0.0
        %2361 = vmatpush1.msra.mxu0 0.0
        %2362 = vmatprep.subr.mxu0 0.0
        %2363 = vmatpush1.msra.mxu0 0.0
        %2364 = vmatprep.subr.mxu0 0.0
        %2365 = vmatpush1.msra.mxu0 0.0
        %2366 = vmatprep.subr.mxu0 0.0
        %2367 = vmatpush1.msra.mxu0 0.0
        %2368 = vmatprep.subr.mxu0 0.0
        %2369 = vmatpush1.msra.mxu0 0.0
        %2370 = vmatprep.subr.mxu0 0.0
        %2371 = vmatpush1.msra.mxu0 0.0
        %2372 = vmatprep.subr.mxu0 0.0
        %2373 = vmatpush1.msra.mxu0 0.0
        %2374 = vmatprep.subr.mxu0 0.0
        %2375 = vmatpush1.msra.mxu0 0.0
        %2376 = vmatprep.subr.mxu0 0.0
        %2377 = vmatpush1.msra.mxu0 0.0
        %2378 = vmatprep.subr.mxu0 0.0
        %2379 = vmatpush1.msra.mxu0 0.0
        %2380 = vmatprep.subr.mxu0 0.0
        %2381 = vmatpush1.msra.mxu0 0.0
        %2382 = vmatprep.subr.mxu0 0.0
        %2383 = vmatpush1.msra.mxu0 0.0
        %2384 = vmatprep.subr.mxu0 0.0
        %2385 = vmatpush1.msra.mxu0 0.0
        %2386 = vmatprep.subr.mxu0 0.0
        %2387 = vmatpush1.msra.mxu0 0.0
        %2388 = vmatprep.subr.mxu0 0.0
        %2389 = vmatpush1.msra.mxu0 0.0
        %2390 = vmatprep.subr.mxu0 0.0
        %2391 = vmatpush1.msra.mxu0 0.0
        %2392 = vmatprep.subr.mxu0 0.0
        %2393 = vmatpush1.msra.mxu0 0.0
        %2394 = vmatprep.subr.mxu0 0.0
        %2395 = vmatpush1.msra.mxu0 0.0
        %2396 = vmatprep.subr.mxu0 0.0
        %2397 = vmatpush1.msra.mxu0 0.0
        %2398 = vmatprep.subr.mxu0 0.0
        %2399 = vmatpush1.msra.mxu0 0.0
        %2400 = vmatprep.subr.mxu0 0.0
        %2401 = vmatpush1.msra.mxu0 0.0
        %2402 = vmatprep.subr.mxu0 0.0
        %2403 = vmatpush1.msra.mxu0 0.0
        %2404 = vmatprep.subr.mxu0 0.0
        %2405 = vmatpush1.msra.mxu0 0.0
        %2406 = vmatprep.subr.mxu0 0.0
        %2407 = vmatpush1.msra.mxu0 0.0
        %2408 = vmatprep.subr.mxu0 0.0
        %2409 = vmatpush1.msra.mxu0 0.0
        %2410 = vmatprep.subr.mxu0 0.0
        %2411 = vmatpush1.msra.mxu0 0.0
        %2412 = vmatprep.subr.mxu0 0.0
        %2413 = vmatpush1.msra.mxu0 0.0
        %2414 = vmatprep.subr.mxu0 0.0
        %2415 = vmatpush1.msra.mxu0 0.0
        %2416 = vmatprep.mubr.f32.mxu0 0.0
        %2417 = vmatmul.mubr.f32.gmra.mrb[0].mxu0 %v2350
        %v2418 = vpop.f32.mrb[0].mxu0
        %v2419 = vadd.f32 0.0, %v2418
        %v2420 = vpop.f32.mrb[0].mxu0
        %2421 = vdwg.mxu0
        %v2423 = vsel %vm644, %v2419, 0
        %2425 = vmatprep.subr.mxu0 0.0
        %2426 = vmatpush1.msra.mxu0 %v2089
        %2427 = vmatprep.subr.mxu0 0.0
        %2428 = vmatpush1.msra.mxu0 0.0
        %2429 = vmatprep.subr.mxu0 0.0
        %2430 = vmatpush1.msra.mxu0 0.0
        %2431 = vmatprep.subr.mxu0 0.0
        %2432 = vmatpush1.msra.mxu0 0.0
        %2433 = vmatprep.subr.mxu0 0.0
        %2434 = vmatpush1.msra.mxu0 0.0
        %2435 = vmatprep.subr.mxu0 0.0
        %2436 = vmatpush1.msra.mxu0 0.0
        %2437 = vmatprep.subr.mxu0 0.0
        %2438 = vmatpush1.msra.mxu0 0.0
        %2439 = vmatprep.subr.mxu0 0.0
        %2440 = vmatpush1.msra.mxu0 0.0
        %2441 = vmatprep.subr.mxu0 0.0
        %2442 = vmatpush1.msra.mxu0 0.0
        %2443 = vmatprep.subr.mxu0 0.0
        %2444 = vmatpush1.msra.mxu0 0.0
        %2445 = vmatprep.subr.mxu0 0.0
        %2446 = vmatpush1.msra.mxu0 0.0
        %2447 = vmatprep.subr.mxu0 0.0
        %2448 = vmatpush1.msra.mxu0 0.0
        %2449 = vmatprep.subr.mxu0 0.0
        %2450 = vmatpush1.msra.mxu0 0.0
        %2451 = vmatprep.subr.mxu0 0.0
        %2452 = vmatpush1.msra.mxu0 0.0
        %2453 = vmatprep.subr.mxu0 0.0
        %2454 = vmatpush1.msra.mxu0 0.0
        %2455 = vmatprep.subr.mxu0 0.0
        %2456 = vmatpush1.msra.mxu0 0.0
        %2457 = vmatprep.subr.mxu0 0.0
        %2458 = vmatpush1.msra.mxu0 0.0
        %2459 = vmatprep.subr.mxu0 0.0
        %2460 = vmatpush1.msra.mxu0 0.0
        %2461 = vmatprep.subr.mxu0 0.0
        %2462 = vmatpush1.msra.mxu0 0.0
        %2463 = vmatprep.subr.mxu0 0.0
        %2464 = vmatpush1.msra.mxu0 0.0
        %2465 = vmatprep.subr.mxu0 0.0
        %2466 = vmatpush1.msra.mxu0 0.0
        %2467 = vmatprep.subr.mxu0 0.0
        %2468 = vmatpush1.msra.mxu0 0.0
        %2469 = vmatprep.subr.mxu0 0.0
        %2470 = vmatpush1.msra.mxu0 0.0
        %2471 = vmatprep.subr.mxu0 0.0
        %2472 = vmatpush1.msra.mxu0 0.0
        %2473 = vmatprep.subr.mxu0 0.0
        %2474 = vmatpush1.msra.mxu0 0.0
        %2475 = vmatprep.subr.mxu0 0.0
        %2476 = vmatpush1.msra.mxu0 0.0
        %2477 = vmatprep.subr.mxu0 0.0
        %2478 = vmatpush1.msra.mxu0 0.0
        %2479 = vmatprep.subr.mxu0 0.0
        %2480 = vmatpush1.msra.mxu0 0.0
        %2481 = vmatprep.subr.mxu0 0.0
        %2482 = vmatpush1.msra.mxu0 0.0
        %2483 = vmatprep.subr.mxu0 0.0
        %2484 = vmatpush1.msra.mxu0 0.0
        %2485 = vmatprep.subr.mxu0 0.0
        %2486 = vmatpush1.msra.mxu0 0.0
        %2487 = vmatprep.subr.mxu0 0.0
        %2488 = vmatpush1.msra.mxu0 0.0
        %2489 = vmatprep.mubr.f32.mxu0 0.0
        %2490 = vmatmul.mubr.f32.gmra.mrb[0].mxu0 %v2423
        %v2491 = vpop.f32.mrb[0].mxu0
        %v2492 = vadd.f32 0.0, %v2491
        %v2493 = vpop.f32.mrb[0].mxu0
        %2494 = vdwg.mxu0
        %v2496 = vsel %vm644, %v2254, 0
        %2498 = vmatprep.subr.mxu0 0.0
        %2499 = vmatpush1.msra.mxu0 %v2088
        %2500 = vmatprep.subr.mxu0 0.0
        %2501 = vmatpush1.msra.mxu0 0.0
        %2502 = vmatprep.subr.mxu0 0.0
        %2503 = vmatpush1.msra.mxu0 0.0
        %2504 = vmatprep.subr.mxu0 0.0
        %2505 = vmatpush1.msra.mxu0 0.0
        %2506 = vmatprep.subr.mxu0 0.0
        %2507 = vmatpush1.msra.mxu0 0.0
        %2508 = vmatprep.subr.mxu0 0.0
        %2509 = vmatpush1.msra.mxu0 0.0
        %2510 = vmatprep.subr.mxu0 0.0
        %2511 = vmatpush1.msra.mxu0 0.0
        %2512 = vmatprep.subr.mxu0 0.0
        %2513 = vmatpush1.msra.mxu0 0.0
        %2514 = vmatprep.subr.mxu0 0.0
        %2515 = vmatpush1.msra.mxu0 0.0
        %2516 = vmatprep.subr.mxu0 0.0
        %2517 = vmatpush1.msra.mxu0 0.0
        %2518 = vmatprep.subr.mxu0 0.0
        %2519 = vmatpush1.msra.mxu0 0.0
        %2520 = vmatprep.subr.mxu0 0.0
        %2521 = vmatpush1.msra.mxu0 0.0
        %2522 = vmatprep.subr.mxu0 0.0
        %2523 = vmatpush1.msra.mxu0 0.0
        %2524 = vmatprep.subr.mxu0 0.0
        %2525 = vmatpush1.msra.mxu0 0.0
        %2526 = vmatprep.subr.mxu0 0.0
        %2527 = vmatpush1.msra.mxu0 0.0
        %2528 = vmatprep.subr.mxu0 0.0
        %2529 = vmatpush1.msra.mxu0 0.0
        %2530 = vmatprep.subr.mxu0 0.0
        %2531 = vmatpush1.msra.mxu0 0.0
        %2532 = vmatprep.subr.mxu0 0.0
        %2533 = vmatpush1.msra.mxu0 0.0
        %2534 = vmatprep.subr.mxu0 0.0
        %2535 = vmatpush1.msra.mxu0 0.0
        %2536 = vmatprep.subr.mxu0 0.0
        %2537 = vmatpush1.msra.mxu0 0.0
        %2538 = vmatprep.subr.mxu0 0.0
        %2539 = vmatpush1.msra.mxu0 0.0
        %2540 = vmatprep.subr.mxu0 0.0
        %2541 = vmatpush1.msra.mxu0 0.0
        %2542 = vmatprep.subr.mxu0 0.0
        %2543 = vmatpush1.msra.mxu0 0.0
        %2544 = vmatprep.subr.mxu0 0.0
        %2545 = vmatpush1.msra.mxu0 0.0
        %2546 = vmatprep.subr.mxu0 0.0
        %2547 = vmatpush1.msra.mxu0 0.0
        %2548 = vmatprep.subr.mxu0 0.0
        %2549 = vmatpush1.msra.mxu0 0.0
        %2550 = vmatprep.subr.mxu0 0.0
        %2551 = vmatpush1.msra.mxu0 0.0
        %2552 = vmatprep.subr.mxu0 0.0
        %2553 = vmatpush1.msra.mxu0 0.0
        %2554 = vmatprep.subr.mxu0 0.0
        %2555 = vmatpush1.msra.mxu0 0.0
        %2556 = vmatprep.subr.mxu0 0.0
        %2557 = vmatpush1.msra.mxu0 0.0
        %2558 = vmatprep.subr.mxu0 0.0
        %2559 = vmatpush1.msra.mxu0 0.0
        %2560 = vmatprep.subr.mxu0 0.0
        %2561 = vmatpush1.msra.mxu0 0.0
        %2562 = vmatprep.mubr.f32.mxu0 0.0
        %2563 = vmatmul.mubr.f32.gmra.mrb[0].mxu0 %v2496
        %v2564 = vpop.f32.mrb[0].mxu0
        %v2565 = vadd.f32 %v2492, %v2564
        %v2566 = vpop.f32.mrb[0].mxu0
        %2567 = vdwg.mxu0
        %2568 = vrot.lane.b32.xlu0 %v2086, 112
        %v2569 = vpop.permute.xlu0 %2568
        %2570 = vrot.lane.b32.xlu0 %v2083, 80
        %v2571 = vpop.permute.xlu0 %2570
        %v2572 = vsel %vm644, %v2569, 0
        %v2574 = vsel %vm644, %v2571, 0
        %2576 = vmatprep.subr.mxu0 0.0
        %2577 = vmatpush1.xpose.msra.mxu0 %v2574
        %2578 = vmatprep.subr.mxu0 0.0
        %2579 = vmatpush1.xpose.msra.mxu0 0.0
        %2580 = vmatprep.subr.mxu0 0.0
        %2581 = vmatpush1.xpose.msra.mxu0 0.0
        %2582 = vmatprep.subr.mxu0 0.0
        %2583 = vmatpush1.xpose.msra.mxu0 0.0
        %2584 = vmatprep.subr.mxu0 0.0
        %2585 = vmatpush1.xpose.msra.mxu0 0.0
        %2586 = vmatprep.subr.mxu0 0.0
        %2587 = vmatpush1.xpose.msra.mxu0 0.0
        %2588 = vmatprep.subr.mxu0 0.0
        %2589 = vmatpush1.xpose.msra.mxu0 0.0
        %2590 = vmatprep.subr.mxu0 0.0
        %2591 = vmatpush1.xpose.msra.mxu0 0.0
        %2592 = vmatprep.subr.mxu0 0.0
        %2593 = vmatpush1.xpose.msra.mxu0 0.0
        %2594 = vmatprep.subr.mxu0 0.0
        %2595 = vmatpush1.xpose.msra.mxu0 0.0
        %2596 = vmatprep.subr.mxu0 0.0
        %2597 = vmatpush1.xpose.msra.mxu0 0.0
        %2598 = vmatprep.subr.mxu0 0.0
        %2599 = vmatpush1.xpose.msra.mxu0 0.0
        %2600 = vmatprep.subr.mxu0 0.0
        %2601 = vmatpush1.xpose.msra.mxu0 0.0
        %2602 = vmatprep.subr.mxu0 0.0
        %2603 = vmatpush1.xpose.msra.mxu0 0.0
        %2604 = vmatprep.subr.mxu0 0.0
        %2605 = vmatpush1.xpose.msra.mxu0 0.0
        %2606 = vmatprep.subr.mxu0 0.0
        %2607 = vmatpush1.xpose.msra.mxu0 0.0
        %2608 = vmatprep.subr.mxu0 0.0
        %2609 = vmatpush1.xpose.msra.mxu0 0.0
        %2610 = vmatprep.subr.mxu0 0.0
        %2611 = vmatpush1.xpose.msra.mxu0 0.0
        %2612 = vmatprep.subr.mxu0 0.0
        %2613 = vmatpush1.xpose.msra.mxu0 0.0
        %2614 = vmatprep.subr.mxu0 0.0
        %2615 = vmatpush1.xpose.msra.mxu0 0.0
        %2616 = vmatprep.subr.mxu0 0.0
        %2617 = vmatpush1.xpose.msra.mxu0 0.0
        %2618 = vmatprep.subr.mxu0 0.0
        %2619 = vmatpush1.xpose.msra.mxu0 0.0
        %2620 = vmatprep.subr.mxu0 0.0
        %2621 = vmatpush1.xpose.msra.mxu0 0.0
        %2622 = vmatprep.subr.mxu0 0.0
        %2623 = vmatpush1.xpose.msra.mxu0 0.0
        %2624 = vmatprep.subr.mxu0 0.0
        %2625 = vmatpush1.xpose.msra.mxu0 0.0
        %2626 = vmatprep.subr.mxu0 0.0
        %2627 = vmatpush1.xpose.msra.mxu0 0.0
        %2628 = vmatprep.subr.mxu0 0.0
        %2629 = vmatpush1.xpose.msra.mxu0 0.0
        %2630 = vmatprep.subr.mxu0 0.0
        %2631 = vmatpush1.xpose.msra.mxu0 0.0
        %2632 = vmatprep.subr.mxu0 0.0
        %2633 = vmatpush1.xpose.msra.mxu0 0.0
        %2634 = vmatprep.subr.mxu0 0.0
        %2635 = vmatpush1.xpose.msra.mxu0 0.0
        %2636 = vmatprep.subr.mxu0 0.0
        %2637 = vmatpush1.xpose.msra.mxu0 0.0
        %2638 = vmatprep.subr.mxu0 0.0
        %2639 = vmatpush1.xpose.msra.mxu0 0.0
        %2640 = vmatprep.mubr.f32.mxu0 0.0
        %2641 = vmatmul.mubr.f32.gmra.mrb[0].mxu0 %v2572
        %v2642 = vpop.f32.mrb[0].mxu0
        %v2643 = vadd.f32 0.0, %v2642
        %v2644 = vpop.f32.mrb[0].mxu0
        %2645 = vdwg.mxu0
        %v2646 = vsel %vm644, %v2643, -inf
        %2647 = vmax.xlane.f32.xlu0 %v2646
        %v2648 = vpop.xlane.xlu0 %2647
        %v2649 = vsub.f32 %v2643, %v2648
        %v2650 = vmul.f32 %v2649, 1.442695
        %v2651 = vpow.pop %v2650
        %v2652 = vsel %vm644, %v2651, 0.0
        %2653 = vadd.xlane.f32.xlu0 %v2652
        %v2654 = vpop.xlane.xlu0 %2653
        %v2655 = vrcp.pop %v2654
        %v2656 = vmul.f32 %v2651, %v2655
        %2657 = vrot.lane.b32.xlu0 %v2083, 48
        %v2658 = vpop.permute.xlu0 %2657
        %v2661 = vsel %vm644, %v2656, 0
        %2663 = vmatprep.subr.mxu0 0.0
        %2664 = vmatpush1.msra.mxu0 %v2658
        %2665 = vmatprep.subr.mxu0 0.0
        %2666 = vmatpush1.msra.mxu0 0.0
        %2667 = vmatprep.subr.mxu0 0.0
        %2668 = vmatpush1.msra.mxu0 0.0
        %2669 = vmatprep.subr.mxu0 0.0
        %2670 = vmatpush1.msra.mxu0 0.0
        %2671 = vmatprep.subr.mxu0 0.0
        %2672 = vmatpush1.msra.mxu0 0.0
        %2673 = vmatprep.subr.mxu0 0.0
        %2674 = vmatpush1.msra.mxu0 0.0
        %2675 = vmatprep.subr.mxu0 0.0
        %2676 = vmatpush1.msra.mxu0 0.0
        %2677 = vmatprep.subr.mxu0 0.0
        %2678 = vmatpush1.msra.mxu0 0.0
        %2679 = vmatprep.subr.mxu0 0.0
        %2680 = vmatpush1.msra.mxu0 0.0
        %2681 = vmatprep.subr.mxu0 0.0
        %2682 = vmatpush1.msra.mxu0 0.0
        %2683 = vmatprep.subr.mxu0 0.0
        %2684 = vmatpush1.msra.mxu0 0.0
        %2685 = vmatprep.subr.mxu0 0.0
        %2686 = vmatpush1.msra.mxu0 0.0
        %2687 = vmatprep.subr.mxu0 0.0
        %2688 = vmatpush1.msra.mxu0 0.0
        %2689 = vmatprep.subr.mxu0 0.0
        %2690 = vmatpush1.msra.mxu0 0.0
        %2691 = vmatprep.subr.mxu0 0.0
        %2692 = vmatpush1.msra.mxu0 0.0
        %2693 = vmatprep.subr.mxu0 0.0
        %2694 = vmatpush1.msra.mxu0 0.0
        %2695 = vmatprep.subr.mxu0 0.0
        %2696 = vmatpush1.msra.mxu0 0.0
        %2697 = vmatprep.subr.mxu0 0.0
        %2698 = vmatpush1.msra.mxu0 0.0
        %2699 = vmatprep.subr.mxu0 0.0
        %2700 = vmatpush1.msra.mxu0 0.0
        %2701 = vmatprep.subr.mxu0 0.0
        %2702 = vmatpush1.msra.mxu0 0.0
        %2703 = vmatprep.subr.mxu0 0.0
        %2704 = vmatpush1.msra.mxu0 0.0
        %2705 = vmatprep.subr.mxu0 0.0
        %2706 = vmatpush1.msra.mxu0 0.0
        %2707 = vmatprep.subr.mxu0 0.0
        %2708 = vmatpush1.msra.mxu0 0.0
        %2709 = vmatprep.subr.mxu0 0.0
        %2710 = vmatpush1.msra.mxu0 0.0
        %2711 = vmatprep.subr.mxu0 0.0
        %2712 = vmatpush1.msra.mxu0 0.0
        %2713 = vmatprep.subr.mxu0 0.0
        %2714 = vmatpush1.msra.mxu0 0.0
        %2715 = vmatprep.subr.mxu0 0.0
        %2716 = vmatpush1.msra.mxu0 0.0
        %2717 = vmatprep.subr.mxu0 0.0
        %2718 = vmatpush1.msra.mxu0 0.0
        %2719 = vmatprep.subr.mxu0 0.0
        %2720 = vmatpush1.msra.mxu0 0.0
        %2721 = vmatprep.subr.mxu0 0.0
        %2722 = vmatpush1.msra.mxu0 0.0
        %2723 = vmatprep.subr.mxu0 0.0
        %2724 = vmatpush1.msra.mxu0 0.0
        %2725 = vmatprep.subr.mxu0 0.0
        %2726 = vmatpush1.msra.mxu0 0.0
        %2727 = vmatprep.mubr.f32.mxu0 0.0
        %2728 = vmatmul.mubr.f32.gmra.mrb[0].mxu0 %v2661
        %v2729 = vpop.f32.mrb[0].mxu0
        %v2730 = vadd.f32 0.0, %v2729
        %v2731 = vpop.f32.mrb[0].mxu0
        %2732 = vdwg.mxu0
        %v2734 = vsel %vm644, %v2730, 0
        %2736 = vmatprep.subr.mxu0 0.0
        %2737 = vmatpush1.msra.mxu0 %v2090
        %2738 = vmatprep.subr.mxu0 0.0
        %2739 = vmatpush1.msra.mxu0 0.0
        %2740 = vmatprep.subr.mxu0 0.0
        %2741 = vmatpush1.msra.mxu0 0.0
        %2742 = vmatprep.subr.mxu0 0.0
        %2743 = vmatpush1.msra.mxu0 0.0
        %2744 = vmatprep.subr.mxu0 0.0
        %2745 = vmatpush1.msra.mxu0 0.0
        %2746 = vmatprep.subr.mxu0 0.0
        %2747 = vmatpush1.msra.mxu0 0.0
        %2748 = vmatprep.subr.mxu0 0.0
        %2749 = vmatpush1.msra.mxu0 0.0
        %2750 = vmatprep.subr.mxu0 0.0
        %2751 = vmatpush1.msra.mxu0 0.0
        %2752 = vmatprep.subr.mxu0 0.0
        %2753 = vmatpush1.msra.mxu0 0.0
        %2754 = vmatprep.subr.mxu0 0.0
        %2755 = vmatpush1.msra.mxu0 0.0
        %2756 = vmatprep.subr.mxu0 0.0
        %2757 = vmatpush1.msra.mxu0 0.0
        %2758 = vmatprep.subr.mxu0 0.0
        %2759 = vmatpush1.msra.mxu0 0.0
        %2760 = vmatprep.subr.mxu0 0.0
        %2761 = vmatpush1.msra.mxu0 0.0
        %2762 = vmatprep.subr.mxu0 0.0
        %2763 = vmatpush1.msra.mxu0 0.0
        %2764 = vmatprep.subr.mxu0 0.0
        %2765 = vmatpush1.msra.mxu0 0.0
        %2766 = vmatprep.subr.mxu0 0.0
        %2767 = vmatpush1.msra.mxu0 0.0
        %2768 = vmatprep.subr.mxu0 0.0
        %2769 = vmatpush1.msra.mxu0 0.0
        %2770 = vmatprep.subr.mxu0 0.0
        %2771 = vmatpush1.msra.mxu0 0.0
        %2772 = vmatprep.subr.mxu0 0.0
        %2773 = vmatpush1.msra.mxu0 0.0
        %2774 = vmatprep.subr.mxu0 0.0
        %2775 = vmatpush1.msra.mxu0 0.0
        %2776 = vmatprep.subr.mxu0 0.0
        %2777 = vmatpush1.msra.mxu0 0.0
        %2778 = vmatprep.subr.mxu0 0.0
        %2779 = vmatpush1.msra.mxu0 0.0
        %2780 = vmatprep.subr.mxu0 0.0
        %2781 = vmatpush1.msra.mxu0 0.0
        %2782 = vmatprep.subr.mxu0 0.0
        %2783 = vmatpush1.msra.mxu0 0.0
        %2784 = vmatprep.subr.mxu0 0.0
        %2785 = vmatpush1.msra.mxu0 0.0
        %2786 = vmatprep.subr.mxu0 0.0
        %2787 = vmatpush1.msra.mxu0 0.0
        %2788 = vmatprep.subr.mxu0 0.0
        %2789 = vmatpush1.msra.mxu0 0.0
        %2790 = vmatprep.subr.mxu0 0.0
        %2791 = vmatpush1.msra.mxu0 0.0
        %2792 = vmatprep.subr.mxu0 0.0
        %2793 = vmatpush1.msra.mxu0 0.0
        %2794 = vmatprep.subr.mxu0 0.0
        %2795 = vmatpush1.msra.mxu0 0.0
        %2796 = vmatprep.subr.mxu0 0.0
        %2797 = vmatpush1.msra.mxu0 0.0
        %2798 = vmatprep.subr.mxu0 0.0
        %2799 = vmatpush1.msra.mxu0 0.0
        %2800 = vmatprep.mubr.f32.mxu0 0.0
        %2801 = vmatmul.mubr.f32.gmra.mrb[0].mxu0 %v2734
        %v2802 = vpop.f32.mrb[0].mxu0
        %v2803 = vadd.f32 0.0, %v2802
        %v2804 = vpop.f32.mrb[0].mxu0
        %2805 = vdwg.mxu0
        %v2806 = vadd.f32 %v2565, %v2803
        %2807 = vrot.lane.b32.xlu0 %v2086, 104
        %v2808 = vpop.permute.xlu0 %2807
        %2809 = vrot.lane.b32.xlu0 %v2083, 72
        %v2810 = vpop.permute.xlu0 %2809
        %v2811 = vsel %vm644, %v2808, 0
        %v2813 = vsel %vm644, %v2810, 0
        %2815 = vmatprep.subr.mxu0 0.0
        %2816 = vmatpush1.xpose.msra.mxu0 %v2813
        %2817 = vmatprep.subr.mxu0 0.0
        %2818 = vmatpush1.xpose.msra.mxu0 0.0
        %2819 = vmatprep.subr.mxu0 0.0
        %2820 = vmatpush1.xpose.msra.mxu0 0.0
        %2821 = vmatprep.subr.mxu0 0.0
        %2822 = vmatpush1.xpose.msra.mxu0 0.0
        %2823 = vmatprep.subr.mxu0 0.0
        %2824 = vmatpush1.xpose.msra.mxu0 0.0
        %2825 = vmatprep.subr.mxu0 0.0
        %2826 = vmatpush1.xpose.msra.mxu0 0.0
        %2827 = vmatprep.subr.mxu0 0.0
        %2828 = vmatpush1.xpose.msra.mxu0 0.0
        %2829 = vmatprep.subr.mxu0 0.0
        %2830 = vmatpush1.xpose.msra.mxu0 0.0
        %2831 = vmatprep.subr.mxu0 0.0
        %2832 = vmatpush1.xpose.msra.mxu0 0.0
        %2833 = vmatprep.subr.mxu0 0.0
        %2834 = vmatpush1.xpose.msra.mxu0 0.0
        %2835 = vmatprep.subr.mxu0 0.0
        %2836 = vmatpush1.xpose.msra.mxu0 0.0
        %2837 = vmatprep.subr.mxu0 0.0
        %2838 = vmatpush1.xpose.msra.mxu0 0.0
        %2839 = vmatprep.subr.mxu0 0.0
        %2840 = vmatpush1.xpose.msra.mxu0 0.0
        %2841 = vmatprep.subr.mxu0 0.0
        %2842 = vmatpush1.xpose.msra.mxu0 0.0
        %2843 = vmatprep.subr.mxu0 0.0
        %2844 = vmatpush1.xpose.msra.mxu0 0.0
        %2845 = vmatprep.subr.mxu0 0.0
        %2846 = vmatpush1.xpose.msra.mxu0 0.0
        %2847 = vmatprep.subr.mxu0 0.0
        %2848 = vmatpush1.xpose.msra.mxu0 0.0
        %2849 = vmatprep.subr.mxu0 0.0
        %2850 = vmatpush1.xpose.msra.mxu0 0.0
        %2851 = vmatprep.subr.mxu0 0.0
        %2852 = vmatpush1.xpose.msra.mxu0 0.0
        %2853 = vmatprep.subr.mxu0 0.0
        %2854 = vmatpush1.xpose.msra.mxu0 0.0
        %2855 = vmatprep.subr.mxu0 0.0
        %2856 = vmatpush1.xpose.msra.mxu0 0.0
        %2857 = vmatprep.subr.mxu0 0.0
        %2858 = vmatpush1.xpose.msra.mxu0 0.0
        %2859 = vmatprep.subr.mxu0 0.0
        %2860 = vmatpush1.xpose.msra.mxu0 0.0
        %2861 = vmatprep.subr.mxu0 0.0
        %2862 = vmatpush1.xpose.msra.mxu0 0.0
        %2863 = vmatprep.subr.mxu0 0.0
        %2864 = vmatpush1.xpose.msra.mxu0 0.0
        %2865 = vmatprep.subr.mxu0 0.0
        %2866 = vmatpush1.xpose.msra.mxu0 0.0
        %2867 = vmatprep.subr.mxu0 0.0
        %2868 = vmatpush1.xpose.msra.mxu0 0.0
        %2869 = vmatprep.subr.mxu0 0.0
        %2870 = vmatpush1.xpose.msra.mxu0 0.0
        %2871 = vmatprep.subr.mxu0 0.0
        %2872 = vmatpush1.xpose.msra.mxu0 0.0
        %2873 = vmatprep.subr.mxu0 0.0
        %2874 = vmatpush1.xpose.msra.mxu0 0.0
        %2875 = vmatprep.subr.mxu0 0.0
        %2876 = vmatpush1.xpose.msra.mxu0 0.0
        %2877 = vmatprep.subr.mxu0 0.0
        %2878 = vmatpush1.xpose.msra.mxu0 0.0
        %2879 = vmatprep.mubr.f32.mxu0 0.0
        %2880 = vmatmul.mubr.f32.gmra.mrb[0].mxu0 %v2811
        %v2881 = vpop.f32.mrb[0].mxu0
        %v2882 = vadd.f32 0.0, %v2881
        %v2883 = vpop.f32.mrb[0].mxu0
        %2884 = vdwg.mxu0
        %v2885 = vsel %vm644, %v2882, -inf
        %2886 = vmax.xlane.f32.xlu0 %v2885
        %v2887 = vpop.xlane.xlu0 %2886
        %v2888 = vsub.f32 %v2882, %v2887
        %v2889 = vmul.f32 %v2888, 1.442695
        %v2890 = vpow.pop %v2889
        %v2891 = vsel %vm644, %v2890, 0.0
        %2892 = vadd.xlane.f32.xlu0 %v2891
        %v2893 = vpop.xlane.xlu0 %2892
        %v2894 = vrcp.pop %v2893
        %v2895 = vmul.f32 %v2890, %v2894
        %2896 = vrot.lane.b32.xlu0 %v2083, 40
        %v2897 = vpop.permute.xlu0 %2896
        %v2900 = vsel %vm644, %v2895, 0
        %2902 = vmatprep.subr.mxu0 0.0
        %2903 = vmatpush1.msra.mxu0 %v2897
        %2904 = vmatprep.subr.mxu0 0.0
        %2905 = vmatpush1.msra.mxu0 0.0
        %2906 = vmatprep.subr.mxu0 0.0
        %2907 = vmatpush1.msra.mxu0 0.0
        %2908 = vmatprep.subr.mxu0 0.0
        %2909 = vmatpush1.msra.mxu0 0.0
        %2910 = vmatprep.subr.mxu0 0.0
        %2911 = vmatpush1.msra.mxu0 0.0
        %2912 = vmatprep.subr.mxu0 0.0
        %2913 = vmatpush1.msra.mxu0 0.0
        %2914 = vmatprep.subr.mxu0 0.0
        %2915 = vmatpush1.msra.mxu0 0.0
        %2916 = vmatprep.subr.mxu0 0.0
        %2917 = vmatpush1.msra.mxu0 0.0
        %2918 = vmatprep.subr.mxu0 0.0
        %2919 = vmatpush1.msra.mxu0 0.0
        %2920 = vmatprep.subr.mxu0 0.0
        %2921 = vmatpush1.msra.mxu0 0.0
        %2922 = vmatprep.subr.mxu0 0.0
        %2923 = vmatpush1.msra.mxu0 0.0
        %2924 = vmatprep.subr.mxu0 0.0
        %2925 = vmatpush1.msra.mxu0 0.0
        %2926 = vmatprep.subr.mxu0 0.0
        %2927 = vmatpush1.msra.mxu0 0.0
        %2928 = vmatprep.subr.mxu0 0.0
        %2929 = vmatpush1.msra.mxu0 0.0
        %2930 = vmatprep.subr.mxu0 0.0
        %2931 = vmatpush1.msra.mxu0 0.0
        %2932 = vmatprep.subr.mxu0 0.0
        %2933 = vmatpush1.msra.mxu0 0.0
        %2934 = vmatprep.subr.mxu0 0.0
        %2935 = vmatpush1.msra.mxu0 0.0
        %2936 = vmatprep.subr.mxu0 0.0
        %2937 = vmatpush1.msra.mxu0 0.0
        %2938 = vmatprep.subr.mxu0 0.0
        %2939 = vmatpush1.msra.mxu0 0.0
        %2940 = vmatprep.subr.mxu0 0.0
        %2941 = vmatpush1.msra.mxu0 0.0
        %2942 = vmatprep.subr.mxu0 0.0
        %2943 = vmatpush1.msra.mxu0 0.0
        %2944 = vmatprep.subr.mxu0 0.0
        %2945 = vmatpush1.msra.mxu0 0.0
        %2946 = vmatprep.subr.mxu0 0.0
        %2947 = vmatpush1.msra.mxu0 0.0
        %2948 = vmatprep.subr.mxu0 0.0
        %2949 = vmatpush1.msra.mxu0 0.0
        %2950 = vmatprep.subr.mxu0 0.0
        %2951 = vmatpush1.msra.mxu0 0.0
        %2952 = vmatprep.subr.mxu0 0.0
        %2953 = vmatpush1.msra.mxu0 0.0
        %2954 = vmatprep.subr.mxu0 0.0
        %2955 = vmatpush1.msra.mxu0 0.0
        %2956 = vmatprep.subr.mxu0 0.0
        %2957 = vmatpush1.msra.mxu0 0.0
        %2958 = vmatprep.subr.mxu0 0.0
        %2959 = vmatpush1.msra.mxu0 0.0
        %2960 = vmatprep.subr.mxu0 0.0
        %2961 = vmatpush1.msra.mxu0 0.0
        %2962 = vmatprep.subr.mxu0 0.0
        %2963 = vmatpush1.msra.mxu0 0.0
        %2964 = vmatprep.subr.mxu0 0.0
        %2965 = vmatpush1.msra.mxu0 0.0
        %2966 = vmatprep.mubr.f32.mxu0 0.0
        %2967 = vmatmul.mubr.f32.gmra.mrb[0].mxu0 %v2900
        %v2968 = vpop.f32.mrb[0].mxu0
        %v2969 = vadd.f32 0.0, %v2968
        %v2970 = vpop.f32.mrb[0].mxu0
        %2971 = vdwg.mxu0
        %v2973 = vsel %vm644, %v2969, 0
        %2975 = vmatprep.subr.mxu0 0.0
        %2976 = vmatpush1.msra.mxu0 %v2091
        %2977 = vmatprep.subr.mxu0 0.0
        %2978 = vmatpush1.msra.mxu0 0.0
        %2979 = vmatprep.subr.mxu0 0.0
        %2980 = vmatpush1.msra.mxu0 0.0
        %2981 = vmatprep.subr.mxu0 0.0
        %2982 = vmatpush1.msra.mxu0 0.0
        %2983 = vmatprep.subr.mxu0 0.0
        %2984 = vmatpush1.msra.mxu0 0.0
        %2985 = vmatprep.subr.mxu0 0.0
        %2986 = vmatpush1.msra.mxu0 0.0
        %2987 = vmatprep.subr.mxu0 0.0
        %2988 = vmatpush1.msra.mxu0 0.0
        %2989 = vmatprep.subr.mxu0 0.0
        %2990 = vmatpush1.msra.mxu0 0.0
        %2991 = vmatprep.subr.mxu0 0.0
        %2992 = vmatpush1.msra.mxu0 0.0
        %2993 = vmatprep.subr.mxu0 0.0
        %2994 = vmatpush1.msra.mxu0 0.0
        %2995 = vmatprep.subr.mxu0 0.0
        %2996 = vmatpush1.msra.mxu0 0.0
        %2997 = vmatprep.subr.mxu0 0.0
        %2998 = vmatpush1.msra.mxu0 0.0
        %2999 = vmatprep.subr.mxu0 0.0
        %3000 = vmatpush1.msra.mxu0 0.0
        %3001 = vmatprep.subr.mxu0 0.0
        %3002 = vmatpush1.msra.mxu0 0.0
        %3003 = vmatprep.subr.mxu0 0.0
        %3004 = vmatpush1.msra.mxu0 0.0
        %3005 = vmatprep.subr.mxu0 0.0
        %3006 = vmatpush1.msra.mxu0 0.0
        %3007 = vmatprep.subr.mxu0 0.0
        %3008 = vmatpush1.msra.mxu0 0.0
        %3009 = vmatprep.subr.mxu0 0.0
        %3010 = vmatpush1.msra.mxu0 0.0
        %3011 = vmatprep.subr.mxu0 0.0
        %3012 = vmatpush1.msra.mxu0 0.0
        %3013 = vmatprep.subr.mxu0 0.0
        %3014 = vmatpush1.msra.mxu0 0.0
        %3015 = vmatprep.subr.mxu0 0.0
        %3016 = vmatpush1.msra.mxu0 0.0
        %3017 = vmatprep.subr.mxu0 0.0
        %3018 = vmatpush1.msra.mxu0 0.0
        %3019 = vmatprep.subr.mxu0 0.0
        %3020 = vmatpush1.msra.mxu0 0.0
        %3021 = vmatprep.subr.mxu0 0.0
        %3022 = vmatpush1.msra.mxu0 0.0
        %3023 = vmatprep.subr.mxu0 0.0
        %3024 = vmatpush1.msra.mxu0 0.0
        %3025 = vmatprep.subr.mxu0 0.0
        %3026 = vmatpush1.msra.mxu0 0.0
        %3027 = vmatprep.subr.mxu0 0.0
        %3028 = vmatpush1.msra.mxu0 0.0
        %3029 = vmatprep.subr.mxu0 0.0
        %3030 = vmatpush1.msra.mxu0 0.0
        %3031 = vmatprep.subr.mxu0 0.0
        %3032 = vmatpush1.msra.mxu0 0.0
        %3033 = vmatprep.subr.mxu0 0.0
        %3034 = vmatpush1.msra.mxu0 0.0
        %3035 = vmatprep.subr.mxu0 0.0
        %3036 = vmatpush1.msra.mxu0 0.0
        %3037 = vmatprep.subr.mxu0 0.0
        %3038 = vmatpush1.msra.mxu0 0.0
        %3039 = vmatprep.mubr.f32.mxu0 0.0
        %3040 = vmatmul.mubr.f32.gmra.mrb[0].mxu0 %v2973
        %v3041 = vpop.f32.mrb[0].mxu0
        %v3042 = vadd.f32 0.0, %v3041
        %v3043 = vpop.f32.mrb[0].mxu0
        %3044 = vdwg.mxu0
        %v3045 = vadd.f32 %v2806, %v3042
        %s3046 = scalar_lea.vmem %s6, 1
        %v3047 = vld [vmem:[%s3046] sm:$0x1]
        %v3049 = vlaneseq
        %v3050 = vshrl.u32 %v3049, 7
        %v3051 = vsub.s32 0, %v3050
        %v3052 = vrot.slane %v3047, %v3051
        %v3054 = vadd.f32 %v3045, %v3052
        %v3055 = vadd.f32 %v1999, %v3054
        %s3056 = scalar_lea.vmem %s7, 1
        %v3057 = vld [vmem:[%s3056] sm:$0x1]
        %s3058 = scalar_lea.vmem %s8, 1
        %v3059 = vld [vmem:[%s3058] sm:$0x1]
        %v3060 = vsel %vm729, %v3055, 0.0
        %3061 = vadd.xlane.f32.xlu0 %v3060
        %v3062 = vpop.xlane.xlu0 %3061
        %v3063 = vmul.f32 %v3062, %v1776
        %v3064 = vsub.f32 %v3055, %v3063
        %v3065 = vmul.f32 %v3064, %v3064
        %v3066 = vsel %vm729, %v3065, 0.0
        %3067 = vadd.xlane.f32.xlu0 %v3066
        %v3068 = vpop.xlane.xlu0 %3067
        %v3069 = vmul.f32 %v3068, %v1776
        %v3070 = vadd.f32 %v3069, 1e-05
        %v3071 = vrsqrt.pop %v3070
        %v3072 = vmul.f32 %v3064, %v3071
        %v3074 = vlaneseq
        %v3075 = vshrl.u32 %v3074, 7
        %v3076 = vsub.s32 0, %v3075
        %v3077 = vrot.slane %v3057, %v3076
        %v3079 = vmul.f32 %v3072, %v3077
        %v3081 = vlaneseq
        %v3082 = vshrl.u32 %v3081, 7
        %v3083 = vsub.s32 0, %v3082
        %v3084 = vrot.slane %v3059, %v3083
        %v3086 = vadd.f32 %v3079, %v3084
        %s3087 = scalar_lea.vmem [#allocation10], 32
        %v3088 = vld [vmem:[%s3087] sm:$0xff]
        %v3089 = vld [vmem:[%s3087 + $0x8] sm:$0xff]
        %v3090 = vld [vmem:[%s3087 + $0x10] sm:$0xff]
        %v3091 = vld [vmem:[%s3087 + $0x18] sm:$0xff]
        %s3092 = scalar_lea.vmem %s10, 1
        %v3093 = vld [vmem:[%s3092] sm:$0x1]
        %v3095 = vlaneseq
        %v3096 = vshrl.u32 %v3095, 7
        %v3097 = vsub.s32 0, %v3096
        %v3098 = vrot.slane %v3093, %v3097
        %v3101 = vsel %vm729, %v3086, 0
        %3103 = vmatprep.subr.mxu0 0.0
        %3104 = vmatpush1.msra.mxu0 %v3088
        %3105 = vmatprep.subr.mxu0 0.0
        %3106 = vmatpush1.msra.mxu0 %v3089
        %3107 = vmatprep.subr.mxu0 0.0
        %3108 = vmatpush1.msra.mxu0 %v3090
        %3109 = vmatprep.subr.mxu0 0.0
        %3110 = vmatpush1.msra.mxu0 %v3091
        %3111 = vmatprep.subr.mxu0 0.0
        %3112 = vmatpush1.msra.mxu0 0.0
        %3113 = vmatprep.subr.mxu0 0.0
        %3114 = vmatpush1.msra.mxu0 0.0
        %3115 = vmatprep.subr.mxu0 0.0
        %3116 = vmatpush1.msra.mxu0 0.0
        %3117 = vmatprep.subr.mxu0 0.0
        %3118 = vmatpush1.msra.mxu0 0.0
        %3119 = vmatprep.subr.mxu0 0.0
        %3120 = vmatpush1.msra.mxu0 0.0
        %3121 = vmatprep.subr.mxu0 0.0
        %3122 = vmatpush1.msra.mxu0 0.0
        %3123 = vmatprep.subr.mxu0 0.0
        %3124 = vmatpush1.msra.mxu0 0.0
        %3125 = vmatprep.subr.mxu0 0.0
        %3126 = vmatpush1.msra.mxu0 0.0
        %3127 = vmatprep.subr.mxu0 0.0
        %3128 = vmatpush1.msra.mxu0 0.0
        %3129 = vmatprep.subr.mxu0 0.0
        %3130 = vmatpush1.msra.mxu0 0.0
        %3131 = vmatprep.subr.mxu0 0.0
        %3132 = vmatpush1.msra.mxu0 0.0
        %3133 = vmatprep.subr.mxu0 0.0
        %3134 = vmatpush1.msra.mxu0 0.0
        %3135 = vmatprep.subr.mxu0 0.0
        %3136 = vmatpush1.msra.mxu0 0.0
        %3137 = vmatprep.subr.mxu0 0.0
        %3138 = vmatpush1.msra.mxu0 0.0
        %3139 = vmatprep.subr.mxu0 0.0
        %3140 = vmatpush1.msra.mxu0 0.0
        %3141 = vmatprep.subr.mxu0 0.0
        %3142 = vmatpush1.msra.mxu0 0.0
        %3143 = vmatprep.subr.mxu0 0.0
        %3144 = vmatpush1.msra.mxu0 0.0
        %3145 = vmatprep.subr.mxu0 0.0
        %3146 = vmatpush1.msra.mxu0 0.0
        %3147 = vmatprep.subr.mxu0 0.0
        %3148 = vmatpush1.msra.mxu0 0.0
        %3149 = vmatprep.subr.mxu0 0.0
        %3150 = vmatpush1.msra.mxu0 0.0
        %3151 = vmatprep.subr.mxu0 0.0
        %3152 = vmatpush1.msra.mxu0 0.0
        %3153 = vmatprep.subr.mxu0 0.0
        %3154 = vmatpush1.msra.mxu0 0.0
        %3155 = vmatprep.subr.mxu0 0.0
        %3156 = vmatpush1.msra.mxu0 0.0
        %3157 = vmatprep.subr.mxu0 0.0
        %3158 = vmatpush1.msra.mxu0 0.0
        %3159 = vmatprep.subr.mxu0 0.0
        %3160 = vmatpush1.msra.mxu0 0.0
        %3161 = vmatprep.subr.mxu0 0.0
        %3162 = vmatpush1.msra.mxu0 0.0
        %3163 = vmatprep.subr.mxu0 0.0
        %3164 = vmatpush1.msra.mxu0 0.0
        %3165 = vmatprep.subr.mxu0 0.0
        %3166 = vmatpush1.msra.mxu0 0.0
        %3167 = vmatprep.mubr.f32.mxu0 0.0
        %3168 = vmatmul.mubr.f32.gmra.mrb[0].mxu0 %v3101
        %v3169 = vpop.f32.mrb[0].mxu0
        %v3170 = vadd.f32 %v3098, %v3169
        %v3171 = vpop.f32.mrb[0].mxu0
        %3172 = vdwg.mxu0
        %v3173 = vmax.f32 %v3170, 0.0
        %s3174 = scalar_lea.vmem [#allocation11], 32
        %v3175 = vld [vmem:[%s3174] sm:$0xff]
        %v3176 = vld [vmem:[%s3174 + $0x8] sm:$0xff]
        %v3177 = vld [vmem:[%s3174 + $0x10] sm:$0xff]
        %v3178 = vld [vmem:[%s3174 + $0x18] sm:$0xff]
        %s3179 = scalar_lea.vmem %s12, 1
        %v3180 = vld [vmem:[%s3179] sm:$0x1]
        %v3182 = vlaneseq
        %v3183 = vshrl.u32 %v3182, 7
        %v3184 = vsub.s32 0, %v3183
        %v3185 = vrot.slane %v3180, %v3184
        %v3188 = vsel %vm729, %v3173, 0
        %3190 = vmatprep.subr.mxu0 0.0
        %3191 = vmatpush1.msra.mxu0 %v3175
        %3192 = vmatprep.subr.mxu0 0.0
        %3193 = vmatpush1.msra.mxu0 %v3176
        %3194 = vmatprep.subr.mxu0 0.0
        %3195 = vmatpush1.msra.mxu0 %v3177
        %3196 = vmatprep.subr.mxu0 0.0
        %3197 = vmatpush1.msra.mxu0 %v3178
        %3198 = vmatprep.subr.mxu0 0.0
        %3199 = vmatpush1.msra.mxu0 0.0
        %3200 = vmatprep.subr.mxu0 0.0
        %3201 = vmatpush1.msra.mxu0 0.0
        %3202 = vmatprep.subr.mxu0 0.0
        %3203 = vmatpush1.msra.mxu0 0.0
        %3204 = vmatprep.subr.mxu0 0.0
        %3205 = vmatpush1.msra.mxu0 0.0
        %3206 = vmatprep.subr.mxu0 0.0
        %3207 = vmatpush1.msra.mxu0 0.0
        %3208 = vmatprep.subr.mxu0 0.0
        %3209 = vmatpush1.msra.mxu0 0.0
        %3210 = vmatprep.subr.mxu0 0.0
        %3211 = vmatpush1.msra.mxu0 0.0
        %3212 = vmatprep.subr.mxu0 0.0
        %3213 = vmatpush1.msra.mxu0 0.0
        %3214 = vmatprep.subr.mxu0 0.0
        %3215 = vmatpush1.msra.mxu0 0.0
        %3216 = vmatprep.subr.mxu0 0.0
        %3217 = vmatpush1.msra.mxu0 0.0
        %3218 = vmatprep.subr.mxu0 0.0
        %3219 = vmatpush1.msra.mxu0 0.0
        %3220 = vmatprep.subr.mxu0 0.0
        %3221 = vmatpush1.msra.mxu0 0.0
        %3222 = vmatprep.subr.mxu0 0.0
        %3223 = vmatpush1.msra.mxu0 0.0
        %3224 = vmatprep.subr.mxu0 0.0
        %3225 = vmatpush1.msra.mxu0 0.0
        %3226 = vmatprep.subr.mxu0 0.0
        %3227 = vmatpush1.msra.mxu0 0.0
        %3228 = vmatprep.subr.mxu0 0.0
        %3229 = vmatpush1.msra.mxu0 0.0
        %3230 = vmatprep.subr.mxu0 0.0
        %3231 = vmatpush1.msra.mxu0 0.0
        %3232 = vmatprep.subr.mxu0 0.0
        %3233 = vmatpush1.msra.mxu0 0.0
        %3234 = vmatprep.subr.mxu0 0.0
        %3235 = vmatpush1.msra.mxu0 0.0
        %3236 = vmatprep.subr.mxu0 0.0
        %3237 = vmatpush1.msra.mxu0 0.0
        %3238 = vmatprep.subr.mxu0 0.0
        %3239 = vmatpush1.msra.mxu0 0.0
        %3240 = vmatprep.subr.mxu0 0.0
        %3241 = vmatpush1.msra.mxu0 0.0
        %3242 = vmatprep.subr.mxu0 0.0
        %3243 = vmatpush1.msra.mxu0 0.0
        %3244 = vmatprep.subr.mxu0 0.0
        %3245 = vmatpush1.msra.mxu0 0.0
        %3246 = vmatprep.subr.mxu0 0.0
        %3247 = vmatpush1.msra.mxu0 0.0
        %3248 = vmatprep.subr.mxu0 0.0
        %3249 = vmatpush1.msra.mxu0 0.0
        %3250 = vmatprep.subr.mxu0 0.0
        %3251 = vmatpush1.msra.mxu0 0.0
        %3252 = vmatprep.subr.mxu0 0.0
        %3253 = vmatpush1.msra.mxu0 0.0
        %3254 = vmatprep.mubr.f32.mxu0 0.0
        %3255 = vmatmul.mubr.f32.gmra.mrb[0].mxu0 %v3188
        %v3256 = vpop.f32.mrb[0].mxu0
        %v3257 = vadd.f32 %v3185, %v3256
        %v3258 = vpop.f32.mrb[0].mxu0
        %3259 = vdwg.mxu0
        %v3260 = vadd.f32 %v3086, %v3257
        %s3261 = scalar_lea.vmem %s13, 1
        %v3262 = vld [vmem:[%s3261] sm:$0x1]
        %s3263 = scalar_lea.vmem %s14, 1
        %v3264 = vld [vmem:[%s3263] sm:$0x1]
        %v3265 = vsel %vm729, %v3260, 0.0
        %3266 = vadd.xlane.f32.xlu0 %v3265
        %v3267 = vpop.xlane.xlu0 %3266
        %v3268 = vmul.f32 %v3267, %v1776
        %v3269 = vsub.f32 %v3260, %v3268
        %v3270 = vmul.f32 %v3269, %v3269
        %v3271 = vsel %vm729, %v3270, 0.0
        %3272 = vadd.xlane.f32.xlu0 %v3271
        %v3273 = vpop.xlane.xlu0 %3272
        %v3274 = vmul.f32 %v3273, %v1776
        %v3275 = vadd.f32 %v3274, 1e-05
        %v3276 = vrsqrt.pop %v3275
        %v3277 = vmul.f32 %v3269, %v3276
        %v3279 = vlaneseq
        %v3280 = vshrl.u32 %v3279, 7
        %v3281 = vsub.s32 0, %v3280
        %v3282 = vrot.slane %v3262, %v3281
        %v3284 = vmul.f32 %v3277, %v3282
        %v3286 = vlaneseq
        %v3287 = vshrl.u32 %v3286, 7
        %v3288 = vsub.s32 0, %v3287
        %v3289 = vrot.slane %v3264, %v3288
        %v3291 = vadd.f32 %v3284, %v3289
        %v3292 = vsel %vm729, %v3291, 0.0
        %v3293 = vrot.slane %v3292, 4
        %v3294 = vadd.f32 %v3292, %v3293
        %v3295 = vrot.slane %v3294, 2
        %v3296 = vadd.f32 %v3294, %v3295
        %v3297 = vrot.slane %v3296, 1
        %v3298 = vadd.f32 %v3296, %v3297
        %v3299 = vrcp.pop 8.0
        %v3300 = vmul.f32 %v3298, %v3299
        %v3301 = vld [vmem:[%s15] sm:$0x1]
        %v3302 = vmul.f32 %v3300, %v3301
        %vm3303 = vcmask 253952
        %v3304 = vsel %vm3303, %v3302, 0.0
        %3305 = vadd.xlane.f32.xlu0 %v3304
        %v3306 = vpop.xlane.xlu0 %3305
        %v3307 = vld [vmem:[#allocation2] sm:$0x1]
        %v3308 = vadd.f32 %v3306, %v3307
        %vm3309 = vcmask 0
        %3310 = vst.msk [vmem:[%s634] sm:$0x1] %vm3309, %v3308
        %p3311 = scmp.lt.s32.totalorder %s36, 1
        %s3312 = scalar_select %p3311, %s36, 1
        %s3313 = scalar_lea.vmem %s17, %s3312
        // Predicated region
        $region113: #{tpu_custom_call.1} parent=87 // pred_check
          %p3314 = pneg %p416
        $region114: #{tpu_custom_call.1} parent=87 // pred_check_branch
          %3316 = sbr.rel (%p3314) target = $region116
        $region115: #{tpu_custom_call.1} parent=87 // pred_region
          _
        $region116: #{tpu_custom_call.1} parent=87 // pred_fallthru
          _
      $region88: #{tpu_custom_call.1} parent=5 // pred_fallthru
        _
      %p3317 = scmp.le.s32.totalorder 2, %s31
      // Predicated region
      $region117: #{tpu_custom_call.1} parent=5 // pred_check
        %p3318 = pneg %p3317
      $region118: #{tpu_custom_call.1} parent=5 // pred_check_branch
        %3320 = sbr.rel (%p3318) target = $region120
      $region119: #{tpu_custom_call.1} parent=5 // pred_region
        %s3321 = ssub.s32 %s31, 2
        // Predicated region
        $region121: #{tpu_custom_call.1} parent=119 // pred_check
          %p3322 = pneg %p422
        $region122: #{tpu_custom_call.1} parent=119 // pred_check_branch
          %3324 = sbr.rel (%p3322) target = $region124
        $region123: #{tpu_custom_call.1} parent=119 // pred_region
          %p3325 = scmp.lt.s32.totalorder %s37, 1
          %s3326 = scalar_select %p3325, %s37, 1
          %s3327 = scalar_lea.vmem %s17, %s3326
        $region124: #{tpu_custom_call.1} parent=119 // pred_fallthru
          _
      $region120: #{tpu_custom_call.1} parent=5 // pred_fallthru
        _
    $region6: #{tpu_custom_call.1} parent=1 // loop_footer
      %s35 = sadd.s32 1, %s31
    $region7: #{tpu_custom_call.1} parent=1 // loop_footer_branch
      %30 = sbr.rel target = $region3
    $region8: #{tpu_custom_call.1} parent=1 // loop_exit
      _
    %3328 = vsyncpa [#allocation4], 1
    %s3329 = scalar_lea.sflag [#allocation4], 1
    %3330 = vsyncpa %s3329, 1
    %3331 = vsyncpa [#allocation6], 1
    %3332 = vsyncpa [#allocation9], 1
    %3333 = vsyncpa [#allocation12], 1

</llo_original>
